<compile_context>
chip_gen: v7x
topology: tpu7x:2x2x1
jax: 0.10.0
libtpu: 0.0.40
codegen_flags: <defaults>
</compile_context>

<pallas_src>
import functools
import math

import jax
import jax.numpy as jnp
from jax.experimental import pallas as pl
from jax.experimental.pallas import tpu as pltpu


NUM_HEADS = 4
BN_EPS = 1e-5


# ----------------------------------------------------------------------------
# Fused AttentionalPropagation Pallas kernel (one grid step per batch element)
# ----------------------------------------------------------------------------

def _prop_kernel(mvalid_ref,                       # scalar-prefetch (SMEM)
                 x_ref, src_ref,
                 wq_ref, wk_ref, wv_ref, wm_ref, w1x_ref, w1m_ref, w2_ref,
                 bq_ref, bk_ref, bv_ref, bm_ref, b1_ref, b2_ref,
                 o_ref, *, num_heads, head_dim, scale):
    f32 = jnp.float32
    bf16 = jnp.bfloat16

    x = x_ref[...]                                  # (Npad, D) f32
    src = src_ref[...]                              # (Mpad, D) f32
    xb = x.astype(bf16)
    sb = src.astype(bf16)

    n_pad, dmodel = x.shape
    m_pad = src.shape[0]
    m_valid = mvalid_ref[0]

    # Additive key-padding bias: computed once, reused by every head (no per-head
    # full-tile iota/compare/select).
    key_bias = jnp.where(
        jax.lax.broadcasted_iota(jnp.int32, (1, m_pad), 1) < m_valid,
        0.0, -1e30).astype(f32)                     # (1, Mpad)

    contract_last = (((1,), (1,)), ((), ()))        # A @ B^T: K never transposed

    def head_body(h, message):
        # Per-head q/k/v straight from (H, D, head_dim) weight slabs (ref[h] is a
        # cheap first-axis slice -> no lane extraction before the MXU).
        q = jnp.dot(xb, wq_ref[h], preferred_element_type=f32) + bq_ref[h]
        k = jnp.dot(sb, wk_ref[h], preferred_element_type=f32) + bk_ref[h]
        v = jnp.dot(sb, wv_ref[h], preferred_element_type=f32) + bv_ref[h]

        qs = (q * scale).astype(bf16)               # fold 1/sqrt(dim) into q
        kb = k.astype(bf16)
        vb = v.astype(bf16)

        scores = jax.lax.dot_general(qs, kb, contract_last,
                                     preferred_element_type=f32)  # (Npad, Mpad)
        scores = scores + key_bias
        smax = jnp.max(scores, axis=-1, keepdims=True)
        e = jnp.exp(scores - smax)                  # unnormalized probabilities
        denom = jnp.sum(e, axis=-1, keepdims=True)

        # Deferred normalization: scale the small (Npad, head_dim) PV result
        # instead of the (Npad, Mpad) probability tile.
        pv = jnp.dot(e.astype(bf16), vb, preferred_element_type=f32)
        pv = pv * pl.reciprocal(denom, approx=True)

        # Head-accumulated merge: no concat / lane-relayout of head tiles.
        return message + jnp.dot(pv.astype(bf16), wm_ref[h],
                                 preferred_element_type=f32)

    message = jax.lax.fori_loop(
        0, num_heads, head_body,
        jnp.zeros((n_pad, dmodel), f32), unroll=True)
    message = message + bm_ref[...]

    # MLP([2D, 2D, D]): concat([x, message]) and eval-mode BN folded into w1x/w1m/b1.
    h1 = jnp.dot(xb, w1x_ref[...], preferred_element_type=f32)
    h1 = h1 + jnp.dot(message.astype(bf16), w1m_ref[...], preferred_element_type=f32)
    h1 = jnp.maximum(h1 + b1_ref[...], 0.0)          # (Npad, 2D)

    delta = jnp.dot(h1.astype(bf16), w2_ref[...],
                    preferred_element_type=f32) + b2_ref[...]
    o_ref[...] = x + delta                           # fused residual update


def _vmem_limit_bytes():
    # v5e/v6e: 128 MiB physical VMEM -> raise the default 32 MiB scoped limit.
    # v7x: 64 MiB physical -> stay around ~48 MiB.
    try:
        cap = pltpu.get_tpu_info().vmem_capacity_bytes
        return int(min(96 * 1024 * 1024, (3 * cap) // 4))
    except Exception:
        return 48 * 1024 * 1024


def fused_propagation(x, source, p, m_valid, num_heads=NUM_HEADS):
    """x: (B, Npad, D), source: (B, Mpad, D), m_valid: int32[1] -> (B, Npad, D)."""
    B, n_pad, D = x.shape
    m_pad = source.shape[1]
    head_dim = D // num_heads
    D2 = 2 * D

    kernel = functools.partial(
        _prop_kernel, num_heads=num_heads, head_dim=head_dim,
        scale=1.0 / math.sqrt(head_dim))

    def full(shape):
        zeros = (0,) * len(shape)
        return pl.BlockSpec(shape, lambda b, m, _z=zeros: _z)

    grid_spec = pltpu.PrefetchScalarGridSpec(
        num_scalar_prefetch=1,               # m_valid lives in SMEM (no recompiles)
        grid=(B,),
        in_specs=[
            pl.BlockSpec((None, n_pad, D), lambda b, m: (b, 0, 0)),    # x
            pl.BlockSpec((None, m_pad, D), lambda b, m: (b, 0, 0)),    # source
            full((num_heads, D, head_dim)),                            # wq (per head)
            full((num_heads, D, head_dim)),                            # wk
            full((num_heads, D, head_dim)),                            # wv
            full((num_heads, head_dim, D)),                            # wm (per head)
            full((D, D2)), full((D, D2)),                              # w1x, w1m
            full((D2, D)),                                             # w2
            full((num_heads, 1, head_dim)),                            # bq
            full((num_heads, 1, head_dim)),                            # bk
            full((num_heads, 1, head_dim)),                            # bv
            full((1, D)), full((1, D2)), full((1, D)),                 # bm, b1, b2
        ],
        out_specs=pl.BlockSpec((None, n_pad, D), lambda b, m: (b, 0, 0)),
    )

    return pl.pallas_call(
        kernel,
        out_shape=jax.ShapeDtypeStruct((B, n_pad, D), jnp.float32),
        grid_spec=grid_spec,
        compiler_params=pltpu.CompilerParams(
            dimension_semantics=("parallel",),       # B axis -> both TensorCores
            vmem_limit_bytes=_vmem_limit_bytes()),
    )(m_valid, x, source,
      p["wq"], p["wk"], p["wv"], p["wm"], p["w1xT"], p["w1mT"], p["w2T"],
      p["bq"], p["bk"], p["bv"], p["bm"], p["b1"], p["b2"])


# ----------------------------------------------------------------------------
# Model glue: padded (B, N, D) layout kept throughout the GNN.
# ----------------------------------------------------------------------------

def _round_up_128(n):
    return max(128, ((n + 127) // 128) * 128)


def attentional_gnn(desc0, desc1, kernel_params, names, num_heads=NUM_HEADS):
    """desc0/desc1: (B, D, N) -> updated (B, D, N)."""
    B, D, n0 = desc0.shape
    n1 = desc1.shape[2]
    n0p, n1p = _round_up_128(n0), _round_up_128(n1)

    d0 = jnp.pad(jnp.transpose(desc0, (0, 2, 1)), ((0, 0), (0, n0p - n0), (0, 0)))
    d1 = jnp.pad(jnp.transpose(desc1, (0, 2, 1)), ((0, 0), (0, n1p - n1), (0, 0)))

    m0 = jnp.array([n0], jnp.int32)   # valid key counts (scalar-prefetch operands)
    m1 = jnp.array([n1], jnp.int32)

    for p, name in zip(kernel_params, names):
        if name == "cross":
            s0, s1, v0, v1 = d1, d0, m1, m0
        else:
            s0, s1, v0, v1 = d0, d1, m0, m1
        nd0 = fused_propagation(d0, s0, p, v0, num_heads)
        nd1 = fused_propagation(d1, s1, p, v1, num_heads)
        d0, d1 = nd0, nd1

    out0 = jnp.transpose(d0[:, :n0, :], (0, 2, 1))
    out1 = jnp.transpose(d1[:, :n1, :], (0, 2, 1))
    return out0, out1


# ----------------------------------------------------------------------------
# Parameter init (PyTorch Conv1d k=1 shapes) and host-side kernel prep.
# ----------------------------------------------------------------------------

def _uniform(key, shape, fan_in):
    bound = 1.0 / math.sqrt(fan_in)
    return jax.random.uniform(key, shape, jnp.float32, -bound, bound)


def init_layer_params(key, D):
    ks = jax.random.split(key, 12)
    D2 = 2 * D
    p = {
        "wq": _uniform(ks[0], (D, D), D), "bq": _uniform(ks[1], (D,), D),
        "wk": _uniform(ks[2], (D, D), D), "bk": _uniform(ks[3], (D,), D),
        "wv": _uniform(ks[4], (D, D), D), "bv": _uniform(ks[5], (D,), D),
        "wm": _uniform(ks[6], (D, D), D), "bm": _uniform(ks[7], (D,), D),
        "w1": _uniform(ks[8], (D2, D2), D2), "b1": _uniform(ks[9], (D2,), D2),
        "w2": _uniform(ks[10], (D, D2), D2),
        "b2": jnp.zeros((D,), jnp.float32),   # nn.init.constant_(mlp[-1].bias, 0.0)
    }
    # BatchNorm1d(2D), default init, eval mode -> per-channel scale/shift.
    gamma = jnp.ones((D2,), jnp.float32)
    beta = jnp.zeros((D2,), jnp.float32)
    mean = jnp.zeros((D2,), jnp.float32)
    var = jnp.ones((D2,), jnp.float32)
    s = gamma / jnp.sqrt(var + BN_EPS)
    p["bn_scale"] = s
    p["bn_shift"] = beta - mean * s
    return p


def prepare_layer_params(p, D, num_heads=NUM_HEADS):
    """Host-side weight prep: per-head weight slabs (the PyTorch .view(B,dim,H,N)
    channel order c = d*H + h is folded into the slicing), BN folding, MLP-concat
    split, bf16 cast for MXU operands."""
    head_dim = D // num_heads
    # perm[h*head_dim + d] = d*num_heads + h
    perm = jnp.arange(D).reshape(head_dim, num_heads).T.reshape(-1)
    bf16 = jnp.bfloat16
    f32 = jnp.float32

    def qkv_heads(w):   # (D_out, D_in) -> (H, D_in, head_dim)
        wt = w[perm, :].T                               # (D_in, D), head-grouped cols
        return wt.reshape(D, num_heads, head_dim).transpose(1, 0, 2).astype(bf16)

    def qkv_bias_heads(b):  # (D,) -> (H, 1, head_dim)
        return b[perm].reshape(num_heads, 1, head_dim).astype(f32)

    wm_heads = p["wm"][:, perm].T.reshape(num_heads, head_dim, D).astype(bf16)

    bn_s, bn_t = p["bn_scale"], p["bn_shift"]
    w1x = p["w1"][:, :D]      # acts on x
    w1m = p["w1"][:, D:]      # acts on message
    return {
        "wq": qkv_heads(p["wq"]),
        "wk": qkv_heads(p["wk"]),
        "wv": qkv_heads(p["wv"]),
        "wm": wm_heads,
        "w1xT": (w1x.T * bn_s[None, :]).astype(bf16),
        "w1mT": (w1m.T * bn_s[None, :]).astype(bf16),
        "w2T": p["w2"].T.astype(bf16),
        "bq": qkv_bias_heads(p["bq"]),
        "bk": qkv_bias_heads(p["bk"]),
        "bv": qkv_bias_heads(p["bv"]),
        "bm": p["bm"].reshape(1, D).astype(f32),
        "b1": (p["b1"] * bn_s + bn_t).reshape(1, 2 * D).astype(f32),
        "b2": p["b2"].reshape(1, D).astype(f32),
    }


# ----------------------------------------------------------------------------
# Pure-JAX f32 reference (unpermuted params) for numerical verification
# ----------------------------------------------------------------------------

def _ref_conv(x, w, b):
    return jnp.einsum("oi,bin->bon", w, x) + b[None, :, None]


def _ref_prop(x, source, p, D):
    B, _, N = x.shape
    H = NUM_HEADS
    dim = D // H
    q = _ref_conv(x, p["wq"], p["bq"]).reshape(B, dim, H, -1)
    k = _ref_conv(source, p["wk"], p["bk"]).reshape(B, dim, H, -1)
    v = _ref_conv(source, p["wv"], p["bv"]).reshape(B, dim, H, -1)
    scores = jnp.einsum("bdhn,bdhm->bhnm", q, k) / math.sqrt(dim)
    prob = jax.nn.softmax(scores, axis=-1)
    xo = jnp.einsum("bhnm,bdhm->bdhn", prob, v).reshape(B, D, N)
    msg = _ref_conv(xo, p["wm"], p["bm"])
    y = jnp.concatenate([x, msg], axis=1)
    h = _ref_conv(y, p["w1"], p["b1"])
    h = h * p["bn_scale"][None, :, None] + p["bn_shift"][None, :, None]
    h = jnp.maximum(h, 0.0)
    return _ref_conv(h, p["w2"], p["b2"])


def _ref_gnn(desc0, desc1, params, names, D):
    for p, name in zip(params, names):
        src0, src1 = (desc1, desc0) if name == "cross" else (desc0, desc1)
        d0 = _ref_prop(desc0, src0, p, D)
        d1 = _ref_prop(desc1, src1, p, D)
        desc0, desc1 = desc0 + d0, desc1 + d1
    return desc0, desc1


# ----------------------------------------------------------------------------

if __name__ == "__main__":
    B, D, N = 2, 32, 16          # batch, feature_dim (4 heads -> head_dim 8), keypoints
    layer_names = ["self", "cross"]

    key = jax.random.PRNGKey(0)
    k_in0, k_in1, k_p = jax.random.split(key, 3)
    desc0 = jax.random.normal(k_in0, (B, D, N), jnp.float32)
    desc1 = jax.random.normal(k_in1, (B, D, N), jnp.float32)

    layer_keys = jax.random.split(k_p, len(layer_names))
    raw_params = [init_layer_params(lk, D) for lk in layer_keys]
    kernel_params = [prepare_layer_params(p, D) for p in raw_params]

    out0, out1 = attentional_gnn(desc0, desc1, kernel_params, layer_names)
    out0 = jax.block_until_ready(out0)
    out1 = jax.block_until_ready(out1)

    ref0, ref1 = _ref_gnn(desc0, desc1, raw_params, layer_names, D)
    # bf16 matmul operands + folded BN + approx reciprocal -> looser tolerance than pure f32.
    assert jnp.allclose(out0, ref0, atol=5e-2, rtol=5e-2), "desc0 mismatch"
    assert jnp.allclose(out1, ref1, atol=5e-2, rtol=5e-2), "desc1 mismatch"

    print("KERNEL_OK")
</pallas_src>

<mosaic_0001>
module attributes {stable_mosaic.version = 11 : i64} {
  func.func @_prop_kernel(%arg0: i32, %arg1: memref<1xi32, #tpu.memory_space<smem>>, %arg2: memref<1x128x32xf32, #tpu.memory_space<vmem>>, %arg3: memref<1x128x32xf32, #tpu.memory_space<vmem>>, %arg4: memref<4x32x8xbf16, #tpu.memory_space<vmem>>, %arg5: memref<4x32x8xbf16, #tpu.memory_space<vmem>>, %arg6: memref<4x32x8xbf16, #tpu.memory_space<vmem>>, %arg7: memref<4x8x32xbf16, #tpu.memory_space<vmem>>, %arg8: memref<32x64xbf16, #tpu.memory_space<vmem>>, %arg9: memref<32x64xbf16, #tpu.memory_space<vmem>>, %arg10: memref<64x32xbf16, #tpu.memory_space<vmem>>, %arg11: memref<4x1x8xf32, #tpu.memory_space<vmem>>, %arg12: memref<4x1x8xf32, #tpu.memory_space<vmem>>, %arg13: memref<4x1x8xf32, #tpu.memory_space<vmem>>, %arg14: memref<1x32xf32, #tpu.memory_space<vmem>>, %arg15: memref<1x64xf32, #tpu.memory_space<vmem>>, %arg16: memref<1x32xf32, #tpu.memory_space<vmem>>, %arg17: memref<1x128x32xf32, #tpu.memory_space<vmem>>) attributes {dimension_semantics = [#tpu.dimension_semantics<parallel>], iteration_bounds = array<i64: 2>, scalar_prefetch = 1 : i64, scratch_operands = 0 : i64, tpu.core_type = #tpu.core_type<tc>, window_params = [{transform_indices = @transform_0, window_bounds = array<i64: 1, 128, 32>}, {transform_indices = @transform_1, window_bounds = array<i64: 1, 128, 32>}, {pipeline_mode = #tpu.pipeline_mode<synchronous>, transform_indices = @transform_2, window_bounds = array<i64: 4, 32, 8>}, {pipeline_mode = #tpu.pipeline_mode<synchronous>, transform_indices = @transform_3, window_bounds = array<i64: 4, 32, 8>}, {pipeline_mode = #tpu.pipeline_mode<synchronous>, transform_indices = @transform_4, window_bounds = array<i64: 4, 32, 8>}, {pipeline_mode = #tpu.pipeline_mode<synchronous>, transform_indices = @transform_5, window_bounds = array<i64: 4, 8, 32>}, {pipeline_mode = #tpu.pipeline_mode<synchronous>, transform_indices = @transform_6, window_bounds = array<i64: 32, 64>}, {pipeline_mode = #tpu.pipeline_mode<synchronous>, transform_indices = @transform_7, window_bounds = array<i64: 32, 64>}, {pipeline_mode = #tpu.pipeline_mode<synchronous>, transform_indices = @transform_8, window_bounds = array<i64: 64, 32>}, {pipeline_mode = #tpu.pipeline_mode<synchronous>, transform_indices = @transform_9, window_bounds = array<i64: 4, 1, 8>}, {pipeline_mode = #tpu.pipeline_mode<synchronous>, transform_indices = @transform_10, window_bounds = array<i64: 4, 1, 8>}, {pipeline_mode = #tpu.pipeline_mode<synchronous>, transform_indices = @transform_11, window_bounds = array<i64: 4, 1, 8>}, {pipeline_mode = #tpu.pipeline_mode<synchronous>, transform_indices = @transform_12, window_bounds = array<i64: 1, 32>}, {pipeline_mode = #tpu.pipeline_mode<synchronous>, transform_indices = @transform_13, window_bounds = array<i64: 1, 64>}, {pipeline_mode = #tpu.pipeline_mode<synchronous>, transform_indices = @transform_14, window_bounds = array<i64: 1, 32>}, {transform_indices = @transform_15, window_bounds = array<i64: 1, 128, 32>}]} {
    %c0 = arith.constant 0 : index
    %c0_0 = arith.constant 0 : index
    %c0_1 = arith.constant 0 : index
    %0 = vector.load %arg2[%c0, %c0_0, %c0_1] : memref<1x128x32xf32, #tpu.memory_space<vmem>>, vector<1x128x32xf32>
    %1 = vector.shape_cast %0 : vector<1x128x32xf32> to vector<128x32xf32>
    %c0_2 = arith.constant 0 : index
    %c0_3 = arith.constant 0 : index
    %c0_4 = arith.constant 0 : index
    %2 = vector.load %arg3[%c0_2, %c0_3, %c0_4] : memref<1x128x32xf32, #tpu.memory_space<vmem>>, vector<1x128x32xf32>
    %3 = vector.shape_cast %2 : vector<1x128x32xf32> to vector<128x32xf32>
    %4 = arith.truncf %1 : vector<128x32xf32> to vector<128x32xbf16>
    %5 = arith.truncf %3 : vector<128x32xf32> to vector<128x32xbf16>
    %c0_5 = arith.constant 0 : index
    %6 = memref.load %arg1[%c0_5] : memref<1xi32, #tpu.memory_space<smem>>
    %7 = tpu.iota {dimensions = array<i32: 1>} : vector<1x128xi32>
    %8 = vector.broadcast %6 : i32 to vector<1x128xi32>
    %9 = arith.cmpi slt, %7, %8 : vector<1x128xi32>
    %cst = arith.constant 0.000000e+00 : f32
    %cst_6 = arith.constant -1.000000e+30 : f32
    %10 = vector.broadcast %cst : f32 to vector<1x128xf32>
    %11 = vector.broadcast %cst_6 : f32 to vector<1x128xf32>
    %12 = arith.select %9, %10, %11 : vector<1x128xi1>, vector<1x128xf32>
    %cst_7 = arith.constant 0.000000e+00 : f32
    %13 = vector.broadcast %cst_7 : f32 to vector<128x32xf32>
    %c0_i32 = arith.constant 0 : i32
    %14 = arith.index_cast %c0_i32 : i32 to index
    %c0_8 = arith.constant 0 : index
    %c0_9 = arith.constant 0 : index
    %15 = vector.load %arg4[%14, %c0_8, %c0_9] : memref<4x32x8xbf16, #tpu.memory_space<vmem>>, vector<1x32x8xbf16>
    %16 = vector.shape_cast %15 : vector<1x32x8xbf16> to vector<32x8xbf16>
    %cst_10 = arith.constant dense<0.000000e+00> : vector<128x8xf32>
    %17 = tpu.matmul %4, %16, %cst_10 {dimension_numbers = #tpu.dot_dimension_numbers<[1], [0], [0], [1], [0, 0, 1, 1], [], []>} : vector<128x32xbf16>, vector<32x8xbf16>, vector<128x8xf32> -> vector<128x8xf32>
    %18 = arith.index_cast %c0_i32 : i32 to index
    %c0_11 = arith.constant 0 : index
    %c0_12 = arith.constant 0 : index
    %19 = vector.load %arg11[%18, %c0_11, %c0_12] : memref<4x1x8xf32, #tpu.memory_space<vmem>>, vector<1x1x8xf32>
    %20 = vector.shape_cast %19 : vector<1x1x8xf32> to vector<1x8xf32>
    %21 = vector.broadcast %20 : vector<1x8xf32> to vector<128x8xf32>
    %22 = arith.addf %17, %21 : vector<128x8xf32>
    %23 = arith.index_cast %c0_i32 : i32 to index
    %c0_13 = arith.constant 0 : index
    %c0_14 = arith.constant 0 : index
    %24 = vector.load %arg5[%23, %c0_13, %c0_14] : memref<4x32x8xbf16, #tpu.memory_space<vmem>>, vector<1x32x8xbf16>
    %25 = vector.shape_cast %24 : vector<1x32x8xbf16> to vector<32x8xbf16>
    %cst_15 = arith.constant dense<0.000000e+00> : vector<128x8xf32>
    %26 = tpu.matmul %5, %25, %cst_15 {dimension_numbers = #tpu.dot_dimension_numbers<[1], [0], [0], [1], [0, 0, 1, 1], [], []>} : vector<128x32xbf16>, vector<32x8xbf16>, vector<128x8xf32> -> vector<128x8xf32>
    %27 = arith.index_cast %c0_i32 : i32 to index
    %c0_16 = arith.constant 0 : index
    %c0_17 = arith.constant 0 : index
    %28 = vector.load %arg12[%27, %c0_16, %c0_17] : memref<4x1x8xf32, #tpu.memory_space<vmem>>, vector<1x1x8xf32>
    %29 = vector.shape_cast %28 : vector<1x1x8xf32> to vector<1x8xf32>
    %30 = vector.broadcast %29 : vector<1x8xf32> to vector<128x8xf32>
    %31 = arith.addf %26, %30 : vector<128x8xf32>
    %32 = arith.index_cast %c0_i32 : i32 to index
    %c0_18 = arith.constant 0 : index
    %c0_19 = arith.constant 0 : index
    %33 = vector.load %arg6[%32, %c0_18, %c0_19] : memref<4x32x8xbf16, #tpu.memory_space<vmem>>, vector<1x32x8xbf16>
    %34 = vector.shape_cast %33 : vector<1x32x8xbf16> to vector<32x8xbf16>
    %cst_20 = arith.constant dense<0.000000e+00> : vector<128x8xf32>
    %35 = tpu.matmul %5, %34, %cst_20 {dimension_numbers = #tpu.dot_dimension_numbers<[1], [0], [0], [1], [0, 0, 1, 1], [], []>} : vector<128x32xbf16>, vector<32x8xbf16>, vector<128x8xf32> -> vector<128x8xf32>
    %36 = arith.index_cast %c0_i32 : i32 to index
    %c0_21 = arith.constant 0 : index
    %c0_22 = arith.constant 0 : index
    %37 = vector.load %arg13[%36, %c0_21, %c0_22] : memref<4x1x8xf32, #tpu.memory_space<vmem>>, vector<1x1x8xf32>
    %38 = vector.shape_cast %37 : vector<1x1x8xf32> to vector<1x8xf32>
    %39 = vector.broadcast %38 : vector<1x8xf32> to vector<128x8xf32>
    %40 = arith.addf %35, %39 : vector<128x8xf32>
    %cst_23 = arith.constant 0.353553385 : f32
    %41 = vector.broadcast %cst_23 : f32 to vector<128x8xf32>
    %42 = arith.mulf %22, %41 : vector<128x8xf32>
    %43 = arith.truncf %42 : vector<128x8xf32> to vector<128x8xbf16>
    %44 = arith.truncf %31 : vector<128x8xf32> to vector<128x8xbf16>
    %45 = arith.truncf %40 : vector<128x8xf32> to vector<128x8xbf16>
    %cst_24 = arith.constant dense<0.000000e+00> : vector<128x128xf32>
    %46 = tpu.matmul %43, %44, %cst_24 {dimension_numbers = #tpu.dot_dimension_numbers<[1], [1], [0], [0], [0, 0, 1, 0], [], []>} : vector<128x8xbf16>, vector<128x8xbf16>, vector<128x128xf32> -> vector<128x128xf32>
    %47 = vector.broadcast %12 : vector<1x128xf32> to vector<128x128xf32>
    %48 = arith.addf %46, %47 : vector<128x128xf32>
    %cst_25 = arith.constant dense<0xFF800000> : vector<128xf32>
    %49 = vector.multi_reduction <maximumf>, %48, %cst_25 [1] : vector<128x128xf32> to vector<128xf32>
    %50 = vector.shape_cast %49 : vector<128xf32> to vector<128x1xf32>
    %51 = vector.broadcast %50 : vector<128x1xf32> to vector<128x128xf32>
    %52 = arith.subf %48, %51 : vector<128x128xf32>
    %53 = math.exp %52 : vector<128x128xf32>
    %cst_26 = arith.constant dense<0.000000e+00> : vector<128xf32>
    %54 = vector.multi_reduction <add>, %53, %cst_26 [1] : vector<128x128xf32> to vector<128xf32>
    %55 = vector.shape_cast %54 : vector<128xf32> to vector<128x1xf32>
    %56 = arith.truncf %53 : vector<128x128xf32> to vector<128x128xbf16>
    %cst_27 = arith.constant dense<0.000000e+00> : vector<128x8xf32>
    %57 = tpu.matmul %56, %45, %cst_27 {dimension_numbers = #tpu.dot_dimension_numbers<[1], [0], [0], [1], [0, 0, 1, 1], [], []>} : vector<128x128xbf16>, vector<128x8xbf16>, vector<128x8xf32> -> vector<128x8xf32>
    %58 = tpu.reciprocal %55 {approx = true} : vector<128x1xf32> -> vector<128x1xf32>
    %59 = vector.broadcast %58 : vector<128x1xf32> to vector<128x8xf32>
    %60 = arith.mulf %57, %59 : vector<128x8xf32>
    %61 = arith.truncf %60 : vector<128x8xf32> to vector<128x8xbf16>
    %62 = arith.index_cast %c0_i32 : i32 to index
    %c0_28 = arith.constant 0 : index
    %c0_29 = arith.constant 0 : index
    %63 = vector.load %arg7[%62, %c0_28, %c0_29] : memref<4x8x32xbf16, #tpu.memory_space<vmem>>, vector<1x8x32xbf16>
    %64 = vector.shape_cast %63 : vector<1x8x32xbf16> to vector<8x32xbf16>
    %cst_30 = arith.constant dense<0.000000e+00> : vector<128x32xf32>
    %65 = tpu.matmul %61, %64, %cst_30 {dimension_numbers = #tpu.dot_dimension_numbers<[1], [0], [0], [1], [0, 0, 1, 1], [], []>} : vector<128x8xbf16>, vector<8x32xbf16>, vector<128x32xf32> -> vector<128x32xf32>
    %66 = arith.addf %13, %65 : vector<128x32xf32>
    %c1_i32 = arith.constant 1 : i32
    %67 = arith.index_cast %c1_i32 : i32 to index
    %c0_31 = arith.constant 0 : index
    %c0_32 = arith.constant 0 : index
    %68 = vector.load %arg4[%67, %c0_31, %c0_32] : memref<4x32x8xbf16, #tpu.memory_space<vmem>>, vector<1x32x8xbf16>
    %69 = vector.shape_cast %68 : vector<1x32x8xbf16> to vector<32x8xbf16>
    %cst_33 = arith.constant dense<0.000000e+00> : vector<128x8xf32>
    %70 = tpu.matmul %4, %69, %cst_33 {dimension_numbers = #tpu.dot_dimension_numbers<[1], [0], [0], [1], [0, 0, 1, 1], [], []>} : vector<128x32xbf16>, vector<32x8xbf16>, vector<128x8xf32> -> vector<128x8xf32>
    %71 = arith.index_cast %c1_i32 : i32 to index
    %c0_34 = arith.constant 0 : index
    %c0_35 = arith.constant 0 : index
    %72 = vector.load %arg11[%71, %c0_34, %c0_35] : memref<4x1x8xf32, #tpu.memory_space<vmem>>, vector<1x1x8xf32>
    %73 = vector.shape_cast %72 : vector<1x1x8xf32> to vector<1x8xf32>
    %74 = vector.broadcast %73 : vector<1x8xf32> to vector<128x8xf32>
    %75 = arith.addf %70, %74 : vector<128x8xf32>
    %76 = arith.index_cast %c1_i32 : i32 to index
    %c0_36 = arith.constant 0 : index
    %c0_37 = arith.constant 0 : index
    %77 = vector.load %arg5[%76, %c0_36, %c0_37] : memref<4x32x8xbf16, #tpu.memory_space<vmem>>, vector<1x32x8xbf16>
    %78 = vector.shape_cast %77 : vector<1x32x8xbf16> to vector<32x8xbf16>
    %cst_38 = arith.constant dense<0.000000e+00> : vector<128x8xf32>
    %79 = tpu.matmul %5, %78, %cst_38 {dimension_numbers = #tpu.dot_dimension_numbers<[1], [0], [0], [1], [0, 0, 1, 1], [], []>} : vector<128x32xbf16>, vector<32x8xbf16>, vector<128x8xf32> -> vector<128x8xf32>
    %80 = arith.index_cast %c1_i32 : i32 to index
    %c0_39 = arith.constant 0 : index
    %c0_40 = arith.constant 0 : index
    %81 = vector.load %arg12[%80, %c0_39, %c0_40] : memref<4x1x8xf32, #tpu.memory_space<vmem>>, vector<1x1x8xf32>
    %82 = vector.shape_cast %81 : vector<1x1x8xf32> to vector<1x8xf32>
    %83 = vector.broadcast %82 : vector<1x8xf32> to vector<128x8xf32>
    %84 = arith.addf %79, %83 : vector<128x8xf32>
    %85 = arith.index_cast %c1_i32 : i32 to index
    %c0_41 = arith.constant 0 : index
    %c0_42 = arith.constant 0 : index
    %86 = vector.load %arg6[%85, %c0_41, %c0_42] : memref<4x32x8xbf16, #tpu.memory_space<vmem>>, vector<1x32x8xbf16>
    %87 = vector.shape_cast %86 : vector<1x32x8xbf16> to vector<32x8xbf16>
    %cst_43 = arith.constant dense<0.000000e+00> : vector<128x8xf32>
    %88 = tpu.matmul %5, %87, %cst_43 {dimension_numbers = #tpu.dot_dimension_numbers<[1], [0], [0], [1], [0, 0, 1, 1], [], []>} : vector<128x32xbf16>, vector<32x8xbf16>, vector<128x8xf32> -> vector<128x8xf32>
    %89 = arith.index_cast %c1_i32 : i32 to index
    %c0_44 = arith.constant 0 : index
    %c0_45 = arith.constant 0 : index
    %90 = vector.load %arg13[%89, %c0_44, %c0_45] : memref<4x1x8xf32, #tpu.memory_space<vmem>>, vector<1x1x8xf32>
    %91 = vector.shape_cast %90 : vector<1x1x8xf32> to vector<1x8xf32>
    %92 = vector.broadcast %91 : vector<1x8xf32> to vector<128x8xf32>
    %93 = arith.addf %88, %92 : vector<128x8xf32>
    %cst_46 = arith.constant 0.353553385 : f32
    %94 = vector.broadcast %cst_46 : f32 to vector<128x8xf32>
    %95 = arith.mulf %75, %94 : vector<128x8xf32>
    %96 = arith.truncf %95 : vector<128x8xf32> to vector<128x8xbf16>
    %97 = arith.truncf %84 : vector<128x8xf32> to vector<128x8xbf16>
    %98 = arith.truncf %93 : vector<128x8xf32> to vector<128x8xbf16>
    %cst_47 = arith.constant dense<0.000000e+00> : vector<128x128xf32>
    %99 = tpu.matmul %96, %97, %cst_47 {dimension_numbers = #tpu.dot_dimension_numbers<[1], [1], [0], [0], [0, 0, 1, 0], [], []>} : vector<128x8xbf16>, vector<128x8xbf16>, vector<128x128xf32> -> vector<128x128xf32>
    %100 = vector.broadcast %12 : vector<1x128xf32> to vector<128x128xf32>
    %101 = arith.addf %99, %100 : vector<128x128xf32>
    %cst_48 = arith.constant dense<0xFF800000> : vector<128xf32>
    %102 = vector.multi_reduction <maximumf>, %101, %cst_48 [1] : vector<128x128xf32> to vector<128xf32>
    %103 = vector.shape_cast %102 : vector<128xf32> to vector<128x1xf32>
    %104 = vector.broadcast %103 : vector<128x1xf32> to vector<128x128xf32>
    %105 = arith.subf %101, %104 : vector<128x128xf32>
    %106 = math.exp %105 : vector<128x128xf32>
    %cst_49 = arith.constant dense<0.000000e+00> : vector<128xf32>
    %107 = vector.multi_reduction <add>, %106, %cst_49 [1] : vector<128x128xf32> to vector<128xf32>
    %108 = vector.shape_cast %107 : vector<128xf32> to vector<128x1xf32>
    %109 = arith.truncf %106 : vector<128x128xf32> to vector<128x128xbf16>
    %cst_50 = arith.constant dense<0.000000e+00> : vector<128x8xf32>
    %110 = tpu.matmul %109, %98, %cst_50 {dimension_numbers = #tpu.dot_dimension_numbers<[1], [0], [0], [1], [0, 0, 1, 1], [], []>} : vector<128x128xbf16>, vector<128x8xbf16>, vector<128x8xf32> -> vector<128x8xf32>
    %111 = tpu.reciprocal %108 {approx = true} : vector<128x1xf32> -> vector<128x1xf32>
    %112 = vector.broadcast %111 : vector<128x1xf32> to vector<128x8xf32>
    %113 = arith.mulf %110, %112 : vector<128x8xf32>
    %114 = arith.truncf %113 : vector<128x8xf32> to vector<128x8xbf16>
    %115 = arith.index_cast %c1_i32 : i32 to index
    %c0_51 = arith.constant 0 : index
    %c0_52 = arith.constant 0 : index
    %116 = vector.load %arg7[%115, %c0_51, %c0_52] : memref<4x8x32xbf16, #tpu.memory_space<vmem>>, vector<1x8x32xbf16>
    %117 = vector.shape_cast %116 : vector<1x8x32xbf16> to vector<8x32xbf16>
    %cst_53 = arith.constant dense<0.000000e+00> : vector<128x32xf32>
    %118 = tpu.matmul %114, %117, %cst_53 {dimension_numbers = #tpu.dot_dimension_numbers<[1], [0], [0], [1], [0, 0, 1, 1], [], []>} : vector<128x8xbf16>, vector<8x32xbf16>, vector<128x32xf32> -> vector<128x32xf32>
    %119 = arith.addf %66, %118 : vector<128x32xf32>
    %c2_i32 = arith.constant 2 : i32
    %120 = arith.index_cast %c2_i32 : i32 to index
    %c0_54 = arith.constant 0 : index
    %c0_55 = arith.constant 0 : index
    %121 = vector.load %arg4[%120, %c0_54, %c0_55] : memref<4x32x8xbf16, #tpu.memory_space<vmem>>, vector<1x32x8xbf16>
    %122 = vector.shape_cast %121 : vector<1x32x8xbf16> to vector<32x8xbf16>
    %cst_56 = arith.constant dense<0.000000e+00> : vector<128x8xf32>
    %123 = tpu.matmul %4, %122, %cst_56 {dimension_numbers = #tpu.dot_dimension_numbers<[1], [0], [0], [1], [0, 0, 1, 1], [], []>} : vector<128x32xbf16>, vector<32x8xbf16>, vector<128x8xf32> -> vector<128x8xf32>
    %124 = arith.index_cast %c2_i32 : i32 to index
    %c0_57 = arith.constant 0 : index
    %c0_58 = arith.constant 0 : index
    %125 = vector.load %arg11[%124, %c0_57, %c0_58] : memref<4x1x8xf32, #tpu.memory_space<vmem>>, vector<1x1x8xf32>
    %126 = vector.shape_cast %125 : vector<1x1x8xf32> to vector<1x8xf32>
    %127 = vector.broadcast %126 : vector<1x8xf32> to vector<128x8xf32>
    %128 = arith.addf %123, %127 : vector<128x8xf32>
    %129 = arith.index_cast %c2_i32 : i32 to index
    %c0_59 = arith.constant 0 : index
    %c0_60 = arith.constant 0 : index
    %130 = vector.load %arg5[%129, %c0_59, %c0_60] : memref<4x32x8xbf16, #tpu.memory_space<vmem>>, vector<1x32x8xbf16>
    %131 = vector.shape_cast %130 : vector<1x32x8xbf16> to vector<32x8xbf16>
    %cst_61 = arith.constant dense<0.000000e+00> : vector<128x8xf32>
    %132 = tpu.matmul %5, %131, %cst_61 {dimension_numbers = #tpu.dot_dimension_numbers<[1], [0], [0], [1], [0, 0, 1, 1], [], []>} : vector<128x32xbf16>, vector<32x8xbf16>, vector<128x8xf32> -> vector<128x8xf32>
    %133 = arith.index_cast %c2_i32 : i32 to index
    %c0_62 = arith.constant 0 : index
    %c0_63 = arith.constant 0 : index
    %134 = vector.load %arg12[%133, %c0_62, %c0_63] : memref<4x1x8xf32, #tpu.memory_space<vmem>>, vector<1x1x8xf32>
    %135 = vector.shape_cast %134 : vector<1x1x8xf32> to vector<1x8xf32>
    %136 = vector.broadcast %135 : vector<1x8xf32> to vector<128x8xf32>
    %137 = arith.addf %132, %136 : vector<128x8xf32>
    %138 = arith.index_cast %c2_i32 : i32 to index
    %c0_64 = arith.constant 0 : index
    %c0_65 = arith.constant 0 : index
    %139 = vector.load %arg6[%138, %c0_64, %c0_65] : memref<4x32x8xbf16, #tpu.memory_space<vmem>>, vector<1x32x8xbf16>
    %140 = vector.shape_cast %139 : vector<1x32x8xbf16> to vector<32x8xbf16>
    %cst_66 = arith.constant dense<0.000000e+00> : vector<128x8xf32>
    %141 = tpu.matmul %5, %140, %cst_66 {dimension_numbers = #tpu.dot_dimension_numbers<[1], [0], [0], [1], [0, 0, 1, 1], [], []>} : vector<128x32xbf16>, vector<32x8xbf16>, vector<128x8xf32> -> vector<128x8xf32>
    %142 = arith.index_cast %c2_i32 : i32 to index
    %c0_67 = arith.constant 0 : index
    %c0_68 = arith.constant 0 : index
    %143 = vector.load %arg13[%142, %c0_67, %c0_68] : memref<4x1x8xf32, #tpu.memory_space<vmem>>, vector<1x1x8xf32>
    %144 = vector.shape_cast %143 : vector<1x1x8xf32> to vector<1x8xf32>
    %145 = vector.broadcast %144 : vector<1x8xf32> to vector<128x8xf32>
    %146 = arith.addf %141, %145 : vector<128x8xf32>
    %cst_69 = arith.constant 0.353553385 : f32
    %147 = vector.broadcast %cst_69 : f32 to vector<128x8xf32>
    %148 = arith.mulf %128, %147 : vector<128x8xf32>
    %149 = arith.truncf %148 : vector<128x8xf32> to vector<128x8xbf16>
    %150 = arith.truncf %137 : vector<128x8xf32> to vector<128x8xbf16>
    %151 = arith.truncf %146 : vector<128x8xf32> to vector<128x8xbf16>
    %cst_70 = arith.constant dense<0.000000e+00> : vector<128x128xf32>
    %152 = tpu.matmul %149, %150, %cst_70 {dimension_numbers = #tpu.dot_dimension_numbers<[1], [1], [0], [0], [0, 0, 1, 0], [], []>} : vector<128x8xbf16>, vector<128x8xbf16>, vector<128x128xf32> -> vector<128x128xf32>
    %153 = vector.broadcast %12 : vector<1x128xf32> to vector<128x128xf32>
    %154 = arith.addf %152, %153 : vector<128x128xf32>
    %cst_71 = arith.constant dense<0xFF800000> : vector<128xf32>
    %155 = vector.multi_reduction <maximumf>, %154, %cst_71 [1] : vector<128x128xf32> to vector<128xf32>
    %156 = vector.shape_cast %155 : vector<128xf32> to vector<128x1xf32>
    %157 = vector.broadcast %156 : vector<128x1xf32> to vector<128x128xf32>
    %158 = arith.subf %154, %157 : vector<128x128xf32>
    %159 = math.exp %158 : vector<128x128xf32>
    %cst_72 = arith.constant dense<0.000000e+00> : vector<128xf32>
    %160 = vector.multi_reduction <add>, %159, %cst_72 [1] : vector<128x128xf32> to vector<128xf32>
    %161 = vector.shape_cast %160 : vector<128xf32> to vector<128x1xf32>
    %162 = arith.truncf %159 : vector<128x128xf32> to vector<128x128xbf16>
    %cst_73 = arith.constant dense<0.000000e+00> : vector<128x8xf32>
    %163 = tpu.matmul %162, %151, %cst_73 {dimension_numbers = #tpu.dot_dimension_numbers<[1], [0], [0], [1], [0, 0, 1, 1], [], []>} : vector<128x128xbf16>, vector<128x8xbf16>, vector<128x8xf32> -> vector<128x8xf32>
    %164 = tpu.reciprocal %161 {approx = true} : vector<128x1xf32> -> vector<128x1xf32>
    %165 = vector.broadcast %164 : vector<128x1xf32> to vector<128x8xf32>
    %166 = arith.mulf %163, %165 : vector<128x8xf32>
    %167 = arith.truncf %166 : vector<128x8xf32> to vector<128x8xbf16>
    %168 = arith.index_cast %c2_i32 : i32 to index
    %c0_74 = arith.constant 0 : index
    %c0_75 = arith.constant 0 : index
    %169 = vector.load %arg7[%168, %c0_74, %c0_75] : memref<4x8x32xbf16, #tpu.memory_space<vmem>>, vector<1x8x32xbf16>
    %170 = vector.shape_cast %169 : vector<1x8x32xbf16> to vector<8x32xbf16>
    %cst_76 = arith.constant dense<0.000000e+00> : vector<128x32xf32>
    %171 = tpu.matmul %167, %170, %cst_76 {dimension_numbers = #tpu.dot_dimension_numbers<[1], [0], [0], [1], [0, 0, 1, 1], [], []>} : vector<128x8xbf16>, vector<8x32xbf16>, vector<128x32xf32> -> vector<128x32xf32>
    %172 = arith.addf %119, %171 : vector<128x32xf32>
    %c3_i32 = arith.constant 3 : i32
    %173 = arith.index_cast %c3_i32 : i32 to index
    %c0_77 = arith.constant 0 : index
    %c0_78 = arith.constant 0 : index
    %174 = vector.load %arg4[%173, %c0_77, %c0_78] : memref<4x32x8xbf16, #tpu.memory_space<vmem>>, vector<1x32x8xbf16>
    %175 = vector.shape_cast %174 : vector<1x32x8xbf16> to vector<32x8xbf16>
    %cst_79 = arith.constant dense<0.000000e+00> : vector<128x8xf32>
    %176 = tpu.matmul %4, %175, %cst_79 {dimension_numbers = #tpu.dot_dimension_numbers<[1], [0], [0], [1], [0, 0, 1, 1], [], []>} : vector<128x32xbf16>, vector<32x8xbf16>, vector<128x8xf32> -> vector<128x8xf32>
    %177 = arith.index_cast %c3_i32 : i32 to index
    %c0_80 = arith.constant 0 : index
    %c0_81 = arith.constant 0 : index
    %178 = vector.load %arg11[%177, %c0_80, %c0_81] : memref<4x1x8xf32, #tpu.memory_space<vmem>>, vector<1x1x8xf32>
    %179 = vector.shape_cast %178 : vector<1x1x8xf32> to vector<1x8xf32>
    %180 = vector.broadcast %179 : vector<1x8xf32> to vector<128x8xf32>
    %181 = arith.addf %176, %180 : vector<128x8xf32>
    %182 = arith.index_cast %c3_i32 : i32 to index
    %c0_82 = arith.constant 0 : index
    %c0_83 = arith.constant 0 : index
    %183 = vector.load %arg5[%182, %c0_82, %c0_83] : memref<4x32x8xbf16, #tpu.memory_space<vmem>>, vector<1x32x8xbf16>
    %184 = vector.shape_cast %183 : vector<1x32x8xbf16> to vector<32x8xbf16>
    %cst_84 = arith.constant dense<0.000000e+00> : vector<128x8xf32>
    %185 = tpu.matmul %5, %184, %cst_84 {dimension_numbers = #tpu.dot_dimension_numbers<[1], [0], [0], [1], [0, 0, 1, 1], [], []>} : vector<128x32xbf16>, vector<32x8xbf16>, vector<128x8xf32> -> vector<128x8xf32>
    %186 = arith.index_cast %c3_i32 : i32 to index
    %c0_85 = arith.constant 0 : index
    %c0_86 = arith.constant 0 : index
    %187 = vector.load %arg12[%186, %c0_85, %c0_86] : memref<4x1x8xf32, #tpu.memory_space<vmem>>, vector<1x1x8xf32>
    %188 = vector.shape_cast %187 : vector<1x1x8xf32> to vector<1x8xf32>
    %189 = vector.broadcast %188 : vector<1x8xf32> to vector<128x8xf32>
    %190 = arith.addf %185, %189 : vector<128x8xf32>
    %191 = arith.index_cast %c3_i32 : i32 to index
    %c0_87 = arith.constant 0 : index
    %c0_88 = arith.constant 0 : index
    %192 = vector.load %arg6[%191, %c0_87, %c0_88] : memref<4x32x8xbf16, #tpu.memory_space<vmem>>, vector<1x32x8xbf16>
    %193 = vector.shape_cast %192 : vector<1x32x8xbf16> to vector<32x8xbf16>
    %cst_89 = arith.constant dense<0.000000e+00> : vector<128x8xf32>
    %194 = tpu.matmul %5, %193, %cst_89 {dimension_numbers = #tpu.dot_dimension_numbers<[1], [0], [0], [1], [0, 0, 1, 1], [], []>} : vector<128x32xbf16>, vector<32x8xbf16>, vector<128x8xf32> -> vector<128x8xf32>
    %195 = arith.index_cast %c3_i32 : i32 to index
    %c0_90 = arith.constant 0 : index
    %c0_91 = arith.constant 0 : index
    %196 = vector.load %arg13[%195, %c0_90, %c0_91] : memref<4x1x8xf32, #tpu.memory_space<vmem>>, vector<1x1x8xf32>
    %197 = vector.shape_cast %196 : vector<1x1x8xf32> to vector<1x8xf32>
    %198 = vector.broadcast %197 : vector<1x8xf32> to vector<128x8xf32>
    %199 = arith.addf %194, %198 : vector<128x8xf32>
    %cst_92 = arith.constant 0.353553385 : f32
    %200 = vector.broadcast %cst_92 : f32 to vector<128x8xf32>
    %201 = arith.mulf %181, %200 : vector<128x8xf32>
    %202 = arith.truncf %201 : vector<128x8xf32> to vector<128x8xbf16>
    %203 = arith.truncf %190 : vector<128x8xf32> to vector<128x8xbf16>
    %204 = arith.truncf %199 : vector<128x8xf32> to vector<128x8xbf16>
    %cst_93 = arith.constant dense<0.000000e+00> : vector<128x128xf32>
    %205 = tpu.matmul %202, %203, %cst_93 {dimension_numbers = #tpu.dot_dimension_numbers<[1], [1], [0], [0], [0, 0, 1, 0], [], []>} : vector<128x8xbf16>, vector<128x8xbf16>, vector<128x128xf32> -> vector<128x128xf32>
    %206 = vector.broadcast %12 : vector<1x128xf32> to vector<128x128xf32>
    %207 = arith.addf %205, %206 : vector<128x128xf32>
    %cst_94 = arith.constant dense<0xFF800000> : vector<128xf32>
    %208 = vector.multi_reduction <maximumf>, %207, %cst_94 [1] : vector<128x128xf32> to vector<128xf32>
    %209 = vector.shape_cast %208 : vector<128xf32> to vector<128x1xf32>
    %210 = vector.broadcast %209 : vector<128x1xf32> to vector<128x128xf32>
    %211 = arith.subf %207, %210 : vector<128x128xf32>
    %212 = math.exp %211 : vector<128x128xf32>
    %cst_95 = arith.constant dense<0.000000e+00> : vector<128xf32>
    %213 = vector.multi_reduction <add>, %212, %cst_95 [1] : vector<128x128xf32> to vector<128xf32>
    %214 = vector.shape_cast %213 : vector<128xf32> to vector<128x1xf32>
    %215 = arith.truncf %212 : vector<128x128xf32> to vector<128x128xbf16>
    %cst_96 = arith.constant dense<0.000000e+00> : vector<128x8xf32>
    %216 = tpu.matmul %215, %204, %cst_96 {dimension_numbers = #tpu.dot_dimension_numbers<[1], [0], [0], [1], [0, 0, 1, 1], [], []>} : vector<128x128xbf16>, vector<128x8xbf16>, vector<128x8xf32> -> vector<128x8xf32>
    %217 = tpu.reciprocal %214 {approx = true} : vector<128x1xf32> -> vector<128x1xf32>
    %218 = vector.broadcast %217 : vector<128x1xf32> to vector<128x8xf32>
    %219 = arith.mulf %216, %218 : vector<128x8xf32>
    %220 = arith.truncf %219 : vector<128x8xf32> to vector<128x8xbf16>
    %221 = arith.index_cast %c3_i32 : i32 to index
    %c0_97 = arith.constant 0 : index
    %c0_98 = arith.constant 0 : index
    %222 = vector.load %arg7[%221, %c0_97, %c0_98] : memref<4x8x32xbf16, #tpu.memory_space<vmem>>, vector<1x8x32xbf16>
    %223 = vector.shape_cast %222 : vector<1x8x32xbf16> to vector<8x32xbf16>
    %cst_99 = arith.constant dense<0.000000e+00> : vector<128x32xf32>
    %224 = tpu.matmul %220, %223, %cst_99 {dimension_numbers = #tpu.dot_dimension_numbers<[1], [0], [0], [1], [0, 0, 1, 1], [], []>} : vector<128x8xbf16>, vector<8x32xbf16>, vector<128x32xf32> -> vector<128x32xf32>
    %225 = arith.addf %172, %224 : vector<128x32xf32>
    %c4_i32 = arith.constant 4 : i32
    %c0_100 = arith.constant 0 : index
    %c0_101 = arith.constant 0 : index
    %226 = vector.load %arg14[%c0_100, %c0_101] : memref<1x32xf32, #tpu.memory_space<vmem>>, vector<1x32xf32>
    %227 = vector.broadcast %226 : vector<1x32xf32> to vector<128x32xf32>
    %228 = arith.addf %225, %227 : vector<128x32xf32>
    %c0_102 = arith.constant 0 : index
    %c0_103 = arith.constant 0 : index
    %229 = vector.load %arg8[%c0_102, %c0_103] : memref<32x64xbf16, #tpu.memory_space<vmem>>, vector<32x64xbf16>
    %cst_104 = arith.constant dense<0.000000e+00> : vector<128x64xf32>
    %230 = tpu.matmul %4, %229, %cst_104 {dimension_numbers = #tpu.dot_dimension_numbers<[1], [0], [0], [1], [0, 0, 1, 1], [], []>} : vector<128x32xbf16>, vector<32x64xbf16>, vector<128x64xf32> -> vector<128x64xf32>
    %231 = arith.truncf %228 : vector<128x32xf32> to vector<128x32xbf16>
    %c0_105 = arith.constant 0 : index
    %c0_106 = arith.constant 0 : index
    %232 = vector.load %arg9[%c0_105, %c0_106] : memref<32x64xbf16, #tpu.memory_space<vmem>>, vector<32x64xbf16>
    %cst_107 = arith.constant dense<0.000000e+00> : vector<128x64xf32>
    %233 = tpu.matmul %231, %232, %cst_107 {dimension_numbers = #tpu.dot_dimension_numbers<[1], [0], [0], [1], [0, 0, 1, 1], [], []>} : vector<128x32xbf16>, vector<32x64xbf16>, vector<128x64xf32> -> vector<128x64xf32>
    %234 = arith.addf %230, %233 : vector<128x64xf32>
    %c0_108 = arith.constant 0 : index
    %c0_109 = arith.constant 0 : index
    %235 = vector.load %arg15[%c0_108, %c0_109] : memref<1x64xf32, #tpu.memory_space<vmem>>, vector<1x64xf32>
    %236 = vector.broadcast %235 : vector<1x64xf32> to vector<128x64xf32>
    %237 = arith.addf %234, %236 : vector<128x64xf32>
    %cst_110 = arith.constant 0.000000e+00 : f32
    %238 = vector.broadcast %cst_110 : f32 to vector<128x64xf32>
    %239 = arith.maximumf %237, %238 : vector<128x64xf32>
    %240 = arith.truncf %239 : vector<128x64xf32> to vector<128x64xbf16>
    %c0_111 = arith.constant 0 : index
    %c0_112 = arith.constant 0 : index
    %241 = vector.load %arg10[%c0_111, %c0_112] : memref<64x32xbf16, #tpu.memory_space<vmem>>, vector<64x32xbf16>
    %cst_113 = arith.constant dense<0.000000e+00> : vector<128x32xf32>
    %242 = tpu.matmul %240, %241, %cst_113 {dimension_numbers = #tpu.dot_dimension_numbers<[1], [0], [0], [1], [0, 0, 1, 1], [], []>} : vector<128x64xbf16>, vector<64x32xbf16>, vector<128x32xf32> -> vector<128x32xf32>
    %c0_114 = arith.constant 0 : index
    %c0_115 = arith.constant 0 : index
    %243 = vector.load %arg16[%c0_114, %c0_115] : memref<1x32xf32, #tpu.memory_space<vmem>>, vector<1x32xf32>
    %244 = vector.broadcast %243 : vector<1x32xf32> to vector<128x32xf32>
    %245 = arith.addf %242, %244 : vector<128x32xf32>
    %246 = arith.addf %1, %245 : vector<128x32xf32>
    %c0_116 = arith.constant 0 : index
    %c0_117 = arith.constant 0 : index
    %c0_118 = arith.constant 0 : index
    %247 = vector.load %arg17[%c0_116, %c0_117, %c0_118] : memref<1x128x32xf32, #tpu.memory_space<vmem>>, vector<1x128x32xf32>
    %248 = vector.shape_cast %247 : vector<1x128x32xf32> to vector<128x32xf32>
    %249 = vector.shape_cast %246 : vector<128x32xf32> to vector<1x128x32xf32>
    tpu.vector_store %arg17[%c0_116, %c0_117, %c0_118], %249 {strides = array<i32>} : memref<1x128x32xf32, #tpu.memory_space<vmem>>, vector<1x128x32xf32>,
    return
  }
  func.func @transform_0(%arg0: i32, %arg1: memref<1xi32, #tpu.memory_space<smem>>) -> (i32, i32, i32) {
    %c0_i32 = arith.constant 0 : i32
    %c0_i32_0 = arith.constant 0 : i32
    %c0_i32_1 = arith.constant 0 : i32
    return %arg0, %c0_i32, %c0_i32_0 : i32, i32, i32
  }
  func.func @transform_1(%arg0: i32, %arg1: memref<1xi32, #tpu.memory_space<smem>>) -> (i32, i32, i32) {
    %c0_i32 = arith.constant 0 : i32
    %c0_i32_0 = arith.constant 0 : i32
    %c0_i32_1 = arith.constant 0 : i32
    return %arg0, %c0_i32, %c0_i32_0 : i32, i32, i32
  }
  func.func @transform_2(%arg0: i32, %arg1: memref<1xi32, #tpu.memory_space<smem>>) -> (i32, i32, i32) {
    %c0_i32 = arith.constant 0 : i32
    %c0_i32_0 = arith.constant 0 : i32
    %c0_i32_1 = arith.constant 0 : i32
    %c0_i32_2 = arith.constant 0 : i32
    return %c0_i32, %c0_i32_0, %c0_i32_1 : i32, i32, i32
  }
  func.func @transform_3(%arg0: i32, %arg1: memref<1xi32, #tpu.memory_space<smem>>) -> (i32, i32, i32) {
    %c0_i32 = arith.constant 0 : i32
    %c0_i32_0 = arith.constant 0 : i32
    %c0_i32_1 = arith.constant 0 : i32
    %c0_i32_2 = arith.constant 0 : i32
    return %c0_i32, %c0_i32_0, %c0_i32_1 : i32, i32, i32
  }
  func.func @transform_4(%arg0: i32, %arg1: memref<1xi32, #tpu.memory_space<smem>>) -> (i32, i32, i32) {
    %c0_i32 = arith.constant 0 : i32
    %c0_i32_0 = arith.constant 0 : i32
    %c0_i32_1 = arith.constant 0 : i32
    %c0_i32_2 = arith.constant 0 : i32
    return %c0_i32, %c0_i32_0, %c0_i32_1 : i32, i32, i32
  }
  func.func @transform_5(%arg0: i32, %arg1: memref<1xi32, #tpu.memory_space<smem>>) -> (i32, i32, i32) {
    %c0_i32 = arith.constant 0 : i32
    %c0_i32_0 = arith.constant 0 : i32
    %c0_i32_1 = arith.constant 0 : i32
    %c0_i32_2 = arith.constant 0 : i32
    return %c0_i32, %c0_i32_0, %c0_i32_1 : i32, i32, i32
  }
  func.func @transform_6(%arg0: i32, %arg1: memref<1xi32, #tpu.memory_space<smem>>) -> (i32, i32) {
    %c0_i32 = arith.constant 0 : i32
    %c0_i32_0 = arith.constant 0 : i32
    %c0_i32_1 = arith.constant 0 : i32
    return %c0_i32, %c0_i32_0 : i32, i32
  }
  func.func @transform_7(%arg0: i32, %arg1: memref<1xi32, #tpu.memory_space<smem>>) -> (i32, i32) {
    %c0_i32 = arith.constant 0 : i32
    %c0_i32_0 = arith.constant 0 : i32
    %c0_i32_1 = arith.constant 0 : i32
    return %c0_i32, %c0_i32_0 : i32, i32
  }
  func.func @transform_8(%arg0: i32, %arg1: memref<1xi32, #tpu.memory_space<smem>>) -> (i32, i32) {
    %c0_i32 = arith.constant 0 : i32
    %c0_i32_0 = arith.constant 0 : i32
    %c0_i32_1 = arith.constant 0 : i32
    return %c0_i32, %c0_i32_0 : i32, i32
  }
  func.func @transform_9(%arg0: i32, %arg1: memref<1xi32, #tpu.memory_space<smem>>) -> (i32, i32, i32) {
    %c0_i32 = arith.constant 0 : i32
    %c0_i32_0 = arith.constant 0 : i32
    %c0_i32_1 = arith.constant 0 : i32
    %c0_i32_2 = arith.constant 0 : i32
    return %c0_i32, %c0_i32_0, %c0_i32_1 : i32, i32, i32
  }
  func.func @transform_10(%arg0: i32, %arg1: memref<1xi32, #tpu.memory_space<smem>>) -> (i32, i32, i32) {
    %c0_i32 = arith.constant 0 : i32
    %c0_i32_0 = arith.constant 0 : i32
    %c0_i32_1 = arith.constant 0 : i32
    %c0_i32_2 = arith.constant 0 : i32
    return %c0_i32, %c0_i32_0, %c0_i32_1 : i32, i32, i32
  }
  func.func @transform_11(%arg0: i32, %arg1: memref<1xi32, #tpu.memory_space<smem>>) -> (i32, i32, i32) {
    %c0_i32 = arith.constant 0 : i32
    %c0_i32_0 = arith.constant 0 : i32
    %c0_i32_1 = arith.constant 0 : i32
    %c0_i32_2 = arith.constant 0 : i32
    return %c0_i32, %c0_i32_0, %c0_i32_1 : i32, i32, i32
  }
  func.func @transform_12(%arg0: i32, %arg1: memref<1xi32, #tpu.memory_space<smem>>) -> (i32, i32) {
    %c0_i32 = arith.constant 0 : i32
    %c0_i32_0 = arith.constant 0 : i32
    %c0_i32_1 = arith.constant 0 : i32
    return %c0_i32, %c0_i32_0 : i32, i32
  }
  func.func @transform_13(%arg0: i32, %arg1: memref<1xi32, #tpu.memory_space<smem>>) -> (i32, i32) {
    %c0_i32 = arith.constant 0 : i32
    %c0_i32_0 = arith.constant 0 : i32
    %c0_i32_1 = arith.constant 0 : i32
    return %c0_i32, %c0_i32_0 : i32, i32
  }
  func.func @transform_14(%arg0: i32, %arg1: memref<1xi32, #tpu.memory_space<smem>>) -> (i32, i32) {
    %c0_i32 = arith.constant 0 : i32
    %c0_i32_0 = arith.constant 0 : i32
    %c0_i32_1 = arith.constant 0 : i32
    return %c0_i32, %c0_i32_0 : i32, i32
  }
  func.func @transform_15(%arg0: i32, %arg1: memref<1xi32, #tpu.memory_space<smem>>) -> (i32, i32, i32) {
    %c0_i32 = arith.constant 0 : i32
    %c0_i32_0 = arith.constant 0 : i32
    %c0_i32_1 = arith.constant 0 : i32
    return %arg0, %c0_i32, %c0_i32_0 : i32, i32, i32
  }
}

</mosaic_0001>

<llo_original>
// kernel: tpu_custom_call.1
$region0: #{tpu_custom_call.1}
  #allocation0 [shape = 'u32[]', space=smem, size = 0x4, offset = 0x4, fixed_abs, tag = 'smem constant byte address 0x4 - core index']
  #allocation1 [shape = 'u32[144,128]{1,0:T(1,128)}', space=vmem, size = 0x12000, scoped, tag = 'internal scratch']
  #allocation2 [shape = 's32[1]{0}', space=sflag, size = 0x4, scoped, tag = 'scoped memory for tpu_custom_call.1']
  #allocation3 [shape = 's32[1]{0:T(128)S(6)}', space=smem, size = 0x200, scoped, tag = 'prefetched SMEM operand 0']
  %s0 = inlined_call_operand.<no memory space> [shape: s32[1], index: 0, kind: input, shape index: {}]
  %s1 = inlined_call_operand.vmem [shape: f32[2,128,32], index: 1, kind: input, shape index: {}]
  %s2 = inlined_call_operand.vmem [shape: f32[2,128,32], index: 2, kind: input, shape index: {}]
  %s3 = inlined_call_operand.vmem [shape: bf16[4,32,8], index: 3, kind: input, shape index: {}]
  %s4 = inlined_call_operand.vmem [shape: bf16[4,32,8], index: 4, kind: input, shape index: {}]
  %s5 = inlined_call_operand.vmem [shape: bf16[4,32,8], index: 5, kind: input, shape index: {}]
  %s6 = inlined_call_operand.vmem [shape: bf16[4,8,32], index: 6, kind: input, shape index: {}]
  %s7 = inlined_call_operand.vmem [shape: bf16[32,64], index: 7, kind: input, shape index: {}]
  %s8 = inlined_call_operand.vmem [shape: bf16[32,64], index: 8, kind: input, shape index: {}]
  %s9 = inlined_call_operand.vmem [shape: bf16[64,32], index: 9, kind: input, shape index: {}]
  %s10 = inlined_call_operand.vmem [shape: f32[4,1,8], index: 10, kind: input, shape index: {}]
  %s11 = inlined_call_operand.vmem [shape: f32[4,1,8], index: 11, kind: input, shape index: {}]
  %s12 = inlined_call_operand.vmem [shape: f32[4,1,8], index: 12, kind: input, shape index: {}]
  %s13 = inlined_call_operand.vmem [shape: f32[1,32], index: 13, kind: input, shape index: {}]
  %s14 = inlined_call_operand.vmem [shape: f32[1,64], index: 14, kind: input, shape index: {}]
  %s15 = inlined_call_operand.vmem [shape: f32[1,32], index: 15, kind: input, shape index: {}]
  %s16 = inlined_call_operand.vmem [shape: f32[2,128,32], index: 16, kind: output, shape index: {}]
  %s17 = sld [smem:[#allocation0]]
  $region93: #{tpu_custom_call.1} parent=0
    _
  %s19 = ssub.s32 1, %s17
  %s20 = scalar_select 0, %s19, %s17
  %21 = sst [smem:[#allocation3]] %s0
  loop: start=0, step=1, limit=4
  $region2: #{tpu_custom_call.1} parent=0 // loop_pre_header
    _
  $region3: #{tpu_custom_call.1} parent=0 // loop_header
    %s23 = sphi 0, %s27
    %p24 = scmp.ge.s32.totalorder %s23, 4
    %s33 = sphi 0, %s35
    %s36 = sphi 0, %s33
    %s37 = sphi 0, %s36
    %s53 = sphi 0, %s37
    %s59 = sphi 0, %s61
    %s62 = sphi 0, %s59
    %s63 = sphi 0, %s62
    %s79 = sphi 0, %s63
    %s83 = sphi 0, %s83
    %s85 = sphi 0, %s83
    %s86 = sphi 0, %s85
    %s100 = sphi 0, %s86
    %s104 = sphi 0, %s104
    %s106 = sphi 0, %s104
    %s107 = sphi 0, %s106
    %s121 = sphi 0, %s107
    %s125 = sphi 0, %s125
    %s127 = sphi 0, %s125
    %s128 = sphi 0, %s127
    %s142 = sphi 0, %s128
    %s146 = sphi 0, %s146
    %s148 = sphi 0, %s146
    %s149 = sphi 0, %s148
    %s163 = sphi 0, %s149
    %s167 = sphi 0, %s167
    %s169 = sphi 0, %s167
    %s170 = sphi 0, %s169
    %s184 = sphi 0, %s170
    %s188 = sphi 0, %s188
    %s190 = sphi 0, %s188
    %s191 = sphi 0, %s190
    %s205 = sphi 0, %s191
    %s209 = sphi 0, %s209
    %s211 = sphi 0, %s209
    %s212 = sphi 0, %s211
    %s226 = sphi 0, %s212
    %s230 = sphi 0, %s230
    %s232 = sphi 0, %s230
    %s233 = sphi 0, %s232
    %s247 = sphi 0, %s233
    %s251 = sphi 0, %s251
    %s253 = sphi 0, %s251
    %s254 = sphi 0, %s253
    %s268 = sphi 0, %s254
    %s272 = sphi 0, %s272
    %s274 = sphi 0, %s272
    %s275 = sphi 0, %s274
    %s289 = sphi 0, %s275
    %s293 = sphi 0, %s293
    %s295 = sphi 0, %s293
    %s296 = sphi 0, %s295
    %s310 = sphi 0, %s296
    %s314 = sphi 0, %s314
    %s316 = sphi 0, %s314
    %s317 = sphi 0, %s316
    %s331 = sphi 0, %s317
    %s335 = sphi 0, %s335
    %s337 = sphi 0, %s335
    %s338 = sphi 0, %s337
    %s352 = sphi 0, %s338
    %s358 = sphi 0, %s360
    %s361 = sphi 0, %s358
    %s362 = sphi 0, %s361
    %s378 = sphi 0, %s362
  $region4: #{tpu_custom_call.1} parent=0 // loop_header_branch
    %26 = sbr.rel (%p24) target = $region8
  $region5: #{tpu_custom_call.1} parent=0 // loop_body
    %s28 = ssub.s32 %s23, 1
    %s29 = ssub.s32 %s23, 2
    %s30 = sadd.s32 %s23, 1
    %s31 = ssub.s32 %s23, %s30
    %p32 = scmp.eq.s32.totalorder %s31, 0
    %s34 = sadd.s32 %s33, 1
    %s35 = scalar_select %p32, %s33, %s34
    %p38 = pneg %p32
    %p39 = scmp.eq.s32.totalorder %s23, 1
    %p40 = por %p38, %p39
    %p41 = scmp.ne.s32.totalorder %s33, %s36
    %p42 = scmp.eq.s32.totalorder %s23, 0
    %p43 = por %p41, %p42
    %p44 = scmp.ne.s32.totalorder %s33, %s36
    %p45 = scmp.eq.s32.totalorder %s28, 1
    %p46 = por %p44, %p45
    %p47 = scmp.ne.s32.totalorder %s36, %s37
    %p48 = scmp.eq.s32.totalorder %s28, 0
    %p49 = por %p47, %p48
    %p50 = scmp.ne.s32.totalorder %s36, %s37
    %p51 = scmp.eq.s32.totalorder %s29, 1
    %p52 = por %p50, %p51
    %p54 = scmp.ne.s32.totalorder %s37, %s53
    %p55 = scmp.eq.s32.totalorder %s29, 0
    %p56 = por %p54, %p55
    %s57 = ssub.s32 %s23, %s30
    %p58 = scmp.eq.s32.totalorder %s57, 0
    %s60 = sadd.s32 %s59, 1
    %s61 = scalar_select %p58, %s59, %s60
    %p64 = pneg %p58
    %p65 = scmp.eq.s32.totalorder %s23, 1
    %p66 = por %p64, %p65
    %p67 = scmp.ne.s32.totalorder %s59, %s62
    %p68 = scmp.eq.s32.totalorder %s23, 0
    %p69 = por %p67, %p68
    %p70 = scmp.ne.s32.totalorder %s59, %s62
    %p71 = scmp.eq.s32.totalorder %s28, 1
    %p72 = por %p70, %p71
    %p73 = scmp.ne.s32.totalorder %s62, %s63
    %p74 = scmp.eq.s32.totalorder %s28, 0
    %p75 = por %p73, %p74
    %p76 = scmp.ne.s32.totalorder %s62, %s63
    %p77 = scmp.eq.s32.totalorder %s29, 1
    %p78 = por %p76, %p77
    %p80 = scmp.ne.s32.totalorder %s63, %s79
    %p81 = scmp.eq.s32.totalorder %s29, 0
    %p82 = por %p80, %p81
    %s84 = sadd.s32 %s83, 1
    %p87 = scmp.eq.s32.totalorder %s23, 1
    %p88 = scmp.ne.s32.totalorder %s83, %s85
    %p89 = scmp.eq.s32.totalorder %s23, 0
    %p90 = por %p88, %p89
    %p91 = scmp.ne.s32.totalorder %s83, %s85
    %p92 = scmp.eq.s32.totalorder %s28, 1
    %p93 = por %p91, %p92
    %p94 = scmp.ne.s32.totalorder %s85, %s86
    %p95 = scmp.eq.s32.totalorder %s28, 0
    %p96 = por %p94, %p95
    %p97 = scmp.ne.s32.totalorder %s85, %s86
    %p98 = scmp.eq.s32.totalorder %s29, 1
    %p99 = por %p97, %p98
    %p101 = scmp.ne.s32.totalorder %s86, %s100
    %p102 = scmp.eq.s32.totalorder %s29, 0
    %p103 = por %p101, %p102
    %s105 = sadd.s32 %s104, 1
    %p108 = scmp.eq.s32.totalorder %s23, 1
    %p109 = scmp.ne.s32.totalorder %s104, %s106
    %p110 = scmp.eq.s32.totalorder %s23, 0
    %p111 = por %p109, %p110
    %p112 = scmp.ne.s32.totalorder %s104, %s106
    %p113 = scmp.eq.s32.totalorder %s28, 1
    %p114 = por %p112, %p113
    %p115 = scmp.ne.s32.totalorder %s106, %s107
    %p116 = scmp.eq.s32.totalorder %s28, 0
    %p117 = por %p115, %p116
    %p118 = scmp.ne.s32.totalorder %s106, %s107
    %p119 = scmp.eq.s32.totalorder %s29, 1
    %p120 = por %p118, %p119
    %p122 = scmp.ne.s32.totalorder %s107, %s121
    %p123 = scmp.eq.s32.totalorder %s29, 0
    %p124 = por %p122, %p123
    %s126 = sadd.s32 %s125, 1
    %p129 = scmp.eq.s32.totalorder %s23, 1
    %p130 = scmp.ne.s32.totalorder %s125, %s127
    %p131 = scmp.eq.s32.totalorder %s23, 0
    %p132 = por %p130, %p131
    %p133 = scmp.ne.s32.totalorder %s125, %s127
    %p134 = scmp.eq.s32.totalorder %s28, 1
    %p135 = por %p133, %p134
    %p136 = scmp.ne.s32.totalorder %s127, %s128
    %p137 = scmp.eq.s32.totalorder %s28, 0
    %p138 = por %p136, %p137
    %p139 = scmp.ne.s32.totalorder %s127, %s128
    %p140 = scmp.eq.s32.totalorder %s29, 1
    %p141 = por %p139, %p140
    %p143 = scmp.ne.s32.totalorder %s128, %s142
    %p144 = scmp.eq.s32.totalorder %s29, 0
    %p145 = por %p143, %p144
    %s147 = sadd.s32 %s146, 1
    %p150 = scmp.eq.s32.totalorder %s23, 1
    %p151 = scmp.ne.s32.totalorder %s146, %s148
    %p152 = scmp.eq.s32.totalorder %s23, 0
    %p153 = por %p151, %p152
    %p154 = scmp.ne.s32.totalorder %s146, %s148
    %p155 = scmp.eq.s32.totalorder %s28, 1
    %p156 = por %p154, %p155
    %p157 = scmp.ne.s32.totalorder %s148, %s149
    %p158 = scmp.eq.s32.totalorder %s28, 0
    %p159 = por %p157, %p158
    %p160 = scmp.ne.s32.totalorder %s148, %s149
    %p161 = scmp.eq.s32.totalorder %s29, 1
    %p162 = por %p160, %p161
    %p164 = scmp.ne.s32.totalorder %s149, %s163
    %p165 = scmp.eq.s32.totalorder %s29, 0
    %p166 = por %p164, %p165
    %s168 = sadd.s32 %s167, 1
    %p171 = scmp.eq.s32.totalorder %s23, 1
    %p172 = scmp.ne.s32.totalorder %s167, %s169
    %p173 = scmp.eq.s32.totalorder %s23, 0
    %p174 = por %p172, %p173
    %p175 = scmp.ne.s32.totalorder %s167, %s169
    %p176 = scmp.eq.s32.totalorder %s28, 1
    %p177 = por %p175, %p176
    %p178 = scmp.ne.s32.totalorder %s169, %s170
    %p179 = scmp.eq.s32.totalorder %s28, 0
    %p180 = por %p178, %p179
    %p181 = scmp.ne.s32.totalorder %s169, %s170
    %p182 = scmp.eq.s32.totalorder %s29, 1
    %p183 = por %p181, %p182
    %p185 = scmp.ne.s32.totalorder %s170, %s184
    %p186 = scmp.eq.s32.totalorder %s29, 0
    %p187 = por %p185, %p186
    %s189 = sadd.s32 %s188, 1
    %p192 = scmp.eq.s32.totalorder %s23, 1
    %p193 = scmp.ne.s32.totalorder %s188, %s190
    %p194 = scmp.eq.s32.totalorder %s23, 0
    %p195 = por %p193, %p194
    %p196 = scmp.ne.s32.totalorder %s188, %s190
    %p197 = scmp.eq.s32.totalorder %s28, 1
    %p198 = por %p196, %p197
    %p199 = scmp.ne.s32.totalorder %s190, %s191
    %p200 = scmp.eq.s32.totalorder %s28, 0
    %p201 = por %p199, %p200
    %p202 = scmp.ne.s32.totalorder %s190, %s191
    %p203 = scmp.eq.s32.totalorder %s29, 1
    %p204 = por %p202, %p203
    %p206 = scmp.ne.s32.totalorder %s191, %s205
    %p207 = scmp.eq.s32.totalorder %s29, 0
    %p208 = por %p206, %p207
    %s210 = sadd.s32 %s209, 1
    %p213 = scmp.eq.s32.totalorder %s23, 1
    %p214 = scmp.ne.s32.totalorder %s209, %s211
    %p215 = scmp.eq.s32.totalorder %s23, 0
    %p216 = por %p214, %p215
    %p217 = scmp.ne.s32.totalorder %s209, %s211
    %p218 = scmp.eq.s32.totalorder %s28, 1
    %p219 = por %p217, %p218
    %p220 = scmp.ne.s32.totalorder %s211, %s212
    %p221 = scmp.eq.s32.totalorder %s28, 0
    %p222 = por %p220, %p221
    %p223 = scmp.ne.s32.totalorder %s211, %s212
    %p224 = scmp.eq.s32.totalorder %s29, 1
    %p225 = por %p223, %p224
    %p227 = scmp.ne.s32.totalorder %s212, %s226
    %p228 = scmp.eq.s32.totalorder %s29, 0
    %p229 = por %p227, %p228
    %s231 = sadd.s32 %s230, 1
    %p234 = scmp.eq.s32.totalorder %s23, 1
    %p235 = scmp.ne.s32.totalorder %s230, %s232
    %p236 = scmp.eq.s32.totalorder %s23, 0
    %p237 = por %p235, %p236
    %p238 = scmp.ne.s32.totalorder %s230, %s232
    %p239 = scmp.eq.s32.totalorder %s28, 1
    %p240 = por %p238, %p239
    %p241 = scmp.ne.s32.totalorder %s232, %s233
    %p242 = scmp.eq.s32.totalorder %s28, 0
    %p243 = por %p241, %p242
    %p244 = scmp.ne.s32.totalorder %s232, %s233
    %p245 = scmp.eq.s32.totalorder %s29, 1
    %p246 = por %p244, %p245
    %p248 = scmp.ne.s32.totalorder %s233, %s247
    %p249 = scmp.eq.s32.totalorder %s29, 0
    %p250 = por %p248, %p249
    %s252 = sadd.s32 %s251, 1
    %p255 = scmp.eq.s32.totalorder %s23, 1
    %p256 = scmp.ne.s32.totalorder %s251, %s253
    %p257 = scmp.eq.s32.totalorder %s23, 0
    %p258 = por %p256, %p257
    %p259 = scmp.ne.s32.totalorder %s251, %s253
    %p260 = scmp.eq.s32.totalorder %s28, 1
    %p261 = por %p259, %p260
    %p262 = scmp.ne.s32.totalorder %s253, %s254
    %p263 = scmp.eq.s32.totalorder %s28, 0
    %p264 = por %p262, %p263
    %p265 = scmp.ne.s32.totalorder %s253, %s254
    %p266 = scmp.eq.s32.totalorder %s29, 1
    %p267 = por %p265, %p266
    %p269 = scmp.ne.s32.totalorder %s254, %s268
    %p270 = scmp.eq.s32.totalorder %s29, 0
    %p271 = por %p269, %p270
    %s273 = sadd.s32 %s272, 1
    %p276 = scmp.eq.s32.totalorder %s23, 1
    %p277 = scmp.ne.s32.totalorder %s272, %s274
    %p278 = scmp.eq.s32.totalorder %s23, 0
    %p279 = por %p277, %p278
    %p280 = scmp.ne.s32.totalorder %s272, %s274
    %p281 = scmp.eq.s32.totalorder %s28, 1
    %p282 = por %p280, %p281
    %p283 = scmp.ne.s32.totalorder %s274, %s275
    %p284 = scmp.eq.s32.totalorder %s28, 0
    %p285 = por %p283, %p284
    %p286 = scmp.ne.s32.totalorder %s274, %s275
    %p287 = scmp.eq.s32.totalorder %s29, 1
    %p288 = por %p286, %p287
    %p290 = scmp.ne.s32.totalorder %s275, %s289
    %p291 = scmp.eq.s32.totalorder %s29, 0
    %p292 = por %p290, %p291
    %s294 = sadd.s32 %s293, 1
    %p297 = scmp.eq.s32.totalorder %s23, 1
    %p298 = scmp.ne.s32.totalorder %s293, %s295
    %p299 = scmp.eq.s32.totalorder %s23, 0
    %p300 = por %p298, %p299
    %p301 = scmp.ne.s32.totalorder %s293, %s295
    %p302 = scmp.eq.s32.totalorder %s28, 1
    %p303 = por %p301, %p302
    %p304 = scmp.ne.s32.totalorder %s295, %s296
    %p305 = scmp.eq.s32.totalorder %s28, 0
    %p306 = por %p304, %p305
    %p307 = scmp.ne.s32.totalorder %s295, %s296
    %p308 = scmp.eq.s32.totalorder %s29, 1
    %p309 = por %p307, %p308
    %p311 = scmp.ne.s32.totalorder %s296, %s310
    %p312 = scmp.eq.s32.totalorder %s29, 0
    %p313 = por %p311, %p312
    %s315 = sadd.s32 %s314, 1
    %p318 = scmp.eq.s32.totalorder %s23, 1
    %p319 = scmp.ne.s32.totalorder %s314, %s316
    %p320 = scmp.eq.s32.totalorder %s23, 0
    %p321 = por %p319, %p320
    %p322 = scmp.ne.s32.totalorder %s314, %s316
    %p323 = scmp.eq.s32.totalorder %s28, 1
    %p324 = por %p322, %p323
    %p325 = scmp.ne.s32.totalorder %s316, %s317
    %p326 = scmp.eq.s32.totalorder %s28, 0
    %p327 = por %p325, %p326
    %p328 = scmp.ne.s32.totalorder %s316, %s317
    %p329 = scmp.eq.s32.totalorder %s29, 1
    %p330 = por %p328, %p329
    %p332 = scmp.ne.s32.totalorder %s317, %s331
    %p333 = scmp.eq.s32.totalorder %s29, 0
    %p334 = por %p332, %p333
    %s336 = sadd.s32 %s335, 1
    %p339 = scmp.eq.s32.totalorder %s23, 1
    %p340 = scmp.ne.s32.totalorder %s335, %s337
    %p341 = scmp.eq.s32.totalorder %s23, 0
    %p342 = por %p340, %p341
    %p343 = scmp.ne.s32.totalorder %s335, %s337
    %p344 = scmp.eq.s32.totalorder %s28, 1
    %p345 = por %p343, %p344
    %p346 = scmp.ne.s32.totalorder %s337, %s338
    %p347 = scmp.eq.s32.totalorder %s28, 0
    %p348 = por %p346, %p347
    %p349 = scmp.ne.s32.totalorder %s337, %s338
    %p350 = scmp.eq.s32.totalorder %s29, 1
    %p351 = por %p349, %p350
    %p353 = scmp.ne.s32.totalorder %s338, %s352
    %p354 = scmp.eq.s32.totalorder %s29, 0
    %p355 = por %p353, %p354
    %s356 = ssub.s32 %s23, %s30
    %p357 = scmp.eq.s32.totalorder %s356, 0
    %s359 = sadd.s32 %s358, 1
    %s360 = scalar_select %p357, %s358, %s359
    %p363 = pneg %p357
    %p364 = scmp.eq.s32.totalorder %s23, 1
    %p365 = por %p363, %p364
    %p366 = scmp.ne.s32.totalorder %s358, %s361
    %p367 = scmp.eq.s32.totalorder %s23, 0
    %p368 = por %p366, %p367
    %p369 = scmp.ne.s32.totalorder %s358, %s361
    %p370 = scmp.eq.s32.totalorder %s28, 1
    %p371 = por %p369, %p370
    %p372 = scmp.ne.s32.totalorder %s361, %s362
    %p373 = scmp.eq.s32.totalorder %s28, 0
    %p374 = por %p372, %p373
    %p375 = scmp.ne.s32.totalorder %s361, %s362
    %p376 = scmp.eq.s32.totalorder %s29, 1
    %p377 = por %p375, %p376
    %p379 = scmp.ne.s32.totalorder %s362, %s378
    %p380 = scmp.eq.s32.totalorder %s29, 0
    %p381 = por %p379, %p380
    %p382 = scmp.le.s32.totalorder 1, %s23
    %p383 = scmp.lt.s32.totalorder %s23, 3
    %p384 = pnand %p382, %p383
    %p385 = pneg %p384
    // Predicated region
    $region9: #{tpu_custom_call.1} parent=5 // pred_check
      _
    $region10: #{tpu_custom_call.1} parent=5 // pred_check_branch
      %387 = sbr.rel (%p384) target = $region12
    $region11: #{tpu_custom_call.1} parent=5 // pred_region
      %s388 = ssub.s32 %s23, 1
      // Predicated region
      $region13: #{tpu_custom_call.1} parent=11 // pred_check
        %p389 = pneg %p96
      $region14: #{tpu_custom_call.1} parent=11 // pred_check_branch
        %391 = sbr.rel (%p389) target = $region16
      $region15: #{tpu_custom_call.1} parent=11 // pred_region
        _
      $region16: #{tpu_custom_call.1} parent=11 // pred_fallthru
        _
      // Predicated region
      $region17: #{tpu_custom_call.1} parent=11 // pred_check
        %p392 = pneg %p117
      $region18: #{tpu_custom_call.1} parent=11 // pred_check_branch
        %394 = sbr.rel (%p392) target = $region20
      $region19: #{tpu_custom_call.1} parent=11 // pred_region
        _
      $region20: #{tpu_custom_call.1} parent=11 // pred_fallthru
        _
      // Predicated region
      $region21: #{tpu_custom_call.1} parent=11 // pred_check
        %p395 = pneg %p138
      $region22: #{tpu_custom_call.1} parent=11 // pred_check_branch
        %397 = sbr.rel (%p395) target = $region24
      $region23: #{tpu_custom_call.1} parent=11 // pred_region
        _
      $region24: #{tpu_custom_call.1} parent=11 // pred_fallthru
        _
      // Predicated region
      $region25: #{tpu_custom_call.1} parent=11 // pred_check
        %p398 = pneg %p159
      $region26: #{tpu_custom_call.1} parent=11 // pred_check_branch
        %400 = sbr.rel (%p398) target = $region28
      $region27: #{tpu_custom_call.1} parent=11 // pred_region
        _
      $region28: #{tpu_custom_call.1} parent=11 // pred_fallthru
        _
      // Predicated region
      $region29: #{tpu_custom_call.1} parent=11 // pred_check
        %p401 = pneg %p180
      $region30: #{tpu_custom_call.1} parent=11 // pred_check_branch
        %403 = sbr.rel (%p401) target = $region32
      $region31: #{tpu_custom_call.1} parent=11 // pred_region
        _
      $region32: #{tpu_custom_call.1} parent=11 // pred_fallthru
        _
      // Predicated region
      $region33: #{tpu_custom_call.1} parent=11 // pred_check
        %p404 = pneg %p201
      $region34: #{tpu_custom_call.1} parent=11 // pred_check_branch
        %406 = sbr.rel (%p404) target = $region36
      $region35: #{tpu_custom_call.1} parent=11 // pred_region
        _
      $region36: #{tpu_custom_call.1} parent=11 // pred_fallthru
        _
      // Predicated region
      $region37: #{tpu_custom_call.1} parent=11 // pred_check
        %p407 = pneg %p222
      $region38: #{tpu_custom_call.1} parent=11 // pred_check_branch
        %409 = sbr.rel (%p407) target = $region40
      $region39: #{tpu_custom_call.1} parent=11 // pred_region
        _
      $region40: #{tpu_custom_call.1} parent=11 // pred_fallthru
        _
      // Predicated region
      $region41: #{tpu_custom_call.1} parent=11 // pred_check
        %p410 = pneg %p243
      $region42: #{tpu_custom_call.1} parent=11 // pred_check_branch
        %412 = sbr.rel (%p410) target = $region44
      $region43: #{tpu_custom_call.1} parent=11 // pred_region
        _
      $region44: #{tpu_custom_call.1} parent=11 // pred_fallthru
        _
      // Predicated region
      $region45: #{tpu_custom_call.1} parent=11 // pred_check
        %p413 = pneg %p264
      $region46: #{tpu_custom_call.1} parent=11 // pred_check_branch
        %415 = sbr.rel (%p413) target = $region48
      $region47: #{tpu_custom_call.1} parent=11 // pred_region
        _
      $region48: #{tpu_custom_call.1} parent=11 // pred_fallthru
        _
      // Predicated region
      $region49: #{tpu_custom_call.1} parent=11 // pred_check
        %p416 = pneg %p285
      $region50: #{tpu_custom_call.1} parent=11 // pred_check_branch
        %418 = sbr.rel (%p416) target = $region52
      $region51: #{tpu_custom_call.1} parent=11 // pred_region
        _
      $region52: #{tpu_custom_call.1} parent=11 // pred_fallthru
        _
      // Predicated region
      $region53: #{tpu_custom_call.1} parent=11 // pred_check
        %p419 = pneg %p306
      $region54: #{tpu_custom_call.1} parent=11 // pred_check_branch
        %421 = sbr.rel (%p419) target = $region56
      $region55: #{tpu_custom_call.1} parent=11 // pred_region
        _
      $region56: #{tpu_custom_call.1} parent=11 // pred_fallthru
        _
      // Predicated region
      $region57: #{tpu_custom_call.1} parent=11 // pred_check
        %p422 = pneg %p327
      $region58: #{tpu_custom_call.1} parent=11 // pred_check_branch
        %424 = sbr.rel (%p422) target = $region60
      $region59: #{tpu_custom_call.1} parent=11 // pred_region
        _
      $region60: #{tpu_custom_call.1} parent=11 // pred_fallthru
        _
      // Predicated region
      $region61: #{tpu_custom_call.1} parent=11 // pred_check
        %p425 = pneg %p348
      $region62: #{tpu_custom_call.1} parent=11 // pred_check_branch
        %427 = sbr.rel (%p425) target = $region64
      $region63: #{tpu_custom_call.1} parent=11 // pred_region
        _
      $region64: #{tpu_custom_call.1} parent=11 // pred_fallthru
        _
    $region12: #{tpu_custom_call.1} parent=5 // pred_fallthru
      _
    %p428 = scmp.lt.s32.totalorder %s23, 2
    // Predicated region
    $region65: #{tpu_custom_call.1} parent=5 // pred_check
      %p429 = pneg %p428
    $region66: #{tpu_custom_call.1} parent=5 // pred_check_branch
      %431 = sbr.rel (%p429) target = $region68
    $region67: #{tpu_custom_call.1} parent=5 // pred_region
      // Predicated region
      $region69: #{tpu_custom_call.1} parent=67 // pred_check
        %p432 = pneg %p43
      $region70: #{tpu_custom_call.1} parent=67 // pred_check_branch
        %434 = sbr.rel (%p432) target = $region72
      $region71: #{tpu_custom_call.1} parent=67 // pred_region
        %p435 = scmp.lt.s32.totalorder %s23, 1
        %s436 = scalar_select %p435, %s23, 1
        %s437 = smul.addr %s436, 16
        %s438 = smul.addr %s437, 8
        %s439 = scalar_lea.vmem %s1, %s438
      $region72: #{tpu_custom_call.1} parent=67 // pred_fallthru
        _
      // Predicated region
      $region73: #{tpu_custom_call.1} parent=67 // pred_check
        %p440 = pneg %p69
      $region74: #{tpu_custom_call.1} parent=67 // pred_check_branch
        %442 = sbr.rel (%p440) target = $region76
      $region75: #{tpu_custom_call.1} parent=67 // pred_region
        %p443 = scmp.lt.s32.totalorder %s23, 1
        %s444 = scalar_select %p443, %s23, 1
        %s445 = smul.addr %s444, 16
        %s446 = smul.addr %s445, 8
        %s447 = scalar_lea.vmem %s2, %s446
      $region76: #{tpu_custom_call.1} parent=67 // pred_fallthru
        _
    $region68: #{tpu_custom_call.1} parent=5 // pred_fallthru
      _
    %p448 = scmp.le.s32.totalorder 1, %s23
    %p449 = scmp.lt.s32.totalorder %s23, 3
    %p450 = pnand %p448, %p449
    %p451 = pneg %p450
    // Predicated region
    $region77: #{tpu_custom_call.1} parent=5 // pred_check
      _
    $region78: #{tpu_custom_call.1} parent=5 // pred_check_branch
      %453 = sbr.rel (%p450) target = $region80
    $region79: #{tpu_custom_call.1} parent=5 // pred_region
      %s454 = ssub.s32 %s23, 1
      %p455 = scmp.lt.s32.totalorder %s28, 1
      %s456 = scalar_select %p455, %s28, 1
      %s457 = smul.addr %s456, 16
      %s458 = smul.addr %s457, 8
      %s459 = scalar_lea.vmem %s1, %s458
      %p460 = pneg %p49
      %p461 = pneg %p46
      %p462 = scmp.lt.s32.totalorder %s28, 1
      %s463 = scalar_select %p462, %s28, 1
      %s464 = smul.addr %s463, 16
      %s465 = smul.addr %s464, 8
      %s466 = scalar_lea.vmem %s2, %s465
      %p467 = pneg %p75
      %p468 = pneg %p72
      %p469 = pneg %p96
      %p470 = pneg %p93
      %p471 = pneg %p117
      %p472 = pneg %p114
      %p473 = pneg %p138
      %p474 = pneg %p135
      %p475 = pneg %p159
      %p476 = pneg %p156
      %p477 = pneg %p180
      %p478 = pneg %p177
      %p479 = pneg %p201
      %p480 = pneg %p198
      %p481 = pneg %p222
      %p482 = pneg %p219
      %p483 = pneg %p243
      %p484 = pneg %p240
      %p485 = pneg %p264
      %p486 = pneg %p261
      %p487 = pneg %p285
      %p488 = pneg %p282
      %p489 = pneg %p306
      %p490 = pneg %p303
      %p491 = pneg %p327
      %p492 = pneg %p324
      %p493 = pneg %p348
      %p494 = pneg %p345
      %p495 = pneg %p374
      %p496 = pneg %p371
      %p497 = scmp.lt.s32.totalorder %s28, 1
      %s498 = scalar_select %p497, %s28, 1
      %s499 = smul.addr %s498, 16
      %s500 = smul.addr %s499, 8
      %s501 = scalar_lea.vmem %s16, %s500
      %p502 = scmp.lt.s32.totalorder %s28, 1
      %s503 = scalar_select %p502, %s28, 1
      %s504 = smul.addr %s503, 16
      %s505 = smul.addr %s504, 8
      %s506 = scalar_lea.vmem %s1, %s505
      %p507 = scmp.lt.s32.totalorder %s28, 1
      %s508 = scalar_select %p507, %s28, 1
      %s509 = smul.addr %s508, 16
      %s510 = smul.addr %s509, 8
      %s511 = scalar_lea.vmem %s2, %s510
      %p512 = scmp.lt.s32.totalorder %s28, 1
      %s513 = scalar_select %p512, %s28, 1
      %s514 = smul.addr %s513, 16
      %s515 = smul.addr %s514, 8
      %s516 = scalar_lea.vmem %s16, %s515
      %v518 = vld [vmem:[%s506] sm:$0xff]
      %v519 = vld [vmem:[%s506 + $0x8] sm:$0xff]
      %v520 = vld [vmem:[%s506 + $0x10] sm:$0xff]
      %v521 = vld [vmem:[%s506 + $0x18] sm:$0xff]
      %v522 = vld [vmem:[%s506 + $0x20] sm:$0xff]
      %v523 = vld [vmem:[%s506 + $0x28] sm:$0xff]
      %v524 = vld [vmem:[%s506 + $0x30] sm:$0xff]
      %v525 = vld [vmem:[%s506 + $0x38] sm:$0xff]
      %v526 = vld [vmem:[%s506 + $0x40] sm:$0xff]
      %v527 = vld [vmem:[%s506 + $0x48] sm:$0xff]
      %v528 = vld [vmem:[%s506 + $0x50] sm:$0xff]
      %v529 = vld [vmem:[%s506 + $0x58] sm:$0xff]
      %v530 = vld [vmem:[%s506 + $0x60] sm:$0xff]
      %v531 = vld [vmem:[%s506 + $0x68] sm:$0xff]
      %v532 = vld [vmem:[%s506 + $0x70] sm:$0xff]
      %v533 = vld [vmem:[%s506 + $0x78] sm:$0xff]
      %v534 = vld [vmem:[%s511] sm:$0xff]
      %v535 = vld [vmem:[%s511 + $0x8] sm:$0xff]
      %v536 = vld [vmem:[%s511 + $0x10] sm:$0xff]
      %v537 = vld [vmem:[%s511 + $0x18] sm:$0xff]
      %v538 = vld [vmem:[%s511 + $0x20] sm:$0xff]
      %v539 = vld [vmem:[%s511 + $0x28] sm:$0xff]
      %v540 = vld [vmem:[%s511 + $0x30] sm:$0xff]
      %v541 = vld [vmem:[%s511 + $0x38] sm:$0xff]
      %v542 = vld [vmem:[%s511 + $0x40] sm:$0xff]
      %v543 = vld [vmem:[%s511 + $0x48] sm:$0xff]
      %v544 = vld [vmem:[%s511 + $0x50] sm:$0xff]
      %v545 = vld [vmem:[%s511 + $0x58] sm:$0xff]
      %v546 = vld [vmem:[%s511 + $0x60] sm:$0xff]
      %v547 = vld [vmem:[%s511 + $0x68] sm:$0xff]
      %v548 = vld [vmem:[%s511 + $0x70] sm:$0xff]
      %v549 = vld [vmem:[%s511 + $0x78] sm:$0xff]
      %v550 = vpack.c.bf16 %v519, %v518
      %v551 = vpack.c.bf16 %v521, %v520
      %v552 = vpack.c.bf16 %v523, %v522
      %v553 = vpack.c.bf16 %v525, %v524
      %v554 = vpack.c.bf16 %v527, %v526
      %v555 = vpack.c.bf16 %v529, %v528
      %v556 = vpack.c.bf16 %v531, %v530
      %v557 = vpack.c.bf16 %v533, %v532
      %v558 = vpack.c.bf16 %v535, %v534
      %v559 = vpack.c.bf16 %v537, %v536
      %v560 = vpack.c.bf16 %v539, %v538
      %v561 = vpack.c.bf16 %v541, %v540
      %v562 = vpack.c.bf16 %v543, %v542
      %v563 = vpack.c.bf16 %v545, %v544
      %v564 = vpack.c.bf16 %v547, %v546
      %v565 = vpack.c.bf16 %v549, %v548
      %s566 = sld [smem:[#allocation3]]
      %v567 = vlaneseq
      %v568 = vand.u32 %v567, 127
      %v569 = vstv %s566
      %vm570 = vcmp.lt.s32.totalorder %v568, %v569
      %v571 = vsel %vm570, 0.0, -1e+30
      %v572 = vld [vmem:[%s3] sm:$0xf]
      %v573 = vld [vmem:[%s3 + $0x4] sm:$0xf]
      %v574 = vld [vmem:[%s3 + $0x8] sm:$0xf]
      %v575 = vld [vmem:[%s3 + $0xc] sm:$0xf]
      %v576 = vld [vmem:[%s10] sm:$0x1]
      %v578 = vlaneseq
      %v579 = vshrl.u32 %v578, 7
      %v580 = vsub.s32 0, %v579
      %v581 = vrot.slane %v576, %v580
      %v587 = vunpack.c.l.b16 %v572
      %v588 = vunpack.c.l.b16 %v573
      %v589 = vunpack.c.l.b16 %v574
      %v590 = vunpack.c.l.b16 %v575
      %v591 = vpack.c.b16 %v588, %v587
      %v592 = vpack.c.b16 %v590, %v589
      %vm595 = vcmask 261120
      %v597 = vsel %vm595, %v550, 0
      %v600 = vsel %vm595, %v551, 0
      %v603 = vsel %vm595, %v552, 0
      %v606 = vsel %vm595, %v553, 0
      %v609 = vsel %vm595, %v554, 0
      %v612 = vsel %vm595, %v555, 0
      %v615 = vsel %vm595, %v556, 0
      %v618 = vsel %vm595, %v557, 0
      %620 = vmatprep.subr.bf16.mxu0 0
      %621 = vmatpush1.bf16.msra.mxu0 %v591
      %622 = vmatprep.subr.bf16.mxu0 0
      %623 = vmatpush1.bf16.msra.mxu0 %v592
      %624 = vmatprep.subr.bf16.mxu0 0
      %625 = vmatpush1.bf16.msra.mxu0 0
      %626 = vmatprep.subr.bf16.mxu0 0
      %627 = vmatpush1.bf16.msra.mxu0 0
      %628 = vmatprep.subr.bf16.mxu0 0
      %629 = vmatpush1.bf16.msra.mxu0 0
      %630 = vmatprep.subr.bf16.mxu0 0
      %631 = vmatpush1.bf16.msra.mxu0 0
      %632 = vmatprep.subr.bf16.mxu0 0
      %633 = vmatpush1.bf16.msra.mxu0 0
      %634 = vmatprep.subr.bf16.mxu0 0
      %635 = vmatpush1.bf16.msra.mxu0 0
      %636 = vmatprep.subr.bf16.mxu0 0
      %637 = vmatpush1.bf16.msra.mxu0 0
      %638 = vmatprep.subr.bf16.mxu0 0
      %639 = vmatpush1.bf16.msra.mxu0 0
      %640 = vmatprep.subr.bf16.mxu0 0
      %641 = vmatpush1.bf16.msra.mxu0 0
      %642 = vmatprep.subr.bf16.mxu0 0
      %643 = vmatpush1.bf16.msra.mxu0 0
      %644 = vmatprep.subr.bf16.mxu0 0
      %645 = vmatpush1.bf16.msra.mxu0 0
      %646 = vmatprep.subr.bf16.mxu0 0
      %647 = vmatpush1.bf16.msra.mxu0 0
      %648 = vmatprep.subr.bf16.mxu0 0
      %649 = vmatpush1.bf16.msra.mxu0 0
      %650 = vmatprep.subr.bf16.mxu0 0
      %651 = vmatpush1.bf16.msra.mxu0 0
      %652 = vmatprep.mubr.bf16.mxu0 0
      %653 = vmatmul.mubr.bf16.gmra.mrb[0].mxu0 %v597
      %v654 = vpop.f32.mrb[0].mxu0
      %v655 = vadd.f32 %v581, %v654
      %v656 = vpop.f32.mrb[0].mxu0
      %v657 = vpop.f32.mrb[0].mxu0
      %v658 = vadd.f32 %v581, %v657
      %v659 = vpop.f32.mrb[0].mxu0
      %660 = vmatprep.mubr.bf16.mxu0 0
      %661 = vmatmul.mubr.bf16.gmra.mrb[0].mxu0 %v600
      %v662 = vpop.f32.mrb[0].mxu0
      %v663 = vadd.f32 %v581, %v662
      %v664 = vpop.f32.mrb[0].mxu0
      %v665 = vpop.f32.mrb[0].mxu0
      %v666 = vadd.f32 %v581, %v665
      %v667 = vpop.f32.mrb[0].mxu0
      %668 = vmatprep.mubr.bf16.mxu0 0
      %669 = vmatmul.mubr.bf16.gmra.mrb[0].mxu0 %v603
      %v670 = vpop.f32.mrb[0].mxu0
      %v671 = vadd.f32 %v581, %v670
      %v672 = vpop.f32.mrb[0].mxu0
      %v673 = vpop.f32.mrb[0].mxu0
      %v674 = vadd.f32 %v581, %v673
      %v675 = vpop.f32.mrb[0].mxu0
      %676 = vmatprep.mubr.bf16.mxu0 0
      %677 = vmatmul.mubr.bf16.gmra.mrb[0].mxu0 %v606
      %v678 = vpop.f32.mrb[0].mxu0
      %v679 = vadd.f32 %v581, %v678
      %v680 = vpop.f32.mrb[0].mxu0
      %v681 = vpop.f32.mrb[0].mxu0
      %v682 = vadd.f32 %v581, %v681
      %v683 = vpop.f32.mrb[0].mxu0
      %684 = vmatprep.mubr.bf16.mxu0 0
      %685 = vmatmul.mubr.bf16.gmra.mrb[0].mxu0 %v609
      %v686 = vpop.f32.mrb[0].mxu0
      %v687 = vadd.f32 %v581, %v686
      %v688 = vpop.f32.mrb[0].mxu0
      %v689 = vpop.f32.mrb[0].mxu0
      %v690 = vadd.f32 %v581, %v689
      %v691 = vpop.f32.mrb[0].mxu0
      %692 = vmatprep.mubr.bf16.mxu0 0
      %693 = vmatmul.mubr.bf16.gmra.mrb[0].mxu0 %v612
      %v694 = vpop.f32.mrb[0].mxu0
      %v695 = vadd.f32 %v581, %v694
      %v696 = vpop.f32.mrb[0].mxu0
      %v697 = vpop.f32.mrb[0].mxu0
      %v698 = vadd.f32 %v581, %v697
      %v699 = vpop.f32.mrb[0].mxu0
      %700 = vmatprep.mubr.bf16.mxu0 0
      %701 = vmatmul.mubr.bf16.gmra.mrb[0].mxu0 %v615
      %v702 = vpop.f32.mrb[0].mxu0
      %v703 = vadd.f32 %v581, %v702
      %v704 = vpop.f32.mrb[0].mxu0
      %v705 = vpop.f32.mrb[0].mxu0
      %v706 = vadd.f32 %v581, %v705
      %v707 = vpop.f32.mrb[0].mxu0
      %708 = vmatprep.mubr.bf16.mxu0 0
      %709 = vmatmul.mubr.bf16.gmra.mrb[0].mxu0 %v618
      %v710 = vpop.f32.mrb[0].mxu0
      %v711 = vadd.f32 %v581, %v710
      %v712 = vpop.f32.mrb[0].mxu0
      %v713 = vpop.f32.mrb[0].mxu0
      %v714 = vadd.f32 %v581, %v713
      %v715 = vpop.f32.mrb[0].mxu0
      %716 = vdwg.mxu0
      %v717 = vld [vmem:[%s4] sm:$0xf]
      %v718 = vld [vmem:[%s4 + $0x4] sm:$0xf]
      %v719 = vld [vmem:[%s4 + $0x8] sm:$0xf]
      %v720 = vld [vmem:[%s4 + $0xc] sm:$0xf]
      %v721 = vld [vmem:[%s11] sm:$0x1]
      %v723 = vlaneseq
      %v724 = vshrl.u32 %v723, 7
      %v725 = vsub.s32 0, %v724
      %v726 = vrot.slane %v721, %v725
      %v732 = vunpack.c.l.b16 %v717
      %v733 = vunpack.c.l.b16 %v718
      %v734 = vunpack.c.l.b16 %v719
      %v735 = vunpack.c.l.b16 %v720
      %v736 = vpack.c.b16 %v733, %v732
      %v737 = vpack.c.b16 %v735, %v734
      %v741 = vsel %vm595, %v558, 0
      %v744 = vsel %vm595, %v559, 0
      %v747 = vsel %vm595, %v560, 0
      %v750 = vsel %vm595, %v561, 0
      %v753 = vsel %vm595, %v562, 0
      %v756 = vsel %vm595, %v563, 0
      %v759 = vsel %vm595, %v564, 0
      %v762 = vsel %vm595, %v565, 0
      %764 = vmatprep.subr.bf16.mxu0 0
      %765 = vmatpush1.bf16.msra.mxu0 %v736
      %766 = vmatprep.subr.bf16.mxu0 0
      %767 = vmatpush1.bf16.msra.mxu0 %v737
      %768 = vmatprep.subr.bf16.mxu0 0
      %769 = vmatpush1.bf16.msra.mxu0 0
      %770 = vmatprep.subr.bf16.mxu0 0
      %771 = vmatpush1.bf16.msra.mxu0 0
      %772 = vmatprep.subr.bf16.mxu0 0
      %773 = vmatpush1.bf16.msra.mxu0 0
      %774 = vmatprep.subr.bf16.mxu0 0
      %775 = vmatpush1.bf16.msra.mxu0 0
      %776 = vmatprep.subr.bf16.mxu0 0
      %777 = vmatpush1.bf16.msra.mxu0 0
      %778 = vmatprep.subr.bf16.mxu0 0
      %779 = vmatpush1.bf16.msra.mxu0 0
      %780 = vmatprep.subr.bf16.mxu0 0
      %781 = vmatpush1.bf16.msra.mxu0 0
      %782 = vmatprep.subr.bf16.mxu0 0
      %783 = vmatpush1.bf16.msra.mxu0 0
      %784 = vmatprep.subr.bf16.mxu0 0
      %785 = vmatpush1.bf16.msra.mxu0 0
      %786 = vmatprep.subr.bf16.mxu0 0
      %787 = vmatpush1.bf16.msra.mxu0 0
      %788 = vmatprep.subr.bf16.mxu0 0
      %789 = vmatpush1.bf16.msra.mxu0 0
      %790 = vmatprep.subr.bf16.mxu0 0
      %791 = vmatpush1.bf16.msra.mxu0 0
      %792 = vmatprep.subr.bf16.mxu0 0
      %793 = vmatpush1.bf16.msra.mxu0 0
      %794 = vmatprep.subr.bf16.mxu0 0
      %795 = vmatpush1.bf16.msra.mxu0 0
      %796 = vmatprep.mubr.bf16.mxu0 0
      %797 = vmatmul.mubr.bf16.gmra.mrb[0].mxu0 %v741
      %v798 = vpop.f32.mrb[0].mxu0
      %v799 = vadd.f32 %v726, %v798
      %v800 = vpop.f32.mrb[0].mxu0
      %v801 = vpop.f32.mrb[0].mxu0
      %v802 = vadd.f32 %v726, %v801
      %v803 = vpop.f32.mrb[0].mxu0
      %804 = vmatprep.mubr.bf16.mxu0 0
      %805 = vmatmul.mubr.bf16.gmra.mrb[0].mxu0 %v744
      %v806 = vpop.f32.mrb[0].mxu0
      %v807 = vadd.f32 %v726, %v806
      %v808 = vpop.f32.mrb[0].mxu0
      %v809 = vpop.f32.mrb[0].mxu0
      %v810 = vadd.f32 %v726, %v809
      %v811 = vpop.f32.mrb[0].mxu0
      %812 = vmatprep.mubr.bf16.mxu0 0
      %813 = vmatmul.mubr.bf16.gmra.mrb[0].mxu0 %v747
      %v814 = vpop.f32.mrb[0].mxu0
      %v815 = vadd.f32 %v726, %v814
      %v816 = vpop.f32.mrb[0].mxu0
      %v817 = vpop.f32.mrb[0].mxu0
      %v818 = vadd.f32 %v726, %v817
      %v819 = vpop.f32.mrb[0].mxu0
      %820 = vmatprep.mubr.bf16.mxu0 0
      %821 = vmatmul.mubr.bf16.gmra.mrb[0].mxu0 %v750
      %v822 = vpop.f32.mrb[0].mxu0
      %v823 = vadd.f32 %v726, %v822
      %v824 = vpop.f32.mrb[0].mxu0
      %v825 = vpop.f32.mrb[0].mxu0
      %v826 = vadd.f32 %v726, %v825
      %v827 = vpop.f32.mrb[0].mxu0
      %828 = vmatprep.mubr.bf16.mxu0 0
      %829 = vmatmul.mubr.bf16.gmra.mrb[0].mxu0 %v753
      %v830 = vpop.f32.mrb[0].mxu0
      %v831 = vadd.f32 %v726, %v830
      %v832 = vpop.f32.mrb[0].mxu0
      %v833 = vpop.f32.mrb[0].mxu0
      %v834 = vadd.f32 %v726, %v833
      %v835 = vpop.f32.mrb[0].mxu0
      %836 = vmatprep.mubr.bf16.mxu0 0
      %837 = vmatmul.mubr.bf16.gmra.mrb[0].mxu0 %v756
      %v838 = vpop.f32.mrb[0].mxu0
      %v839 = vadd.f32 %v726, %v838
      %v840 = vpop.f32.mrb[0].mxu0
      %v841 = vpop.f32.mrb[0].mxu0
      %v842 = vadd.f32 %v726, %v841
      %v843 = vpop.f32.mrb[0].mxu0
      %844 = vmatprep.mubr.bf16.mxu0 0
      %845 = vmatmul.mubr.bf16.gmra.mrb[0].mxu0 %v759
      %v846 = vpop.f32.mrb[0].mxu0
      %v847 = vadd.f32 %v726, %v846
      %v848 = vpop.f32.mrb[0].mxu0
      %v849 = vpop.f32.mrb[0].mxu0
      %v850 = vadd.f32 %v726, %v849
      %v851 = vpop.f32.mrb[0].mxu0
      %852 = vmatprep.mubr.bf16.mxu0 0
      %853 = vmatmul.mubr.bf16.gmra.mrb[0].mxu0 %v762
      %v854 = vpop.f32.mrb[0].mxu0
      %v855 = vadd.f32 %v726, %v854
      %v856 = vpop.f32.mrb[0].mxu0
      %v857 = vpop.f32.mrb[0].mxu0
      %v858 = vadd.f32 %v726, %v857
      %v859 = vpop.f32.mrb[0].mxu0
      %860 = vdwg.mxu0
      %v861 = vld [vmem:[%s5] sm:$0xf]
      %v862 = vld [vmem:[%s5 + $0x4] sm:$0xf]
      %v863 = vld [vmem:[%s5 + $0x8] sm:$0xf]
      %v864 = vld [vmem:[%s5 + $0xc] sm:$0xf]
      %v865 = vld [vmem:[%s12] sm:$0x1]
      %v867 = vlaneseq
      %v868 = vshrl.u32 %v867, 7
      %v869 = vsub.s32 0, %v868
      %v870 = vrot.slane %v865, %v869
      %v876 = vunpack.c.l.b16 %v861
      %v877 = vunpack.c.l.b16 %v862
      %v878 = vunpack.c.l.b16 %v863
      %v879 = vunpack.c.l.b16 %v864
      %v880 = vpack.c.b16 %v877, %v876
      %v881 = vpack.c.b16 %v879, %v878
      %884 = vmatprep.subr.bf16.mxu0 0
      %885 = vmatpush1.bf16.msra.mxu0 %v880
      %886 = vmatprep.subr.bf16.mxu0 0
      %887 = vmatpush1.bf16.msra.mxu0 %v881
      %888 = vmatprep.subr.bf16.mxu0 0
      %889 = vmatpush1.bf16.msra.mxu0 0
      %890 = vmatprep.subr.bf16.mxu0 0
      %891 = vmatpush1.bf16.msra.mxu0 0
      %892 = vmatprep.subr.bf16.mxu0 0
      %893 = vmatpush1.bf16.msra.mxu0 0
      %894 = vmatprep.subr.bf16.mxu0 0
      %895 = vmatpush1.bf16.msra.mxu0 0
      %896 = vmatprep.subr.bf16.mxu0 0
      %897 = vmatpush1.bf16.msra.mxu0 0
      %898 = vmatprep.subr.bf16.mxu0 0
      %899 = vmatpush1.bf16.msra.mxu0 0
      %900 = vmatprep.subr.bf16.mxu0 0
      %901 = vmatpush1.bf16.msra.mxu0 0
      %902 = vmatprep.subr.bf16.mxu0 0
      %903 = vmatpush1.bf16.msra.mxu0 0
      %904 = vmatprep.subr.bf16.mxu0 0
      %905 = vmatpush1.bf16.msra.mxu0 0
      %906 = vmatprep.subr.bf16.mxu0 0
      %907 = vmatpush1.bf16.msra.mxu0 0
      %908 = vmatprep.subr.bf16.mxu0 0
      %909 = vmatpush1.bf16.msra.mxu0 0
      %910 = vmatprep.subr.bf16.mxu0 0
      %911 = vmatpush1.bf16.msra.mxu0 0
      %912 = vmatprep.subr.bf16.mxu0 0
      %913 = vmatpush1.bf16.msra.mxu0 0
      %914 = vmatprep.subr.bf16.mxu0 0
      %915 = vmatpush1.bf16.msra.mxu0 0
      %916 = vmatprep.mubr.bf16.mxu0 0
      %917 = vmatmul.mubr.bf16.gmra.mrb[0].mxu0 %v741
      %v918 = vpop.f32.mrb[0].mxu0
      %v919 = vadd.f32 %v870, %v918
      %v920 = vpop.f32.mrb[0].mxu0
      %v921 = vpop.f32.mrb[0].mxu0
      %v922 = vadd.f32 %v870, %v921
      %v923 = vpop.f32.mrb[0].mxu0
      %924 = vmatprep.mubr.bf16.mxu0 0
      %925 = vmatmul.mubr.bf16.gmra.mrb[0].mxu0 %v744
      %v926 = vpop.f32.mrb[0].mxu0
      %v927 = vadd.f32 %v870, %v926
      %v928 = vpop.f32.mrb[0].mxu0
      %v929 = vpop.f32.mrb[0].mxu0
      %v930 = vadd.f32 %v870, %v929
      %v931 = vpop.f32.mrb[0].mxu0
      %932 = vmatprep.mubr.bf16.mxu0 0
      %933 = vmatmul.mubr.bf16.gmra.mrb[0].mxu0 %v747
      %v934 = vpop.f32.mrb[0].mxu0
      %v935 = vadd.f32 %v870, %v934
      %v936 = vpop.f32.mrb[0].mxu0
      %v937 = vpop.f32.mrb[0].mxu0
      %v938 = vadd.f32 %v870, %v937
      %v939 = vpop.f32.mrb[0].mxu0
      %940 = vmatprep.mubr.bf16.mxu0 0
      %941 = vmatmul.mubr.bf16.gmra.mrb[0].mxu0 %v750
      %v942 = vpop.f32.mrb[0].mxu0
      %v943 = vadd.f32 %v870, %v942
      %v944 = vpop.f32.mrb[0].mxu0
      %v945 = vpop.f32.mrb[0].mxu0
      %v946 = vadd.f32 %v870, %v945
      %v947 = vpop.f32.mrb[0].mxu0
      %948 = vmatprep.mubr.bf16.mxu0 0
      %949 = vmatmul.mubr.bf16.gmra.mrb[0].mxu0 %v753
      %v950 = vpop.f32.mrb[0].mxu0
      %v951 = vadd.f32 %v870, %v950
      %v952 = vpop.f32.mrb[0].mxu0
      %v953 = vpop.f32.mrb[0].mxu0
      %v954 = vadd.f32 %v870, %v953
      %v955 = vpop.f32.mrb[0].mxu0
      %956 = vmatprep.mubr.bf16.mxu0 0
      %957 = vmatmul.mubr.bf16.gmra.mrb[0].mxu0 %v756
      %v958 = vpop.f32.mrb[0].mxu0
      %v959 = vadd.f32 %v870, %v958
      %v960 = vpop.f32.mrb[0].mxu0
      %v961 = vpop.f32.mrb[0].mxu0
      %v962 = vadd.f32 %v870, %v961
      %v963 = vpop.f32.mrb[0].mxu0
      %964 = vmatprep.mubr.bf16.mxu0 0
      %965 = vmatmul.mubr.bf16.gmra.mrb[0].mxu0 %v759
      %v966 = vpop.f32.mrb[0].mxu0
      %v967 = vadd.f32 %v870, %v966
      %v968 = vpop.f32.mrb[0].mxu0
      %v969 = vpop.f32.mrb[0].mxu0
      %v970 = vadd.f32 %v870, %v969
      %v971 = vpop.f32.mrb[0].mxu0
      %972 = vmatprep.mubr.bf16.mxu0 0
      %973 = vmatmul.mubr.bf16.gmra.mrb[0].mxu0 %v762
      %v974 = vpop.f32.mrb[0].mxu0
      %v975 = vadd.f32 %v870, %v974
      %v976 = vpop.f32.mrb[0].mxu0
      %v977 = vpop.f32.mrb[0].mxu0
      %v978 = vadd.f32 %v870, %v977
      %v979 = vpop.f32.mrb[0].mxu0
      %980 = vdwg.mxu0
      %v981 = vmul.f32 %v655, 0.35355338
      %v982 = vmul.f32 %v658, 0.35355338
      %v983 = vmul.f32 %v663, 0.35355338
      %v984 = vmul.f32 %v666, 0.35355338
      %v985 = vmul.f32 %v671, 0.35355338
      %v986 = vmul.f32 %v674, 0.35355338
      %v987 = vmul.f32 %v679, 0.35355338
      %v988 = vmul.f32 %v682, 0.35355338
      %v989 = vmul.f32 %v687, 0.35355338
      %v990 = vmul.f32 %v690, 0.35355338
      %v991 = vmul.f32 %v695, 0.35355338
      %v992 = vmul.f32 %v698, 0.35355338
      %v993 = vmul.f32 %v703, 0.35355338
      %v994 = vmul.f32 %v706, 0.35355338
      %v995 = vmul.f32 %v711, 0.35355338
      %v996 = vmul.f32 %v714, 0.35355338
      %v997 = vpack.c.bf16 %v982, %v981
      %v998 = vpack.c.bf16 %v984, %v983
      %v999 = vpack.c.bf16 %v986, %v985
      %v1000 = vpack.c.bf16 %v988, %v987
      %v1001 = vpack.c.bf16 %v990, %v989
      %v1002 = vpack.c.bf16 %v992, %v991
      %v1003 = vpack.c.bf16 %v994, %v993
      %v1004 = vpack.c.bf16 %v996, %v995
      %v1005 = vpack.c.bf16 %v802, %v799
      %v1006 = vpack.c.bf16 %v810, %v807
      %v1007 = vpack.c.bf16 %v818, %v815
      %v1008 = vpack.c.bf16 %v826, %v823
      %v1009 = vpack.c.bf16 %v834, %v831
      %v1010 = vpack.c.bf16 %v842, %v839
      %v1011 = vpack.c.bf16 %v850, %v847
      %v1012 = vpack.c.bf16 %v858, %v855
      %v1013 = vpack.c.bf16 %v922, %v919
      %v1014 = vpack.c.bf16 %v930, %v927
      %v1015 = vpack.c.bf16 %v938, %v935
      %v1016 = vpack.c.bf16 %v946, %v943
      %v1017 = vpack.c.bf16 %v954, %v951
      %v1018 = vpack.c.bf16 %v962, %v959
      %v1019 = vpack.c.bf16 %v970, %v967
      %v1020 = vpack.c.bf16 %v978, %v975
      %vm1021 = vcmask 64512
      %v1023 = vsel %vm1021, %v997, 0
      %v1026 = vsel %vm1021, %v998, 0
      %v1029 = vsel %vm1021, %v999, 0
      %v1032 = vsel %vm1021, %v1000, 0
      %v1035 = vsel %vm1021, %v1001, 0
      %v1038 = vsel %vm1021, %v1002, 0
      %v1041 = vsel %vm1021, %v1003, 0
      %v1044 = vsel %vm1021, %v1004, 0
      %v1047 = vsel %vm1021, %v1005, 0
      %v1050 = vsel %vm1021, %v1006, 0
      %v1053 = vsel %vm1021, %v1007, 0
      %v1056 = vsel %vm1021, %v1008, 0
      %v1059 = vsel %vm1021, %v1009, 0
      %v1062 = vsel %vm1021, %v1010, 0
      %v1065 = vsel %vm1021, %v1011, 0
      %v1068 = vsel %vm1021, %v1012, 0
      %1070 = vmatprep.subr.bf16.mxu0 0
      %1071 = vmatpush1.bf16.xpose.msra.mxu0 %v1047
      %1072 = vmatprep.subr.bf16.mxu0 0
      %1073 = vmatpush1.bf16.xpose.msra.mxu0 %v1050
      %1074 = vmatprep.subr.bf16.mxu0 0
      %1075 = vmatpush1.bf16.xpose.msra.mxu0 %v1053
      %1076 = vmatprep.subr.bf16.mxu0 0
      %1077 = vmatpush1.bf16.xpose.msra.mxu0 %v1056
      %1078 = vmatprep.subr.bf16.mxu0 0
      %1079 = vmatpush1.bf16.xpose.msra.mxu0 %v1059
      %1080 = vmatprep.subr.bf16.mxu0 0
      %1081 = vmatpush1.bf16.xpose.msra.mxu0 %v1062
      %1082 = vmatprep.subr.bf16.mxu0 0
      %1083 = vmatpush1.bf16.xpose.msra.mxu0 %v1065
      %1084 = vmatprep.subr.bf16.mxu0 0
      %1085 = vmatpush1.bf16.xpose.msra.mxu0 %v1068
      %1086 = vmatprep.subr.bf16.mxu0 0
      %1087 = vmatpush1.bf16.xpose.msra.mxu0 0
      %1088 = vmatprep.subr.bf16.mxu0 0
      %1089 = vmatpush1.bf16.xpose.msra.mxu0 0
      %1090 = vmatprep.subr.bf16.mxu0 0
      %1091 = vmatpush1.bf16.xpose.msra.mxu0 0
      %1092 = vmatprep.subr.bf16.mxu0 0
      %1093 = vmatpush1.bf16.xpose.msra.mxu0 0
      %1094 = vmatprep.subr.bf16.mxu0 0
      %1095 = vmatpush1.bf16.xpose.msra.mxu0 0
      %1096 = vmatprep.subr.bf16.mxu0 0
      %1097 = vmatpush1.bf16.xpose.msra.mxu0 0
      %1098 = vmatprep.subr.bf16.mxu0 0
      %1099 = vmatpush1.bf16.xpose.msra.mxu0 0
      %1100 = vmatprep.subr.bf16.mxu0 0
      %1101 = vmatpush1.bf16.xpose.msra.mxu0 0
      %1102 = vmatprep.mubr.bf16.mxu0 0
      %1103 = vmatmul.mubr.bf16.gmra.mrb[0].mxu0 %v1023
      %v1104 = vpop.f32.mrb[0].mxu0
      %v1105 = vadd.f32 %v571, %v1104
      %v1106 = vpop.f32.mrb[0].mxu0
      %v1107 = vpop.f32.mrb[0].mxu0
      %v1108 = vadd.f32 %v571, %v1107
      %v1109 = vpop.f32.mrb[0].mxu0
      %1110 = vmatprep.mubr.bf16.mxu0 0
      %1111 = vmatmul.mubr.bf16.gmra.mrb[0].mxu0 %v1026
      %v1112 = vpop.f32.mrb[0].mxu0
      %v1113 = vadd.f32 %v571, %v1112
      %v1114 = vpop.f32.mrb[0].mxu0
      %v1115 = vpop.f32.mrb[0].mxu0
      %v1116 = vadd.f32 %v571, %v1115
      %v1117 = vpop.f32.mrb[0].mxu0
      %1118 = vmatprep.mubr.bf16.mxu0 0
      %1119 = vmatmul.mubr.bf16.gmra.mrb[0].mxu0 %v1029
      %v1120 = vpop.f32.mrb[0].mxu0
      %v1121 = vadd.f32 %v571, %v1120
      %v1122 = vpop.f32.mrb[0].mxu0
      %v1123 = vpop.f32.mrb[0].mxu0
      %v1124 = vadd.f32 %v571, %v1123
      %v1125 = vpop.f32.mrb[0].mxu0
      %1126 = vmatprep.mubr.bf16.mxu0 0
      %1127 = vmatmul.mubr.bf16.gmra.mrb[0].mxu0 %v1032
      %v1128 = vpop.f32.mrb[0].mxu0
      %v1129 = vadd.f32 %v571, %v1128
      %v1130 = vpop.f32.mrb[0].mxu0
      %v1131 = vpop.f32.mrb[0].mxu0
      %v1132 = vadd.f32 %v571, %v1131
      %v1133 = vpop.f32.mrb[0].mxu0
      %1134 = vmatprep.mubr.bf16.mxu0 0
      %1135 = vmatmul.mubr.bf16.gmra.mrb[0].mxu0 %v1035
      %v1136 = vpop.f32.mrb[0].mxu0
      %v1137 = vadd.f32 %v571, %v1136
      %v1138 = vpop.f32.mrb[0].mxu0
      %v1139 = vpop.f32.mrb[0].mxu0
      %v1140 = vadd.f32 %v571, %v1139
      %v1141 = vpop.f32.mrb[0].mxu0
      %1142 = vmatprep.mubr.bf16.mxu0 0
      %1143 = vmatmul.mubr.bf16.gmra.mrb[0].mxu0 %v1038
      %v1144 = vpop.f32.mrb[0].mxu0
      %v1145 = vadd.f32 %v571, %v1144
      %v1146 = vpop.f32.mrb[0].mxu0
      %v1147 = vpop.f32.mrb[0].mxu0
      %v1148 = vadd.f32 %v571, %v1147
      %v1149 = vpop.f32.mrb[0].mxu0
      %1150 = vmatprep.mubr.bf16.mxu0 0
      %1151 = vmatmul.mubr.bf16.gmra.mrb[0].mxu0 %v1041
      %v1152 = vpop.f32.mrb[0].mxu0
      %v1153 = vadd.f32 %v571, %v1152
      %v1154 = vpop.f32.mrb[0].mxu0
      %v1155 = vpop.f32.mrb[0].mxu0
      %v1156 = vadd.f32 %v571, %v1155
      %v1157 = vpop.f32.mrb[0].mxu0
      %1158 = vmatprep.mubr.bf16.mxu0 0
      %1159 = vmatmul.mubr.bf16.gmra.mrb[0].mxu0 %v1044
      %v1160 = vpop.f32.mrb[0].mxu0
      %v1161 = vadd.f32 %v571, %v1160
      %v1162 = vpop.f32.mrb[0].mxu0
      %v1163 = vpop.f32.mrb[0].mxu0
      %v1164 = vadd.f32 %v571, %v1163
      %v1165 = vpop.f32.mrb[0].mxu0
      %1166 = vdwg.mxu0
      %1167 = vmax.xlane.f32.xlu0 %v1105
      %v1168 = vpop.xlane.xlu0 %1167
      %1169 = vmax.xlane.f32.xlu0 %v1108
      %v1170 = vpop.xlane.xlu0 %1169
      %1171 = vmax.xlane.f32.xlu0 %v1113
      %v1172 = vpop.xlane.xlu0 %1171
      %1173 = vmax.xlane.f32.xlu0 %v1116
      %v1174 = vpop.xlane.xlu0 %1173
      %1175 = vmax.xlane.f32.xlu0 %v1121
      %v1176 = vpop.xlane.xlu0 %1175
      %1177 = vmax.xlane.f32.xlu0 %v1124
      %v1178 = vpop.xlane.xlu0 %1177
      %1179 = vmax.xlane.f32.xlu0 %v1129
      %v1180 = vpop.xlane.xlu0 %1179
      %1181 = vmax.xlane.f32.xlu0 %v1132
      %v1182 = vpop.xlane.xlu0 %1181
      %1183 = vmax.xlane.f32.xlu0 %v1137
      %v1184 = vpop.xlane.xlu0 %1183
      %1185 = vmax.xlane.f32.xlu0 %v1140
      %v1186 = vpop.xlane.xlu0 %1185
      %1187 = vmax.xlane.f32.xlu0 %v1145
      %v1188 = vpop.xlane.xlu0 %1187
      %1189 = vmax.xlane.f32.xlu0 %v1148
      %v1190 = vpop.xlane.xlu0 %1189
      %1191 = vmax.xlane.f32.xlu0 %v1153
      %v1192 = vpop.xlane.xlu0 %1191
      %1193 = vmax.xlane.f32.xlu0 %v1156
      %v1194 = vpop.xlane.xlu0 %1193
      %1195 = vmax.xlane.f32.xlu0 %v1161
      %v1196 = vpop.xlane.xlu0 %1195
      %1197 = vmax.xlane.f32.xlu0 %v1164
      %v1198 = vpop.xlane.xlu0 %1197
      %v1199 = vsub.f32 %v1105, %v1168
      %v1200 = vsub.f32 %v1108, %v1170
      %v1201 = vsub.f32 %v1113, %v1172
      %v1202 = vsub.f32 %v1116, %v1174
      %v1203 = vsub.f32 %v1121, %v1176
      %v1204 = vsub.f32 %v1124, %v1178
      %v1205 = vsub.f32 %v1129, %v1180
      %v1206 = vsub.f32 %v1132, %v1182
      %v1207 = vsub.f32 %v1137, %v1184
      %v1208 = vsub.f32 %v1140, %v1186
      %v1209 = vsub.f32 %v1145, %v1188
      %v1210 = vsub.f32 %v1148, %v1190
      %v1211 = vsub.f32 %v1153, %v1192
      %v1212 = vsub.f32 %v1156, %v1194
      %v1213 = vsub.f32 %v1161, %v1196
      %v1214 = vsub.f32 %v1164, %v1198
      %v1215 = vmul.f32 %v1199, 1.442695
      %v1216 = vpow.pop %v1215
      %v1217 = vmul.f32 %v1200, 1.442695
      %v1218 = vpow.pop %v1217
      %v1219 = vmul.f32 %v1201, 1.442695
      %v1220 = vpow.pop %v1219
      %v1221 = vmul.f32 %v1202, 1.442695
      %v1222 = vpow.pop %v1221
      %v1223 = vmul.f32 %v1203, 1.442695
      %v1224 = vpow.pop %v1223
      %v1225 = vmul.f32 %v1204, 1.442695
      %v1226 = vpow.pop %v1225
      %v1227 = vmul.f32 %v1205, 1.442695
      %v1228 = vpow.pop %v1227
      %v1229 = vmul.f32 %v1206, 1.442695
      %v1230 = vpow.pop %v1229
      %v1231 = vmul.f32 %v1207, 1.442695
      %v1232 = vpow.pop %v1231
      %v1233 = vmul.f32 %v1208, 1.442695
      %v1234 = vpow.pop %v1233
      %v1235 = vmul.f32 %v1209, 1.442695
      %v1236 = vpow.pop %v1235
      %v1237 = vmul.f32 %v1210, 1.442695
      %v1238 = vpow.pop %v1237
      %v1239 = vmul.f32 %v1211, 1.442695
      %v1240 = vpow.pop %v1239
      %v1241 = vmul.f32 %v1212, 1.442695
      %v1242 = vpow.pop %v1241
      %v1243 = vmul.f32 %v1213, 1.442695
      %v1244 = vpow.pop %v1243
      %v1245 = vmul.f32 %v1214, 1.442695
      %v1246 = vpow.pop %v1245
      %1247 = vadd.xlane.f32.xlu0 %v1216
      %v1248 = vpop.xlane.xlu0 %1247
      %1249 = vadd.xlane.f32.xlu0 %v1218
      %v1250 = vpop.xlane.xlu0 %1249
      %1251 = vadd.xlane.f32.xlu0 %v1220
      %v1252 = vpop.xlane.xlu0 %1251
      %1253 = vadd.xlane.f32.xlu0 %v1222
      %v1254 = vpop.xlane.xlu0 %1253
      %1255 = vadd.xlane.f32.xlu0 %v1224
      %v1256 = vpop.xlane.xlu0 %1255
      %1257 = vadd.xlane.f32.xlu0 %v1226
      %v1258 = vpop.xlane.xlu0 %1257
      %1259 = vadd.xlane.f32.xlu0 %v1228
      %v1260 = vpop.xlane.xlu0 %1259
      %1261 = vadd.xlane.f32.xlu0 %v1230
      %v1262 = vpop.xlane.xlu0 %1261
      %1263 = vadd.xlane.f32.xlu0 %v1232
      %v1264 = vpop.xlane.xlu0 %1263
      %1265 = vadd.xlane.f32.xlu0 %v1234
      %v1266 = vpop.xlane.xlu0 %1265
      %1267 = vadd.xlane.f32.xlu0 %v1236
      %v1268 = vpop.xlane.xlu0 %1267
      %1269 = vadd.xlane.f32.xlu0 %v1238
      %v1270 = vpop.xlane.xlu0 %1269
      %1271 = vadd.xlane.f32.xlu0 %v1240
      %v1272 = vpop.xlane.xlu0 %1271
      %1273 = vadd.xlane.f32.xlu0 %v1242
      %v1274 = vpop.xlane.xlu0 %1273
      %1275 = vadd.xlane.f32.xlu0 %v1244
      %v1276 = vpop.xlane.xlu0 %1275
      %1277 = vadd.xlane.f32.xlu0 %v1246
      %v1278 = vpop.xlane.xlu0 %1277
      %v1279 = vpack.c.bf16 %v1218, %v1216
      %v1280 = vpack.c.bf16 %v1222, %v1220
      %v1281 = vpack.c.bf16 %v1226, %v1224
      %v1282 = vpack.c.bf16 %v1230, %v1228
      %v1283 = vpack.c.bf16 %v1234, %v1232
      %v1284 = vpack.c.bf16 %v1238, %v1236
      %v1285 = vpack.c.bf16 %v1242, %v1240
      %v1286 = vpack.c.bf16 %v1246, %v1244
      %1287 = vmatprep.subr.bf16.mxu0 0
      %1288 = vmatpush1.bf16.msra.mxu0 %v1013
      %1289 = vmatprep.subr.bf16.mxu0 0
      %1290 = vmatpush1.bf16.msra.mxu0 %v1014
      %1291 = vmatprep.subr.bf16.mxu0 0
      %1292 = vmatpush1.bf16.msra.mxu0 %v1015
      %1293 = vmatprep.subr.bf16.mxu0 0
      %1294 = vmatpush1.bf16.msra.mxu0 %v1016
      %1295 = vmatprep.subr.bf16.mxu0 0
      %1296 = vmatpush1.bf16.msra.mxu0 %v1017
      %1297 = vmatprep.subr.bf16.mxu0 0
      %1298 = vmatpush1.bf16.msra.mxu0 %v1018
      %1299 = vmatprep.subr.bf16.mxu0 0
      %1300 = vmatpush1.bf16.msra.mxu0 %v1019
      %1301 = vmatprep.subr.bf16.mxu0 0
      %1302 = vmatpush1.bf16.msra.mxu0 %v1020
      %1303 = vmatprep.subr.bf16.mxu0 0
      %1304 = vmatpush1.bf16.msra.mxu0 0
      %1305 = vmatprep.subr.bf16.mxu0 0
      %1306 = vmatpush1.bf16.msra.mxu0 0
      %1307 = vmatprep.subr.bf16.mxu0 0
      %1308 = vmatpush1.bf16.msra.mxu0 0
      %1309 = vmatprep.subr.bf16.mxu0 0
      %1310 = vmatpush1.bf16.msra.mxu0 0
      %1311 = vmatprep.subr.bf16.mxu0 0
      %1312 = vmatpush1.bf16.msra.mxu0 0
      %1313 = vmatprep.subr.bf16.mxu0 0
      %1314 = vmatpush1.bf16.msra.mxu0 0
      %1315 = vmatprep.subr.bf16.mxu0 0
      %1316 = vmatpush1.bf16.msra.mxu0 0
      %1317 = vmatprep.subr.bf16.mxu0 0
      %1318 = vmatpush1.bf16.msra.mxu0 0
      %1319 = vmatprep.mubr.bf16.mxu0 0
      %1320 = vmatmul.mubr.bf16.gmra.mrb[0].mxu0 %v1279
      %v1321 = vpop.f32.mrb[0].mxu0
      %v1322 = vadd.f32 0.0, %v1321
      %v1323 = vpop.f32.mrb[0].mxu0
      %v1324 = vpop.f32.mrb[0].mxu0
      %v1325 = vadd.f32 0.0, %v1324
      %v1326 = vpop.f32.mrb[0].mxu0
      %1327 = vmatprep.mubr.bf16.mxu0 0
      %1328 = vmatmul.mubr.bf16.gmra.mrb[0].mxu0 %v1280
      %v1329 = vpop.f32.mrb[0].mxu0
      %v1330 = vadd.f32 0.0, %v1329
      %v1331 = vpop.f32.mrb[0].mxu0
      %v1332 = vpop.f32.mrb[0].mxu0
      %v1333 = vadd.f32 0.0, %v1332
      %v1334 = vpop.f32.mrb[0].mxu0
      %1335 = vmatprep.mubr.bf16.mxu0 0
      %1336 = vmatmul.mubr.bf16.gmra.mrb[0].mxu0 %v1281
      %v1337 = vpop.f32.mrb[0].mxu0
      %v1338 = vadd.f32 0.0, %v1337
      %v1339 = vpop.f32.mrb[0].mxu0
      %v1340 = vpop.f32.mrb[0].mxu0
      %v1341 = vadd.f32 0.0, %v1340
      %v1342 = vpop.f32.mrb[0].mxu0
      %1343 = vmatprep.mubr.bf16.mxu0 0
      %1344 = vmatmul.mubr.bf16.gmra.mrb[0].mxu0 %v1282
      %v1345 = vpop.f32.mrb[0].mxu0
      %v1346 = vadd.f32 0.0, %v1345
      %v1347 = vpop.f32.mrb[0].mxu0
      %v1348 = vpop.f32.mrb[0].mxu0
      %v1349 = vadd.f32 0.0, %v1348
      %v1350 = vpop.f32.mrb[0].mxu0
      %1351 = vmatprep.mubr.bf16.mxu0 0
      %1352 = vmatmul.mubr.bf16.gmra.mrb[0].mxu0 %v1283
      %v1353 = vpop.f32.mrb[0].mxu0
      %v1354 = vadd.f32 0.0, %v1353
      %v1355 = vpop.f32.mrb[0].mxu0
      %v1356 = vpop.f32.mrb[0].mxu0
      %v1357 = vadd.f32 0.0, %v1356
      %v1358 = vpop.f32.mrb[0].mxu0
      %1359 = vmatprep.mubr.bf16.mxu0 0
      %1360 = vmatmul.mubr.bf16.gmra.mrb[0].mxu0 %v1284
      %v1361 = vpop.f32.mrb[0].mxu0
      %v1362 = vadd.f32 0.0, %v1361
      %v1363 = vpop.f32.mrb[0].mxu0
      %v1364 = vpop.f32.mrb[0].mxu0
      %v1365 = vadd.f32 0.0, %v1364
      %v1366 = vpop.f32.mrb[0].mxu0
      %1367 = vmatprep.mubr.bf16.mxu0 0
      %1368 = vmatmul.mubr.bf16.gmra.mrb[0].mxu0 %v1285
      %v1369 = vpop.f32.mrb[0].mxu0
      %v1370 = vadd.f32 0.0, %v1369
      %v1371 = vpop.f32.mrb[0].mxu0
      %v1372 = vpop.f32.mrb[0].mxu0
      %v1373 = vadd.f32 0.0, %v1372
      %v1374 = vpop.f32.mrb[0].mxu0
      %1375 = vmatprep.mubr.bf16.mxu0 0
      %1376 = vmatmul.mubr.bf16.gmra.mrb[0].mxu0 %v1286
      %v1377 = vpop.f32.mrb[0].mxu0
      %v1378 = vadd.f32 0.0, %v1377
      %v1379 = vpop.f32.mrb[0].mxu0
      %v1380 = vpop.f32.mrb[0].mxu0
      %v1381 = vadd.f32 0.0, %v1380
      %v1382 = vpop.f32.mrb[0].mxu0
      %1383 = vdwg.mxu0
      %v1384 = vrcp.pop %v1248
      %v1385 = vrcp.pop %v1250
      %v1386 = vrcp.pop %v1252
      %v1387 = vrcp.pop %v1254
      %v1388 = vrcp.pop %v1256
      %v1389 = vrcp.pop %v1258
      %v1390 = vrcp.pop %v1260
      %v1391 = vrcp.pop %v1262
      %v1392 = vrcp.pop %v1264
      %v1393 = vrcp.pop %v1266
      %v1394 = vrcp.pop %v1268
      %v1395 = vrcp.pop %v1270
      %v1396 = vrcp.pop %v1272
      %v1397 = vrcp.pop %v1274
      %v1398 = vrcp.pop %v1276
      %v1399 = vrcp.pop %v1278
      %v1400 = vmul.f32 %v1322, %v1384
      %v1401 = vmul.f32 %v1325, %v1385
      %v1402 = vmul.f32 %v1330, %v1386
      %v1403 = vmul.f32 %v1333, %v1387
      %v1404 = vmul.f32 %v1338, %v1388
      %v1405 = vmul.f32 %v1341, %v1389
      %v1406 = vmul.f32 %v1346, %v1390
      %v1407 = vmul.f32 %v1349, %v1391
      %v1408 = vmul.f32 %v1354, %v1392
      %v1409 = vmul.f32 %v1357, %v1393
      %v1410 = vmul.f32 %v1362, %v1394
      %v1411 = vmul.f32 %v1365, %v1395
      %v1412 = vmul.f32 %v1370, %v1396
      %v1413 = vmul.f32 %v1373, %v1397
      %v1414 = vmul.f32 %v1378, %v1398
      %v1415 = vmul.f32 %v1381, %v1399
      %v1416 = vpack.c.bf16 %v1401, %v1400
      %v1417 = vpack.c.bf16 %v1403, %v1402
      %v1418 = vpack.c.bf16 %v1405, %v1404
      %v1419 = vpack.c.bf16 %v1407, %v1406
      %v1420 = vpack.c.bf16 %v1409, %v1408
      %v1421 = vpack.c.bf16 %v1411, %v1410
      %v1422 = vpack.c.bf16 %v1413, %v1412
      %v1423 = vpack.c.bf16 %v1415, %v1414
      %v1424 = vld [vmem:[%s6] sm:$0xf]
      %s1425 = scalar_lea.vmem %s3, 16
      %v1426 = vld [vmem:[%s1425] sm:$0xf]
      %v1427 = vld [vmem:[%s1425 + $0x4] sm:$0xf]
      %v1428 = vld [vmem:[%s1425 + $0x8] sm:$0xf]
      %v1429 = vld [vmem:[%s1425 + $0xc] sm:$0xf]
      %s1430 = scalar_lea.vmem %s10, 1
      %v1431 = vld [vmem:[%s1430] sm:$0x1]
      %v1433 = vlaneseq
      %v1434 = vshrl.u32 %v1433, 7
      %v1435 = vsub.s32 0, %v1434
      %v1436 = vrot.slane %v1431, %v1435
      %v1442 = vunpack.c.l.b16 %v1426
      %v1443 = vunpack.c.l.b16 %v1427
      %v1444 = vunpack.c.l.b16 %v1428
      %v1445 = vunpack.c.l.b16 %v1429
      %v1446 = vpack.c.b16 %v1443, %v1442
      %v1447 = vpack.c.b16 %v1445, %v1444
      %1450 = vmatprep.subr.bf16.mxu0 0
      %1451 = vmatpush1.bf16.msra.mxu0 %v1446
      %1452 = vmatprep.subr.bf16.mxu0 0
      %1453 = vmatpush1.bf16.msra.mxu0 %v1447
      %1454 = vmatprep.subr.bf16.mxu0 0
      %1455 = vmatpush1.bf16.msra.mxu0 0
      %1456 = vmatprep.subr.bf16.mxu0 0
      %1457 = vmatpush1.bf16.msra.mxu0 0
      %1458 = vmatprep.subr.bf16.mxu0 0
      %1459 = vmatpush1.bf16.msra.mxu0 0
      %1460 = vmatprep.subr.bf16.mxu0 0
      %1461 = vmatpush1.bf16.msra.mxu0 0
      %1462 = vmatprep.subr.bf16.mxu0 0
      %1463 = vmatpush1.bf16.msra.mxu0 0
      %1464 = vmatprep.subr.bf16.mxu0 0
      %1465 = vmatpush1.bf16.msra.mxu0 0
      %1466 = vmatprep.subr.bf16.mxu0 0
      %1467 = vmatpush1.bf16.msra.mxu0 0
      %1468 = vmatprep.subr.bf16.mxu0 0
      %1469 = vmatpush1.bf16.msra.mxu0 0
      %1470 = vmatprep.subr.bf16.mxu0 0
      %1471 = vmatpush1.bf16.msra.mxu0 0
      %1472 = vmatprep.subr.bf16.mxu0 0
      %1473 = vmatpush1.bf16.msra.mxu0 0
      %1474 = vmatprep.subr.bf16.mxu0 0
      %1475 = vmatpush1.bf16.msra.mxu0 0
      %1476 = vmatprep.subr.bf16.mxu0 0
      %1477 = vmatpush1.bf16.msra.mxu0 0
      %1478 = vmatprep.subr.bf16.mxu0 0
      %1479 = vmatpush1.bf16.msra.mxu0 0
      %1480 = vmatprep.subr.bf16.mxu0 0
      %1481 = vmatpush1.bf16.msra.mxu0 0
      %1482 = vmatprep.mubr.bf16.mxu0 0
      %1483 = vmatmul.mubr.bf16.gmra.mrb[0].mxu0 %v597
      %v1484 = vpop.f32.mrb[0].mxu0
      %v1485 = vadd.f32 %v1436, %v1484
      %v1486 = vpop.f32.mrb[0].mxu0
      %v1487 = vpop.f32.mrb[0].mxu0
      %v1488 = vadd.f32 %v1436, %v1487
      %v1489 = vpop.f32.mrb[0].mxu0
      %1490 = vmatprep.mubr.bf16.mxu0 0
      %1491 = vmatmul.mubr.bf16.gmra.mrb[0].mxu0 %v600
      %v1492 = vpop.f32.mrb[0].mxu0
      %v1493 = vadd.f32 %v1436, %v1492
      %v1494 = vpop.f32.mrb[0].mxu0
      %v1495 = vpop.f32.mrb[0].mxu0
      %v1496 = vadd.f32 %v1436, %v1495
      %v1497 = vpop.f32.mrb[0].mxu0
      %1498 = vmatprep.mubr.bf16.mxu0 0
      %1499 = vmatmul.mubr.bf16.gmra.mrb[0].mxu0 %v603
      %v1500 = vpop.f32.mrb[0].mxu0
      %v1501 = vadd.f32 %v1436, %v1500
      %v1502 = vpop.f32.mrb[0].mxu0
      %v1503 = vpop.f32.mrb[0].mxu0
      %v1504 = vadd.f32 %v1436, %v1503
      %v1505 = vpop.f32.mrb[0].mxu0
      %1506 = vmatprep.mubr.bf16.mxu0 0
      %1507 = vmatmul.mubr.bf16.gmra.mrb[0].mxu0 %v606
      %v1508 = vpop.f32.mrb[0].mxu0
      %v1509 = vadd.f32 %v1436, %v1508
      %v1510 = vpop.f32.mrb[0].mxu0
      %v1511 = vpop.f32.mrb[0].mxu0
      %v1512 = vadd.f32 %v1436, %v1511
      %v1513 = vpop.f32.mrb[0].mxu0
      %1514 = vmatprep.mubr.bf16.mxu0 0
      %1515 = vmatmul.mubr.bf16.gmra.mrb[0].mxu0 %v609
      %v1516 = vpop.f32.mrb[0].mxu0
      %v1517 = vadd.f32 %v1436, %v1516
      %v1518 = vpop.f32.mrb[0].mxu0
      %v1519 = vpop.f32.mrb[0].mxu0
      %v1520 = vadd.f32 %v1436, %v1519
      %v1521 = vpop.f32.mrb[0].mxu0
      %1522 = vmatprep.mubr.bf16.mxu0 0
      %1523 = vmatmul.mubr.bf16.gmra.mrb[0].mxu0 %v612
      %v1524 = vpop.f32.mrb[0].mxu0
      %v1525 = vadd.f32 %v1436, %v1524
      %v1526 = vpop.f32.mrb[0].mxu0
      %v1527 = vpop.f32.mrb[0].mxu0
      %v1528 = vadd.f32 %v1436, %v1527
      %v1529 = vpop.f32.mrb[0].mxu0
      %1530 = vmatprep.mubr.bf16.mxu0 0
      %1531 = vmatmul.mubr.bf16.gmra.mrb[0].mxu0 %v615
      %v1532 = vpop.f32.mrb[0].mxu0
      %v1533 = vadd.f32 %v1436, %v1532
      %v1534 = vpop.f32.mrb[0].mxu0
      %v1535 = vpop.f32.mrb[0].mxu0
      %v1536 = vadd.f32 %v1436, %v1535
      %v1537 = vpop.f32.mrb[0].mxu0
      %1538 = vmatprep.mubr.bf16.mxu0 0
      %1539 = vmatmul.mubr.bf16.gmra.mrb[0].mxu0 %v618
      %v1540 = vpop.f32.mrb[0].mxu0
      %v1541 = vadd.f32 %v1436, %v1540
      %v1542 = vpop.f32.mrb[0].mxu0
      %v1543 = vpop.f32.mrb[0].mxu0
      %v1544 = vadd.f32 %v1436, %v1543
      %v1545 = vpop.f32.mrb[0].mxu0
      %1546 = vdwg.mxu0
      %s1547 = scalar_lea.vmem %s4, 16
      %v1548 = vld [vmem:[%s1547] sm:$0xf]
      %v1549 = vld [vmem:[%s1547 + $0x4] sm:$0xf]
      %v1550 = vld [vmem:[%s1547 + $0x8] sm:$0xf]
      %v1551 = vld [vmem:[%s1547 + $0xc] sm:$0xf]
      %s1552 = scalar_lea.vmem %s11, 1
      %v1553 = vld [vmem:[%s1552] sm:$0x1]
      %v1555 = vlaneseq
      %v1556 = vshrl.u32 %v1555, 7
      %v1557 = vsub.s32 0, %v1556
      %v1558 = vrot.slane %v1553, %v1557
      %v1564 = vunpack.c.l.b16 %v1548
      %v1565 = vunpack.c.l.b16 %v1549
      %v1566 = vunpack.c.l.b16 %v1550
      %v1567 = vunpack.c.l.b16 %v1551
      %v1568 = vpack.c.b16 %v1565, %v1564
      %v1569 = vpack.c.b16 %v1567, %v1566
      %1572 = vmatprep.subr.bf16.mxu0 0
      %1573 = vmatpush1.bf16.msra.mxu0 %v1568
      %1574 = vmatprep.subr.bf16.mxu0 0
      %1575 = vmatpush1.bf16.msra.mxu0 %v1569
      %1576 = vmatprep.subr.bf16.mxu0 0
      %1577 = vmatpush1.bf16.msra.mxu0 0
      %1578 = vmatprep.subr.bf16.mxu0 0
      %1579 = vmatpush1.bf16.msra.mxu0 0
      %1580 = vmatprep.subr.bf16.mxu0 0
      %1581 = vmatpush1.bf16.msra.mxu0 0
      %1582 = vmatprep.subr.bf16.mxu0 0
      %1583 = vmatpush1.bf16.msra.mxu0 0
      %1584 = vmatprep.subr.bf16.mxu0 0
      %1585 = vmatpush1.bf16.msra.mxu0 0
      %1586 = vmatprep.subr.bf16.mxu0 0
      %1587 = vmatpush1.bf16.msra.mxu0 0
      %1588 = vmatprep.subr.bf16.mxu0 0
      %1589 = vmatpush1.bf16.msra.mxu0 0
      %1590 = vmatprep.subr.bf16.mxu0 0
      %1591 = vmatpush1.bf16.msra.mxu0 0
      %1592 = vmatprep.subr.bf16.mxu0 0
      %1593 = vmatpush1.bf16.msra.mxu0 0
      %1594 = vmatprep.subr.bf16.mxu0 0
      %1595 = vmatpush1.bf16.msra.mxu0 0
      %1596 = vmatprep.subr.bf16.mxu0 0
      %1597 = vmatpush1.bf16.msra.mxu0 0
      %1598 = vmatprep.subr.bf16.mxu0 0
      %1599 = vmatpush1.bf16.msra.mxu0 0
      %1600 = vmatprep.subr.bf16.mxu0 0
      %1601 = vmatpush1.bf16.msra.mxu0 0
      %1602 = vmatprep.subr.bf16.mxu0 0
      %1603 = vmatpush1.bf16.msra.mxu0 0
      %1604 = vmatprep.mubr.bf16.mxu0 0
      %1605 = vmatmul.mubr.bf16.gmra.mrb[0].mxu0 %v741
      %v1606 = vpop.f32.mrb[0].mxu0
      %v1607 = vadd.f32 %v1558, %v1606
      %v1608 = vpop.f32.mrb[0].mxu0
      %v1609 = vpop.f32.mrb[0].mxu0
      %v1610 = vadd.f32 %v1558, %v1609
      %v1611 = vpop.f32.mrb[0].mxu0
      %1612 = vmatprep.mubr.bf16.mxu0 0
      %1613 = vmatmul.mubr.bf16.gmra.mrb[0].mxu0 %v744
      %v1614 = vpop.f32.mrb[0].mxu0
      %v1615 = vadd.f32 %v1558, %v1614
      %v1616 = vpop.f32.mrb[0].mxu0
      %v1617 = vpop.f32.mrb[0].mxu0
      %v1618 = vadd.f32 %v1558, %v1617
      %v1619 = vpop.f32.mrb[0].mxu0
      %1620 = vmatprep.mubr.bf16.mxu0 0
      %1621 = vmatmul.mubr.bf16.gmra.mrb[0].mxu0 %v747
      %v1622 = vpop.f32.mrb[0].mxu0
      %v1623 = vadd.f32 %v1558, %v1622
      %v1624 = vpop.f32.mrb[0].mxu0
      %v1625 = vpop.f32.mrb[0].mxu0
      %v1626 = vadd.f32 %v1558, %v1625
      %v1627 = vpop.f32.mrb[0].mxu0
      %1628 = vmatprep.mubr.bf16.mxu0 0
      %1629 = vmatmul.mubr.bf16.gmra.mrb[0].mxu0 %v750
      %v1630 = vpop.f32.mrb[0].mxu0
      %v1631 = vadd.f32 %v1558, %v1630
      %v1632 = vpop.f32.mrb[0].mxu0
      %v1633 = vpop.f32.mrb[0].mxu0
      %v1634 = vadd.f32 %v1558, %v1633
      %v1635 = vpop.f32.mrb[0].mxu0
      %1636 = vmatprep.mubr.bf16.mxu0 0
      %1637 = vmatmul.mubr.bf16.gmra.mrb[0].mxu0 %v753
      %v1638 = vpop.f32.mrb[0].mxu0
      %v1639 = vadd.f32 %v1558, %v1638
      %v1640 = vpop.f32.mrb[0].mxu0
      %v1641 = vpop.f32.mrb[0].mxu0
      %v1642 = vadd.f32 %v1558, %v1641
      %v1643 = vpop.f32.mrb[0].mxu0
      %1644 = vmatprep.mubr.bf16.mxu0 0
      %1645 = vmatmul.mubr.bf16.gmra.mrb[0].mxu0 %v756
      %v1646 = vpop.f32.mrb[0].mxu0
      %v1647 = vadd.f32 %v1558, %v1646
      %v1648 = vpop.f32.mrb[0].mxu0
      %v1649 = vpop.f32.mrb[0].mxu0
      %v1650 = vadd.f32 %v1558, %v1649
      %v1651 = vpop.f32.mrb[0].mxu0
      %1652 = vmatprep.mubr.bf16.mxu0 0
      %1653 = vmatmul.mubr.bf16.gmra.mrb[0].mxu0 %v759
      %v1654 = vpop.f32.mrb[0].mxu0
      %v1655 = vadd.f32 %v1558, %v1654
      %v1656 = vpop.f32.mrb[0].mxu0
      %v1657 = vpop.f32.mrb[0].mxu0
      %v1658 = vadd.f32 %v1558, %v1657
      %v1659 = vpop.f32.mrb[0].mxu0
      %1660 = vmatprep.mubr.bf16.mxu0 0
      %1661 = vmatmul.mubr.bf16.gmra.mrb[0].mxu0 %v762
      %v1662 = vpop.f32.mrb[0].mxu0
      %v1663 = vadd.f32 %v1558, %v1662
      %v1664 = vpop.f32.mrb[0].mxu0
      %v1665 = vpop.f32.mrb[0].mxu0
      %v1666 = vadd.f32 %v1558, %v1665
      %v1667 = vpop.f32.mrb[0].mxu0
      %1668 = vdwg.mxu0
      %s1669 = scalar_lea.vmem %s5, 16
      %v1670 = vld [vmem:[%s1669] sm:$0xf]
      %v1671 = vld [vmem:[%s1669 + $0x4] sm:$0xf]
      %v1672 = vld [vmem:[%s1669 + $0x8] sm:$0xf]
      %v1673 = vld [vmem:[%s1669 + $0xc] sm:$0xf]
      %s1674 = scalar_lea.vmem %s12, 1
      %v1675 = vld [vmem:[%s1674] sm:$0x1]
      %v1677 = vlaneseq
      %v1678 = vshrl.u32 %v1677, 7
      %v1679 = vsub.s32 0, %v1678
      %v1680 = vrot.slane %v1675, %v1679
      %v1686 = vunpack.c.l.b16 %v1670
      %v1687 = vunpack.c.l.b16 %v1671
      %v1688 = vunpack.c.l.b16 %v1672
      %v1689 = vunpack.c.l.b16 %v1673
      %v1690 = vpack.c.b16 %v1687, %v1686
      %v1691 = vpack.c.b16 %v1689, %v1688
      %1694 = vmatprep.subr.bf16.mxu0 0
      %1695 = vmatpush1.bf16.msra.mxu0 %v1690
      %1696 = vmatprep.subr.bf16.mxu0 0
      %1697 = vmatpush1.bf16.msra.mxu0 %v1691
      %1698 = vmatprep.subr.bf16.mxu0 0
      %1699 = vmatpush1.bf16.msra.mxu0 0
      %1700 = vmatprep.subr.bf16.mxu0 0
      %1701 = vmatpush1.bf16.msra.mxu0 0
      %1702 = vmatprep.subr.bf16.mxu0 0
      %1703 = vmatpush1.bf16.msra.mxu0 0
      %1704 = vmatprep.subr.bf16.mxu0 0
      %1705 = vmatpush1.bf16.msra.mxu0 0
      %1706 = vmatprep.subr.bf16.mxu0 0
      %1707 = vmatpush1.bf16.msra.mxu0 0
      %1708 = vmatprep.subr.bf16.mxu0 0
      %1709 = vmatpush1.bf16.msra.mxu0 0
      %1710 = vmatprep.subr.bf16.mxu0 0
      %1711 = vmatpush1.bf16.msra.mxu0 0
      %1712 = vmatprep.subr.bf16.mxu0 0
      %1713 = vmatpush1.bf16.msra.mxu0 0
      %1714 = vmatprep.subr.bf16.mxu0 0
      %1715 = vmatpush1.bf16.msra.mxu0 0
      %1716 = vmatprep.subr.bf16.mxu0 0
      %1717 = vmatpush1.bf16.msra.mxu0 0
      %1718 = vmatprep.subr.bf16.mxu0 0
      %1719 = vmatpush1.bf16.msra.mxu0 0
      %1720 = vmatprep.subr.bf16.mxu0 0
      %1721 = vmatpush1.bf16.msra.mxu0 0
      %1722 = vmatprep.subr.bf16.mxu0 0
      %1723 = vmatpush1.bf16.msra.mxu0 0
      %1724 = vmatprep.subr.bf16.mxu0 0
      %1725 = vmatpush1.bf16.msra.mxu0 0
      %1726 = vmatprep.mubr.bf16.mxu0 0
      %1727 = vmatmul.mubr.bf16.gmra.mrb[0].mxu0 %v741
      %v1728 = vpop.f32.mrb[0].mxu0
      %v1729 = vadd.f32 %v1680, %v1728
      %v1730 = vpop.f32.mrb[0].mxu0
      %v1731 = vpop.f32.mrb[0].mxu0
      %v1732 = vadd.f32 %v1680, %v1731
      %v1733 = vpop.f32.mrb[0].mxu0
      %1734 = vmatprep.mubr.bf16.mxu0 0
      %1735 = vmatmul.mubr.bf16.gmra.mrb[0].mxu0 %v744
      %v1736 = vpop.f32.mrb[0].mxu0
      %v1737 = vadd.f32 %v1680, %v1736
      %v1738 = vpop.f32.mrb[0].mxu0
      %v1739 = vpop.f32.mrb[0].mxu0
      %v1740 = vadd.f32 %v1680, %v1739
      %v1741 = vpop.f32.mrb[0].mxu0
      %1742 = vmatprep.mubr.bf16.mxu0 0
      %1743 = vmatmul.mubr.bf16.gmra.mrb[0].mxu0 %v747
      %v1744 = vpop.f32.mrb[0].mxu0
      %v1745 = vadd.f32 %v1680, %v1744
      %v1746 = vpop.f32.mrb[0].mxu0
      %v1747 = vpop.f32.mrb[0].mxu0
      %v1748 = vadd.f32 %v1680, %v1747
      %v1749 = vpop.f32.mrb[0].mxu0
      %1750 = vmatprep.mubr.bf16.mxu0 0
      %1751 = vmatmul.mubr.bf16.gmra.mrb[0].mxu0 %v750
      %v1752 = vpop.f32.mrb[0].mxu0
      %v1753 = vadd.f32 %v1680, %v1752
      %v1754 = vpop.f32.mrb[0].mxu0
      %v1755 = vpop.f32.mrb[0].mxu0
      %v1756 = vadd.f32 %v1680, %v1755
      %v1757 = vpop.f32.mrb[0].mxu0
      %1758 = vmatprep.mubr.bf16.mxu0 0
      %1759 = vmatmul.mubr.bf16.gmra.mrb[0].mxu0 %v753
      %v1760 = vpop.f32.mrb[0].mxu0
      %v1761 = vadd.f32 %v1680, %v1760
      %v1762 = vpop.f32.mrb[0].mxu0
      %v1763 = vpop.f32.mrb[0].mxu0
      %v1764 = vadd.f32 %v1680, %v1763
      %v1765 = vpop.f32.mrb[0].mxu0
      %1766 = vmatprep.mubr.bf16.mxu0 0
      %1767 = vmatmul.mubr.bf16.gmra.mrb[0].mxu0 %v756
      %v1768 = vpop.f32.mrb[0].mxu0
      %v1769 = vadd.f32 %v1680, %v1768
      %v1770 = vpop.f32.mrb[0].mxu0
      %v1771 = vpop.f32.mrb[0].mxu0
      %v1772 = vadd.f32 %v1680, %v1771
      %v1773 = vpop.f32.mrb[0].mxu0
      %1774 = vmatprep.mubr.bf16.mxu0 0
      %1775 = vmatmul.mubr.bf16.gmra.mrb[0].mxu0 %v759
      %v1776 = vpop.f32.mrb[0].mxu0
      %v1777 = vadd.f32 %v1680, %v1776
      %v1778 = vpop.f32.mrb[0].mxu0
      %v1779 = vpop.f32.mrb[0].mxu0
      %v1780 = vadd.f32 %v1680, %v1779
      %v1781 = vpop.f32.mrb[0].mxu0
      %1782 = vmatprep.mubr.bf16.mxu0 0
      %1783 = vmatmul.mubr.bf16.gmra.mrb[0].mxu0 %v762
      %v1784 = vpop.f32.mrb[0].mxu0
      %v1785 = vadd.f32 %v1680, %v1784
      %v1786 = vpop.f32.mrb[0].mxu0
      %v1787 = vpop.f32.mrb[0].mxu0
      %v1788 = vadd.f32 %v1680, %v1787
      %v1789 = vpop.f32.mrb[0].mxu0
      %1790 = vdwg.mxu0
      %v1791 = vmul.f32 %v1485, 0.35355338
      %v1792 = vmul.f32 %v1488, 0.35355338
      %v1793 = vmul.f32 %v1493, 0.35355338
      %v1794 = vmul.f32 %v1496, 0.35355338
      %v1795 = vmul.f32 %v1501, 0.35355338
      %v1796 = vmul.f32 %v1504, 0.35355338
      %v1797 = vmul.f32 %v1509, 0.35355338
      %v1798 = vmul.f32 %v1512, 0.35355338
      %v1799 = vmul.f32 %v1517, 0.35355338
      %v1800 = vmul.f32 %v1520, 0.35355338
      %v1801 = vmul.f32 %v1525, 0.35355338
      %v1802 = vmul.f32 %v1528, 0.35355338
      %v1803 = vmul.f32 %v1533, 0.35355338
      %v1804 = vmul.f32 %v1536, 0.35355338
      %v1805 = vmul.f32 %v1541, 0.35355338
      %v1806 = vmul.f32 %v1544, 0.35355338
      %v1807 = vpack.c.bf16 %v1792, %v1791
      %v1808 = vpack.c.bf16 %v1794, %v1793
      %v1809 = vpack.c.bf16 %v1796, %v1795
      %v1810 = vpack.c.bf16 %v1798, %v1797
      %v1811 = vpack.c.bf16 %v1800, %v1799
      %v1812 = vpack.c.bf16 %v1802, %v1801
      %v1813 = vpack.c.bf16 %v1804, %v1803
      %v1814 = vpack.c.bf16 %v1806, %v1805
      %v1815 = vpack.c.bf16 %v1610, %v1607
      %v1816 = vpack.c.bf16 %v1618, %v1615
      %v1817 = vpack.c.bf16 %v1626, %v1623
      %v1818 = vpack.c.bf16 %v1634, %v1631
      %v1819 = vpack.c.bf16 %v1642, %v1639
      %v1820 = vpack.c.bf16 %v1650, %v1647
      %v1821 = vpack.c.bf16 %v1658, %v1655
      %v1822 = vpack.c.bf16 %v1666, %v1663
      %v1823 = vpack.c.bf16 %v1732, %v1729
      %v1824 = vpack.c.bf16 %v1740, %v1737
      %v1825 = vpack.c.bf16 %v1748, %v1745
      %v1826 = vpack.c.bf16 %v1756, %v1753
      %v1827 = vpack.c.bf16 %v1764, %v1761
      %v1828 = vpack.c.bf16 %v1772, %v1769
      %v1829 = vpack.c.bf16 %v1780, %v1777
      %v1830 = vpack.c.bf16 %v1788, %v1785
      %v1832 = vsel %vm1021, %v1807, 0
      %v1835 = vsel %vm1021, %v1808, 0
      %v1838 = vsel %vm1021, %v1809, 0
      %v1841 = vsel %vm1021, %v1810, 0
      %v1844 = vsel %vm1021, %v1811, 0
      %v1847 = vsel %vm1021, %v1812, 0
      %v1850 = vsel %vm1021, %v1813, 0
      %v1853 = vsel %vm1021, %v1814, 0
      %v1856 = vsel %vm1021, %v1815, 0
      %v1859 = vsel %vm1021, %v1816, 0
      %v1862 = vsel %vm1021, %v1817, 0
      %v1865 = vsel %vm1021, %v1818, 0
      %v1868 = vsel %vm1021, %v1819, 0
      %v1871 = vsel %vm1021, %v1820, 0
      %v1874 = vsel %vm1021, %v1821, 0
      %v1877 = vsel %vm1021, %v1822, 0
      %1879 = vmatprep.subr.bf16.mxu0 0
      %1880 = vmatpush1.bf16.xpose.msra.mxu0 %v1856
      %1881 = vmatprep.subr.bf16.mxu0 0
      %1882 = vmatpush1.bf16.xpose.msra.mxu0 %v1859
      %1883 = vmatprep.subr.bf16.mxu0 0
      %1884 = vmatpush1.bf16.xpose.msra.mxu0 %v1862
      %1885 = vmatprep.subr.bf16.mxu0 0
      %1886 = vmatpush1.bf16.xpose.msra.mxu0 %v1865
      %1887 = vmatprep.subr.bf16.mxu0 0
      %1888 = vmatpush1.bf16.xpose.msra.mxu0 %v1868
      %1889 = vmatprep.subr.bf16.mxu0 0
      %1890 = vmatpush1.bf16.xpose.msra.mxu0 %v1871
      %1891 = vmatprep.subr.bf16.mxu0 0
      %1892 = vmatpush1.bf16.xpose.msra.mxu0 %v1874
      %1893 = vmatprep.subr.bf16.mxu0 0
      %1894 = vmatpush1.bf16.xpose.msra.mxu0 %v1877
      %1895 = vmatprep.subr.bf16.mxu0 0
      %1896 = vmatpush1.bf16.xpose.msra.mxu0 0
      %1897 = vmatprep.subr.bf16.mxu0 0
      %1898 = vmatpush1.bf16.xpose.msra.mxu0 0
      %1899 = vmatprep.subr.bf16.mxu0 0
      %1900 = vmatpush1.bf16.xpose.msra.mxu0 0
      %1901 = vmatprep.subr.bf16.mxu0 0
      %1902 = vmatpush1.bf16.xpose.msra.mxu0 0
      %1903 = vmatprep.subr.bf16.mxu0 0
      %1904 = vmatpush1.bf16.xpose.msra.mxu0 0
      %1905 = vmatprep.subr.bf16.mxu0 0
      %1906 = vmatpush1.bf16.xpose.msra.mxu0 0
      %1907 = vmatprep.subr.bf16.mxu0 0
      %1908 = vmatpush1.bf16.xpose.msra.mxu0 0
      %1909 = vmatprep.subr.bf16.mxu0 0
      %1910 = vmatpush1.bf16.xpose.msra.mxu0 0
      %1911 = vmatprep.mubr.bf16.mxu0 0
      %1912 = vmatmul.mubr.bf16.gmra.mrb[0].mxu0 %v1832
      %v1913 = vpop.f32.mrb[0].mxu0
      %v1914 = vadd.f32 %v571, %v1913
      %v1915 = vpop.f32.mrb[0].mxu0
      %v1916 = vpop.f32.mrb[0].mxu0
      %v1917 = vadd.f32 %v571, %v1916
      %v1918 = vpop.f32.mrb[0].mxu0
      %1919 = vmatprep.mubr.bf16.mxu0 0
      %1920 = vmatmul.mubr.bf16.gmra.mrb[0].mxu0 %v1835
      %v1921 = vpop.f32.mrb[0].mxu0
      %v1922 = vadd.f32 %v571, %v1921
      %v1923 = vpop.f32.mrb[0].mxu0
      %v1924 = vpop.f32.mrb[0].mxu0
      %v1925 = vadd.f32 %v571, %v1924
      %v1926 = vpop.f32.mrb[0].mxu0
      %1927 = vmatprep.mubr.bf16.mxu0 0
      %1928 = vmatmul.mubr.bf16.gmra.mrb[0].mxu0 %v1838
      %v1929 = vpop.f32.mrb[0].mxu0
      %v1930 = vadd.f32 %v571, %v1929
      %v1931 = vpop.f32.mrb[0].mxu0
      %v1932 = vpop.f32.mrb[0].mxu0
      %v1933 = vadd.f32 %v571, %v1932
      %v1934 = vpop.f32.mrb[0].mxu0
      %1935 = vmatprep.mubr.bf16.mxu0 0
      %1936 = vmatmul.mubr.bf16.gmra.mrb[0].mxu0 %v1841
      %v1937 = vpop.f32.mrb[0].mxu0
      %v1938 = vadd.f32 %v571, %v1937
      %v1939 = vpop.f32.mrb[0].mxu0
      %v1940 = vpop.f32.mrb[0].mxu0
      %v1941 = vadd.f32 %v571, %v1940
      %v1942 = vpop.f32.mrb[0].mxu0
      %1943 = vmatprep.mubr.bf16.mxu0 0
      %1944 = vmatmul.mubr.bf16.gmra.mrb[0].mxu0 %v1844
      %v1945 = vpop.f32.mrb[0].mxu0
      %v1946 = vadd.f32 %v571, %v1945
      %v1947 = vpop.f32.mrb[0].mxu0
      %v1948 = vpop.f32.mrb[0].mxu0
      %v1949 = vadd.f32 %v571, %v1948
      %v1950 = vpop.f32.mrb[0].mxu0
      %1951 = vmatprep.mubr.bf16.mxu0 0
      %1952 = vmatmul.mubr.bf16.gmra.mrb[0].mxu0 %v1847
      %v1953 = vpop.f32.mrb[0].mxu0
      %v1954 = vadd.f32 %v571, %v1953
      %v1955 = vpop.f32.mrb[0].mxu0
      %v1956 = vpop.f32.mrb[0].mxu0
      %v1957 = vadd.f32 %v571, %v1956
      %v1958 = vpop.f32.mrb[0].mxu0
      %1959 = vmatprep.mubr.bf16.mxu0 0
      %1960 = vmatmul.mubr.bf16.gmra.mrb[0].mxu0 %v1850
      %v1961 = vpop.f32.mrb[0].mxu0
      %v1962 = vadd.f32 %v571, %v1961
      %v1963 = vpop.f32.mrb[0].mxu0
      %v1964 = vpop.f32.mrb[0].mxu0
      %v1965 = vadd.f32 %v571, %v1964
      %v1966 = vpop.f32.mrb[0].mxu0
      %1967 = vmatprep.mubr.bf16.mxu0 0
      %1968 = vmatmul.mubr.bf16.gmra.mrb[0].mxu0 %v1853
      %v1969 = vpop.f32.mrb[0].mxu0
      %v1970 = vadd.f32 %v571, %v1969
      %v1971 = vpop.f32.mrb[0].mxu0
      %v1972 = vpop.f32.mrb[0].mxu0
      %v1973 = vadd.f32 %v571, %v1972
      %v1974 = vpop.f32.mrb[0].mxu0
      %1975 = vdwg.mxu0
      %1976 = vmax.xlane.f32.xlu0 %v1914
      %v1977 = vpop.xlane.xlu0 %1976
      %1978 = vmax.xlane.f32.xlu0 %v1917
      %v1979 = vpop.xlane.xlu0 %1978
      %1980 = vmax.xlane.f32.xlu0 %v1922
      %v1981 = vpop.xlane.xlu0 %1980
      %1982 = vmax.xlane.f32.xlu0 %v1925
      %v1983 = vpop.xlane.xlu0 %1982
      %1984 = vmax.xlane.f32.xlu0 %v1930
      %v1985 = vpop.xlane.xlu0 %1984
      %1986 = vmax.xlane.f32.xlu0 %v1933
      %v1987 = vpop.xlane.xlu0 %1986
      %1988 = vmax.xlane.f32.xlu0 %v1938
      %v1989 = vpop.xlane.xlu0 %1988
      %1990 = vmax.xlane.f32.xlu0 %v1941
      %v1991 = vpop.xlane.xlu0 %1990
      %1992 = vmax.xlane.f32.xlu0 %v1946
      %v1993 = vpop.xlane.xlu0 %1992
      %1994 = vmax.xlane.f32.xlu0 %v1949
      %v1995 = vpop.xlane.xlu0 %1994
      %1996 = vmax.xlane.f32.xlu0 %v1954
      %v1997 = vpop.xlane.xlu0 %1996
      %1998 = vmax.xlane.f32.xlu0 %v1957
      %v1999 = vpop.xlane.xlu0 %1998
      %2000 = vmax.xlane.f32.xlu0 %v1962
      %v2001 = vpop.xlane.xlu0 %2000
      %2002 = vmax.xlane.f32.xlu0 %v1965
      %v2003 = vpop.xlane.xlu0 %2002
      %2004 = vmax.xlane.f32.xlu0 %v1970
      %v2005 = vpop.xlane.xlu0 %2004
      %2006 = vmax.xlane.f32.xlu0 %v1973
      %v2007 = vpop.xlane.xlu0 %2006
      %v2008 = vsub.f32 %v1914, %v1977
      %v2009 = vsub.f32 %v1917, %v1979
      %v2010 = vsub.f32 %v1922, %v1981
      %v2011 = vsub.f32 %v1925, %v1983
      %v2012 = vsub.f32 %v1930, %v1985
      %v2013 = vsub.f32 %v1933, %v1987
      %v2014 = vsub.f32 %v1938, %v1989
      %v2015 = vsub.f32 %v1941, %v1991
      %v2016 = vsub.f32 %v1946, %v1993
      %v2017 = vsub.f32 %v1949, %v1995
      %v2018 = vsub.f32 %v1954, %v1997
      %v2019 = vsub.f32 %v1957, %v1999
      %v2020 = vsub.f32 %v1962, %v2001
      %v2021 = vsub.f32 %v1965, %v2003
      %v2022 = vsub.f32 %v1970, %v2005
      %v2023 = vsub.f32 %v1973, %v2007
      %v2024 = vmul.f32 %v2008, 1.442695
      %v2025 = vpow.pop %v2024
      %v2026 = vmul.f32 %v2009, 1.442695
      %v2027 = vpow.pop %v2026
      %v2028 = vmul.f32 %v2010, 1.442695
      %v2029 = vpow.pop %v2028
      %v2030 = vmul.f32 %v2011, 1.442695
      %v2031 = vpow.pop %v2030
      %v2032 = vmul.f32 %v2012, 1.442695
      %v2033 = vpow.pop %v2032
      %v2034 = vmul.f32 %v2013, 1.442695
      %v2035 = vpow.pop %v2034
      %v2036 = vmul.f32 %v2014, 1.442695
      %v2037 = vpow.pop %v2036
      %v2038 = vmul.f32 %v2015, 1.442695
      %v2039 = vpow.pop %v2038
      %v2040 = vmul.f32 %v2016, 1.442695
      %v2041 = vpow.pop %v2040
      %v2042 = vmul.f32 %v2017, 1.442695
      %v2043 = vpow.pop %v2042
      %v2044 = vmul.f32 %v2018, 1.442695
      %v2045 = vpow.pop %v2044
      %v2046 = vmul.f32 %v2019, 1.442695
      %v2047 = vpow.pop %v2046
      %v2048 = vmul.f32 %v2020, 1.442695
      %v2049 = vpow.pop %v2048
      %v2050 = vmul.f32 %v2021, 1.442695
      %v2051 = vpow.pop %v2050
      %v2052 = vmul.f32 %v2022, 1.442695
      %v2053 = vpow.pop %v2052
      %v2054 = vmul.f32 %v2023, 1.442695
      %v2055 = vpow.pop %v2054
      %2056 = vadd.xlane.f32.xlu0 %v2025
      %v2057 = vpop.xlane.xlu0 %2056
      %2058 = vadd.xlane.f32.xlu0 %v2027
      %v2059 = vpop.xlane.xlu0 %2058
      %2060 = vadd.xlane.f32.xlu0 %v2029
      %v2061 = vpop.xlane.xlu0 %2060
      %2062 = vadd.xlane.f32.xlu0 %v2031
      %v2063 = vpop.xlane.xlu0 %2062
      %2064 = vadd.xlane.f32.xlu0 %v2033
      %v2065 = vpop.xlane.xlu0 %2064
      %2066 = vadd.xlane.f32.xlu0 %v2035
      %v2067 = vpop.xlane.xlu0 %2066
      %2068 = vadd.xlane.f32.xlu0 %v2037
      %v2069 = vpop.xlane.xlu0 %2068
      %2070 = vadd.xlane.f32.xlu0 %v2039
      %v2071 = vpop.xlane.xlu0 %2070
      %2072 = vadd.xlane.f32.xlu0 %v2041
      %v2073 = vpop.xlane.xlu0 %2072
      %2074 = vadd.xlane.f32.xlu0 %v2043
      %v2075 = vpop.xlane.xlu0 %2074
      %2076 = vadd.xlane.f32.xlu0 %v2045
      %v2077 = vpop.xlane.xlu0 %2076
      %2078 = vadd.xlane.f32.xlu0 %v2047
      %v2079 = vpop.xlane.xlu0 %2078
      %2080 = vadd.xlane.f32.xlu0 %v2049
      %v2081 = vpop.xlane.xlu0 %2080
      %2082 = vadd.xlane.f32.xlu0 %v2051
      %v2083 = vpop.xlane.xlu0 %2082
      %2084 = vadd.xlane.f32.xlu0 %v2053
      %v2085 = vpop.xlane.xlu0 %2084
      %2086 = vadd.xlane.f32.xlu0 %v2055
      %v2087 = vpop.xlane.xlu0 %2086
      %v2088 = vpack.c.bf16 %v2027, %v2025
      %v2089 = vpack.c.bf16 %v2031, %v2029
      %v2090 = vpack.c.bf16 %v2035, %v2033
      %v2091 = vpack.c.bf16 %v2039, %v2037
      %v2092 = vpack.c.bf16 %v2043, %v2041
      %v2093 = vpack.c.bf16 %v2047, %v2045
      %v2094 = vpack.c.bf16 %v2051, %v2049
      %v2095 = vpack.c.bf16 %v2055, %v2053
      %2096 = vmatprep.subr.bf16.mxu0 0
      %2097 = vmatpush1.bf16.msra.mxu0 %v1823
      %2098 = vmatprep.subr.bf16.mxu0 0
      %2099 = vmatpush1.bf16.msra.mxu0 %v1824
      %2100 = vmatprep.subr.bf16.mxu0 0
      %2101 = vmatpush1.bf16.msra.mxu0 %v1825
      %2102 = vmatprep.subr.bf16.mxu0 0
      %2103 = vmatpush1.bf16.msra.mxu0 %v1826
      %2104 = vmatprep.subr.bf16.mxu0 0
      %2105 = vmatpush1.bf16.msra.mxu0 %v1827
      %2106 = vmatprep.subr.bf16.mxu0 0
      %2107 = vmatpush1.bf16.msra.mxu0 %v1828
      %2108 = vmatprep.subr.bf16.mxu0 0
      %2109 = vmatpush1.bf16.msra.mxu0 %v1829
      %2110 = vmatprep.subr.bf16.mxu0 0
      %2111 = vmatpush1.bf16.msra.mxu0 %v1830
      %2112 = vmatprep.subr.bf16.mxu0 0
      %2113 = vmatpush1.bf16.msra.mxu0 0
      %2114 = vmatprep.subr.bf16.mxu0 0
      %2115 = vmatpush1.bf16.msra.mxu0 0
      %2116 = vmatprep.subr.bf16.mxu0 0
      %2117 = vmatpush1.bf16.msra.mxu0 0
      %2118 = vmatprep.subr.bf16.mxu0 0
      %2119 = vmatpush1.bf16.msra.mxu0 0
      %2120 = vmatprep.subr.bf16.mxu0 0
      %2121 = vmatpush1.bf16.msra.mxu0 0
      %2122 = vmatprep.subr.bf16.mxu0 0
      %2123 = vmatpush1.bf16.msra.mxu0 0
      %2124 = vmatprep.subr.bf16.mxu0 0
      %2125 = vmatpush1.bf16.msra.mxu0 0
      %2126 = vmatprep.subr.bf16.mxu0 0
      %2127 = vmatpush1.bf16.msra.mxu0 0
      %2128 = vmatprep.mubr.bf16.mxu0 0
      %2129 = vmatmul.mubr.bf16.gmra.mrb[0].mxu0 %v2088
      %v2130 = vpop.f32.mrb[0].mxu0
      %v2131 = vadd.f32 0.0, %v2130
      %v2132 = vpop.f32.mrb[0].mxu0
      %v2133 = vpop.f32.mrb[0].mxu0
      %v2134 = vadd.f32 0.0, %v2133
      %v2135 = vpop.f32.mrb[0].mxu0
      %2136 = vmatprep.mubr.bf16.mxu0 0
      %2137 = vmatmul.mubr.bf16.gmra.mrb[0].mxu0 %v2089
      %v2138 = vpop.f32.mrb[0].mxu0
      %v2139 = vadd.f32 0.0, %v2138
      %v2140 = vpop.f32.mrb[0].mxu0
      %v2141 = vpop.f32.mrb[0].mxu0
      %v2142 = vadd.f32 0.0, %v2141
      %v2143 = vpop.f32.mrb[0].mxu0
      %2144 = vmatprep.mubr.bf16.mxu0 0
      %2145 = vmatmul.mubr.bf16.gmra.mrb[0].mxu0 %v2090
      %v2146 = vpop.f32.mrb[0].mxu0
      %v2147 = vadd.f32 0.0, %v2146
      %v2148 = vpop.f32.mrb[0].mxu0
      %v2149 = vpop.f32.mrb[0].mxu0
      %v2150 = vadd.f32 0.0, %v2149
      %v2151 = vpop.f32.mrb[0].mxu0
      %2152 = vmatprep.mubr.bf16.mxu0 0
      %2153 = vmatmul.mubr.bf16.gmra.mrb[0].mxu0 %v2091
      %v2154 = vpop.f32.mrb[0].mxu0
      %v2155 = vadd.f32 0.0, %v2154
      %v2156 = vpop.f32.mrb[0].mxu0
      %v2157 = vpop.f32.mrb[0].mxu0
      %v2158 = vadd.f32 0.0, %v2157
      %v2159 = vpop.f32.mrb[0].mxu0
      %2160 = vmatprep.mubr.bf16.mxu0 0
      %2161 = vmatmul.mubr.bf16.gmra.mrb[0].mxu0 %v2092
      %v2162 = vpop.f32.mrb[0].mxu0
      %v2163 = vadd.f32 0.0, %v2162
      %v2164 = vpop.f32.mrb[0].mxu0
      %v2165 = vpop.f32.mrb[0].mxu0
      %v2166 = vadd.f32 0.0, %v2165
      %v2167 = vpop.f32.mrb[0].mxu0
      %2168 = vmatprep.mubr.bf16.mxu0 0
      %2169 = vmatmul.mubr.bf16.gmra.mrb[0].mxu0 %v2093
      %v2170 = vpop.f32.mrb[0].mxu0
      %v2171 = vadd.f32 0.0, %v2170
      %v2172 = vpop.f32.mrb[0].mxu0
      %v2173 = vpop.f32.mrb[0].mxu0
      %v2174 = vadd.f32 0.0, %v2173
      %v2175 = vpop.f32.mrb[0].mxu0
      %2176 = vmatprep.mubr.bf16.mxu0 0
      %2177 = vmatmul.mubr.bf16.gmra.mrb[0].mxu0 %v2094
      %v2178 = vpop.f32.mrb[0].mxu0
      %v2179 = vadd.f32 0.0, %v2178
      %v2180 = vpop.f32.mrb[0].mxu0
      %v2181 = vpop.f32.mrb[0].mxu0
      %v2182 = vadd.f32 0.0, %v2181
      %v2183 = vpop.f32.mrb[0].mxu0
      %2184 = vmatprep.mubr.bf16.mxu0 0
      %2185 = vmatmul.mubr.bf16.gmra.mrb[0].mxu0 %v2095
      %v2186 = vpop.f32.mrb[0].mxu0
      %v2187 = vadd.f32 0.0, %v2186
      %v2188 = vpop.f32.mrb[0].mxu0
      %v2189 = vpop.f32.mrb[0].mxu0
      %v2190 = vadd.f32 0.0, %v2189
      %v2191 = vpop.f32.mrb[0].mxu0
      %2192 = vdwg.mxu0
      %v2193 = vrcp.pop %v2057
      %v2194 = vrcp.pop %v2059
      %v2195 = vrcp.pop %v2061
      %v2196 = vrcp.pop %v2063
      %v2197 = vrcp.pop %v2065
      %v2198 = vrcp.pop %v2067
      %v2199 = vrcp.pop %v2069
      %v2200 = vrcp.pop %v2071
      %v2201 = vrcp.pop %v2073
      %v2202 = vrcp.pop %v2075
      %v2203 = vrcp.pop %v2077
      %v2204 = vrcp.pop %v2079
      %v2205 = vrcp.pop %v2081
      %v2206 = vrcp.pop %v2083
      %v2207 = vrcp.pop %v2085
      %v2208 = vrcp.pop %v2087
      %v2209 = vmul.f32 %v2131, %v2193
      %v2210 = vmul.f32 %v2134, %v2194
      %v2211 = vmul.f32 %v2139, %v2195
      %v2212 = vmul.f32 %v2142, %v2196
      %v2213 = vmul.f32 %v2147, %v2197
      %v2214 = vmul.f32 %v2150, %v2198
      %v2215 = vmul.f32 %v2155, %v2199
      %v2216 = vmul.f32 %v2158, %v2200
      %v2217 = vmul.f32 %v2163, %v2201
      %v2218 = vmul.f32 %v2166, %v2202
      %v2219 = vmul.f32 %v2171, %v2203
      %v2220 = vmul.f32 %v2174, %v2204
      %v2221 = vmul.f32 %v2179, %v2205
      %v2222 = vmul.f32 %v2182, %v2206
      %v2223 = vmul.f32 %v2187, %v2207
      %v2224 = vmul.f32 %v2190, %v2208
      %v2225 = vpack.c.bf16 %v2210, %v2209
      %v2226 = vpack.c.bf16 %v2212, %v2211
      %v2227 = vpack.c.bf16 %v2214, %v2213
      %v2228 = vpack.c.bf16 %v2216, %v2215
      %v2229 = vpack.c.bf16 %v2218, %v2217
      %v2230 = vpack.c.bf16 %v2220, %v2219
      %v2231 = vpack.c.bf16 %v2222, %v2221
      %v2232 = vpack.c.bf16 %v2224, %v2223
      %s2233 = scalar_lea.vmem %s6, 4
      %v2234 = vld [vmem:[%s2233] sm:$0xf]
      %v2236 = vsel %vm1021, %v2225, 0
      %v2239 = vsel %vm1021, %v2226, 0
      %v2242 = vsel %vm1021, %v2227, 0
      %v2245 = vsel %vm1021, %v2228, 0
      %v2248 = vsel %vm1021, %v2229, 0
      %v2251 = vsel %vm1021, %v2230, 0
      %v2254 = vsel %vm1021, %v2231, 0
      %v2257 = vsel %vm1021, %v2232, 0
      %vm2259 = vcmask 1043456
      %v2261 = vsel %vm2259, %v2234, 0
      %2263 = vmatprep.subr.bf16.mxu0 0
      %2264 = vmatpush1.bf16.msra.mxu0 %v2261
      %2265 = vmatprep.subr.bf16.mxu0 0
      %2266 = vmatpush1.bf16.msra.mxu0 0
      %2267 = vmatprep.subr.bf16.mxu0 0
      %2268 = vmatpush1.bf16.msra.mxu0 0
      %2269 = vmatprep.subr.bf16.mxu0 0
      %2270 = vmatpush1.bf16.msra.mxu0 0
      %2271 = vmatprep.subr.bf16.mxu0 0
      %2272 = vmatpush1.bf16.msra.mxu0 0
      %2273 = vmatprep.subr.bf16.mxu0 0
      %2274 = vmatpush1.bf16.msra.mxu0 0
      %2275 = vmatprep.subr.bf16.mxu0 0
      %2276 = vmatpush1.bf16.msra.mxu0 0
      %2277 = vmatprep.subr.bf16.mxu0 0
      %2278 = vmatpush1.bf16.msra.mxu0 0
      %2279 = vmatprep.subr.bf16.mxu0 0
      %2280 = vmatpush1.bf16.msra.mxu0 0
      %2281 = vmatprep.subr.bf16.mxu0 0
      %2282 = vmatpush1.bf16.msra.mxu0 0
      %2283 = vmatprep.subr.bf16.mxu0 0
      %2284 = vmatpush1.bf16.msra.mxu0 0
      %2285 = vmatprep.subr.bf16.mxu0 0
      %2286 = vmatpush1.bf16.msra.mxu0 0
      %2287 = vmatprep.subr.bf16.mxu0 0
      %2288 = vmatpush1.bf16.msra.mxu0 0
      %2289 = vmatprep.subr.bf16.mxu0 0
      %2290 = vmatpush1.bf16.msra.mxu0 0
      %2291 = vmatprep.subr.bf16.mxu0 0
      %2292 = vmatpush1.bf16.msra.mxu0 0
      %2293 = vmatprep.subr.bf16.mxu0 0
      %2294 = vmatpush1.bf16.msra.mxu0 0
      %2295 = vmatprep.mubr.bf16.mxu0 0
      %2296 = vmatmul.mubr.bf16.gmra.mrb[0].mxu0 %v2236
      %v2297 = vpop.f32.mrb[0].mxu0
      %v2298 = vadd.f32 0.0, %v2297
      %v2299 = vpop.f32.mrb[0].mxu0
      %v2300 = vpop.f32.mrb[0].mxu0
      %v2301 = vadd.f32 0.0, %v2300
      %v2302 = vpop.f32.mrb[0].mxu0
      %2303 = vmatprep.mubr.bf16.mxu0 0
      %2304 = vmatmul.mubr.bf16.gmra.mrb[0].mxu0 %v2239
      %v2305 = vpop.f32.mrb[0].mxu0
      %v2306 = vadd.f32 0.0, %v2305
      %v2307 = vpop.f32.mrb[0].mxu0
      %v2308 = vpop.f32.mrb[0].mxu0
      %v2309 = vadd.f32 0.0, %v2308
      %v2310 = vpop.f32.mrb[0].mxu0
      %2311 = vmatprep.mubr.bf16.mxu0 0
      %2312 = vmatmul.mubr.bf16.gmra.mrb[0].mxu0 %v2242
      %v2313 = vpop.f32.mrb[0].mxu0
      %v2314 = vadd.f32 0.0, %v2313
      %v2315 = vpop.f32.mrb[0].mxu0
      %v2316 = vpop.f32.mrb[0].mxu0
      %v2317 = vadd.f32 0.0, %v2316
      %v2318 = vpop.f32.mrb[0].mxu0
      %2319 = vmatprep.mubr.bf16.mxu0 0
      %2320 = vmatmul.mubr.bf16.gmra.mrb[0].mxu0 %v2245
      %v2321 = vpop.f32.mrb[0].mxu0
      %v2322 = vadd.f32 0.0, %v2321
      %v2323 = vpop.f32.mrb[0].mxu0
      %v2324 = vpop.f32.mrb[0].mxu0
      %v2325 = vadd.f32 0.0, %v2324
      %v2326 = vpop.f32.mrb[0].mxu0
      %2327 = vmatprep.mubr.bf16.mxu0 0
      %2328 = vmatmul.mubr.bf16.gmra.mrb[0].mxu0 %v2248
      %v2329 = vpop.f32.mrb[0].mxu0
      %v2330 = vadd.f32 0.0, %v2329
      %v2331 = vpop.f32.mrb[0].mxu0
      %v2332 = vpop.f32.mrb[0].mxu0
      %v2333 = vadd.f32 0.0, %v2332
      %v2334 = vpop.f32.mrb[0].mxu0
      %2335 = vmatprep.mubr.bf16.mxu0 0
      %2336 = vmatmul.mubr.bf16.gmra.mrb[0].mxu0 %v2251
      %v2337 = vpop.f32.mrb[0].mxu0
      %v2338 = vadd.f32 0.0, %v2337
      %v2339 = vpop.f32.mrb[0].mxu0
      %v2340 = vpop.f32.mrb[0].mxu0
      %v2341 = vadd.f32 0.0, %v2340
      %v2342 = vpop.f32.mrb[0].mxu0
      %2343 = vmatprep.mubr.bf16.mxu0 0
      %2344 = vmatmul.mubr.bf16.gmra.mrb[0].mxu0 %v2254
      %v2345 = vpop.f32.mrb[0].mxu0
      %v2346 = vadd.f32 0.0, %v2345
      %v2347 = vpop.f32.mrb[0].mxu0
      %v2348 = vpop.f32.mrb[0].mxu0
      %v2349 = vadd.f32 0.0, %v2348
      %v2350 = vpop.f32.mrb[0].mxu0
      %2351 = vmatprep.mubr.bf16.mxu0 0
      %2352 = vmatmul.mubr.bf16.gmra.mrb[0].mxu0 %v2257
      %v2353 = vpop.f32.mrb[0].mxu0
      %v2354 = vadd.f32 0.0, %v2353
      %v2355 = vpop.f32.mrb[0].mxu0
      %v2356 = vpop.f32.mrb[0].mxu0
      %v2357 = vadd.f32 0.0, %v2356
      %v2358 = vpop.f32.mrb[0].mxu0
      %2359 = vdwg.mxu0
      %v2361 = vsel %vm1021, %v1416, 0
      %v2364 = vsel %vm1021, %v1417, 0
      %v2367 = vsel %vm1021, %v1418, 0
      %v2370 = vsel %vm1021, %v1419, 0
      %v2373 = vsel %vm1021, %v1420, 0
      %v2376 = vsel %vm1021, %v1421, 0
      %v2379 = vsel %vm1021, %v1422, 0
      %v2382 = vsel %vm1021, %v1423, 0
      %v2385 = vsel %vm2259, %v1424, 0
      %2387 = vmatprep.subr.bf16.mxu0 0
      %2388 = vmatpush1.bf16.msra.mxu0 %v2385
      %2389 = vmatprep.subr.bf16.mxu0 0
      %2390 = vmatpush1.bf16.msra.mxu0 0
      %2391 = vmatprep.subr.bf16.mxu0 0
      %2392 = vmatpush1.bf16.msra.mxu0 0
      %2393 = vmatprep.subr.bf16.mxu0 0
      %2394 = vmatpush1.bf16.msra.mxu0 0
      %2395 = vmatprep.subr.bf16.mxu0 0
      %2396 = vmatpush1.bf16.msra.mxu0 0
      %2397 = vmatprep.subr.bf16.mxu0 0
      %2398 = vmatpush1.bf16.msra.mxu0 0
      %2399 = vmatprep.subr.bf16.mxu0 0
      %2400 = vmatpush1.bf16.msra.mxu0 0
      %2401 = vmatprep.subr.bf16.mxu0 0
      %2402 = vmatpush1.bf16.msra.mxu0 0
      %2403 = vmatprep.subr.bf16.mxu0 0
      %2404 = vmatpush1.bf16.msra.mxu0 0
      %2405 = vmatprep.subr.bf16.mxu0 0
      %2406 = vmatpush1.bf16.msra.mxu0 0
      %2407 = vmatprep.subr.bf16.mxu0 0
      %2408 = vmatpush1.bf16.msra.mxu0 0
      %2409 = vmatprep.subr.bf16.mxu0 0
      %2410 = vmatpush1.bf16.msra.mxu0 0
      %2411 = vmatprep.subr.bf16.mxu0 0
      %2412 = vmatpush1.bf16.msra.mxu0 0
      %2413 = vmatprep.subr.bf16.mxu0 0
      %2414 = vmatpush1.bf16.msra.mxu0 0
      %2415 = vmatprep.subr.bf16.mxu0 0
      %2416 = vmatpush1.bf16.msra.mxu0 0
      %2417 = vmatprep.subr.bf16.mxu0 0
      %2418 = vmatpush1.bf16.msra.mxu0 0
      %2419 = vmatprep.mubr.bf16.mxu0 0
      %2420 = vmatmul.mubr.bf16.gmra.mrb[0].mxu0 %v2361
      %v2421 = vpop.f32.mrb[0].mxu0
      %v2422 = vadd.f32 %v2298, %v2421
      %v2423 = vpop.f32.mrb[0].mxu0
      %v2424 = vpop.f32.mrb[0].mxu0
      %v2425 = vadd.f32 %v2301, %v2424
      %v2426 = vpop.f32.mrb[0].mxu0
      %2427 = vmatprep.mubr.bf16.mxu0 0
      %2428 = vmatmul.mubr.bf16.gmra.mrb[0].mxu0 %v2364
      %v2429 = vpop.f32.mrb[0].mxu0
      %v2430 = vadd.f32 %v2306, %v2429
      %v2431 = vpop.f32.mrb[0].mxu0
      %v2432 = vpop.f32.mrb[0].mxu0
      %v2433 = vadd.f32 %v2309, %v2432
      %v2434 = vpop.f32.mrb[0].mxu0
      %2435 = vmatprep.mubr.bf16.mxu0 0
      %2436 = vmatmul.mubr.bf16.gmra.mrb[0].mxu0 %v2367
      %v2437 = vpop.f32.mrb[0].mxu0
      %v2438 = vadd.f32 %v2314, %v2437
      %v2439 = vpop.f32.mrb[0].mxu0
      %v2440 = vpop.f32.mrb[0].mxu0
      %v2441 = vadd.f32 %v2317, %v2440
      %v2442 = vpop.f32.mrb[0].mxu0
      %2443 = vmatprep.mubr.bf16.mxu0 0
      %2444 = vmatmul.mubr.bf16.gmra.mrb[0].mxu0 %v2370
      %v2445 = vpop.f32.mrb[0].mxu0
      %v2446 = vadd.f32 %v2322, %v2445
      %v2447 = vpop.f32.mrb[0].mxu0
      %v2448 = vpop.f32.mrb[0].mxu0
      %v2449 = vadd.f32 %v2325, %v2448
      %v2450 = vpop.f32.mrb[0].mxu0
      %2451 = vmatprep.mubr.bf16.mxu0 0
      %2452 = vmatmul.mubr.bf16.gmra.mrb[0].mxu0 %v2373
      %v2453 = vpop.f32.mrb[0].mxu0
      %v2454 = vadd.f32 %v2330, %v2453
      %v2455 = vpop.f32.mrb[0].mxu0
      %v2456 = vpop.f32.mrb[0].mxu0
      %v2457 = vadd.f32 %v2333, %v2456
      %v2458 = vpop.f32.mrb[0].mxu0
      %2459 = vmatprep.mubr.bf16.mxu0 0
      %2460 = vmatmul.mubr.bf16.gmra.mrb[0].mxu0 %v2376
      %v2461 = vpop.f32.mrb[0].mxu0
      %v2462 = vadd.f32 %v2338, %v2461
      %v2463 = vpop.f32.mrb[0].mxu0
      %v2464 = vpop.f32.mrb[0].mxu0
      %v2465 = vadd.f32 %v2341, %v2464
      %v2466 = vpop.f32.mrb[0].mxu0
      %2467 = vmatprep.mubr.bf16.mxu0 0
      %2468 = vmatmul.mubr.bf16.gmra.mrb[0].mxu0 %v2379
      %v2469 = vpop.f32.mrb[0].mxu0
      %v2470 = vadd.f32 %v2346, %v2469
      %v2471 = vpop.f32.mrb[0].mxu0
      %v2472 = vpop.f32.mrb[0].mxu0
      %v2473 = vadd.f32 %v2349, %v2472
      %v2474 = vpop.f32.mrb[0].mxu0
      %2475 = vmatprep.mubr.bf16.mxu0 0
      %2476 = vmatmul.mubr.bf16.gmra.mrb[0].mxu0 %v2382
      %v2477 = vpop.f32.mrb[0].mxu0
      %v2478 = vadd.f32 %v2354, %v2477
      %v2479 = vpop.f32.mrb[0].mxu0
      %v2480 = vpop.f32.mrb[0].mxu0
      %v2481 = vadd.f32 %v2357, %v2480
      %v2482 = vpop.f32.mrb[0].mxu0
      %2483 = vdwg.mxu0
      %s2484 = scalar_lea.vmem %s3, 32
      %v2485 = vld [vmem:[%s2484] sm:$0xf]
      %v2486 = vld [vmem:[%s2484 + $0x4] sm:$0xf]
      %v2487 = vld [vmem:[%s2484 + $0x8] sm:$0xf]
      %v2488 = vld [vmem:[%s2484 + $0xc] sm:$0xf]
      %s2489 = scalar_lea.vmem %s10, 2
      %v2490 = vld [vmem:[%s2489] sm:$0x1]
      %v2492 = vlaneseq
      %v2493 = vshrl.u32 %v2492, 7
      %v2494 = vsub.s32 0, %v2493
      %v2495 = vrot.slane %v2490, %v2494
      %v2501 = vunpack.c.l.b16 %v2485
      %v2502 = vunpack.c.l.b16 %v2486
      %v2503 = vunpack.c.l.b16 %v2487
      %v2504 = vunpack.c.l.b16 %v2488
      %v2505 = vpack.c.b16 %v2502, %v2501
      %v2506 = vpack.c.b16 %v2504, %v2503
      %2509 = vmatprep.subr.bf16.mxu0 0
      %2510 = vmatpush1.bf16.msra.mxu0 %v2505
      %2511 = vmatprep.subr.bf16.mxu0 0
      %2512 = vmatpush1.bf16.msra.mxu0 %v2506
      %2513 = vmatprep.subr.bf16.mxu0 0
      %2514 = vmatpush1.bf16.msra.mxu0 0
      %2515 = vmatprep.subr.bf16.mxu0 0
      %2516 = vmatpush1.bf16.msra.mxu0 0
      %2517 = vmatprep.subr.bf16.mxu0 0
      %2518 = vmatpush1.bf16.msra.mxu0 0
      %2519 = vmatprep.subr.bf16.mxu0 0
      %2520 = vmatpush1.bf16.msra.mxu0 0
      %2521 = vmatprep.subr.bf16.mxu0 0
      %2522 = vmatpush1.bf16.msra.mxu0 0
      %2523 = vmatprep.subr.bf16.mxu0 0
      %2524 = vmatpush1.bf16.msra.mxu0 0
      %2525 = vmatprep.subr.bf16.mxu0 0
      %2526 = vmatpush1.bf16.msra.mxu0 0
      %2527 = vmatprep.subr.bf16.mxu0 0
      %2528 = vmatpush1.bf16.msra.mxu0 0
      %2529 = vmatprep.subr.bf16.mxu0 0
      %2530 = vmatpush1.bf16.msra.mxu0 0
      %2531 = vmatprep.subr.bf16.mxu0 0
      %2532 = vmatpush1.bf16.msra.mxu0 0
      %2533 = vmatprep.subr.bf16.mxu0 0
      %2534 = vmatpush1.bf16.msra.mxu0 0
      %2535 = vmatprep.subr.bf16.mxu0 0
      %2536 = vmatpush1.bf16.msra.mxu0 0
      %2537 = vmatprep.subr.bf16.mxu0 0
      %2538 = vmatpush1.bf16.msra.mxu0 0
      %2539 = vmatprep.subr.bf16.mxu0 0
      %2540 = vmatpush1.bf16.msra.mxu0 0
      %2541 = vmatprep.mubr.bf16.mxu0 0
      %2542 = vmatmul.mubr.bf16.gmra.mrb[0].mxu0 %v597
      %v2543 = vpop.f32.mrb[0].mxu0
      %v2544 = vadd.f32 %v2495, %v2543
      %v2545 = vpop.f32.mrb[0].mxu0
      %v2546 = vpop.f32.mrb[0].mxu0
      %v2547 = vadd.f32 %v2495, %v2546
      %v2548 = vpop.f32.mrb[0].mxu0
      %2549 = vmatprep.mubr.bf16.mxu0 0
      %2550 = vmatmul.mubr.bf16.gmra.mrb[0].mxu0 %v600
      %v2551 = vpop.f32.mrb[0].mxu0
      %v2552 = vadd.f32 %v2495, %v2551
      %v2553 = vpop.f32.mrb[0].mxu0
      %v2554 = vpop.f32.mrb[0].mxu0
      %v2555 = vadd.f32 %v2495, %v2554
      %v2556 = vpop.f32.mrb[0].mxu0
      %2557 = vmatprep.mubr.bf16.mxu0 0
      %2558 = vmatmul.mubr.bf16.gmra.mrb[0].mxu0 %v603
      %v2559 = vpop.f32.mrb[0].mxu0
      %v2560 = vadd.f32 %v2495, %v2559
      %v2561 = vpop.f32.mrb[0].mxu0
      %v2562 = vpop.f32.mrb[0].mxu0
      %v2563 = vadd.f32 %v2495, %v2562
      %v2564 = vpop.f32.mrb[0].mxu0
      %2565 = vmatprep.mubr.bf16.mxu0 0
      %2566 = vmatmul.mubr.bf16.gmra.mrb[0].mxu0 %v606
      %v2567 = vpop.f32.mrb[0].mxu0
      %v2568 = vadd.f32 %v2495, %v2567
      %v2569 = vpop.f32.mrb[0].mxu0
      %v2570 = vpop.f32.mrb[0].mxu0
      %v2571 = vadd.f32 %v2495, %v2570
      %v2572 = vpop.f32.mrb[0].mxu0
      %2573 = vmatprep.mubr.bf16.mxu0 0
      %2574 = vmatmul.mubr.bf16.gmra.mrb[0].mxu0 %v609
      %v2575 = vpop.f32.mrb[0].mxu0
      %v2576 = vadd.f32 %v2495, %v2575
      %v2577 = vpop.f32.mrb[0].mxu0
      %v2578 = vpop.f32.mrb[0].mxu0
      %v2579 = vadd.f32 %v2495, %v2578
      %v2580 = vpop.f32.mrb[0].mxu0
      %2581 = vmatprep.mubr.bf16.mxu0 0
      %2582 = vmatmul.mubr.bf16.gmra.mrb[0].mxu0 %v612
      %v2583 = vpop.f32.mrb[0].mxu0
      %v2584 = vadd.f32 %v2495, %v2583
      %v2585 = vpop.f32.mrb[0].mxu0
      %v2586 = vpop.f32.mrb[0].mxu0
      %v2587 = vadd.f32 %v2495, %v2586
      %v2588 = vpop.f32.mrb[0].mxu0
      %2589 = vmatprep.mubr.bf16.mxu0 0
      %2590 = vmatmul.mubr.bf16.gmra.mrb[0].mxu0 %v615
      %v2591 = vpop.f32.mrb[0].mxu0
      %v2592 = vadd.f32 %v2495, %v2591
      %v2593 = vpop.f32.mrb[0].mxu0
      %v2594 = vpop.f32.mrb[0].mxu0
      %v2595 = vadd.f32 %v2495, %v2594
      %v2596 = vpop.f32.mrb[0].mxu0
      %2597 = vmatprep.mubr.bf16.mxu0 0
      %2598 = vmatmul.mubr.bf16.gmra.mrb[0].mxu0 %v618
      %v2599 = vpop.f32.mrb[0].mxu0
      %v2600 = vadd.f32 %v2495, %v2599
      %v2601 = vpop.f32.mrb[0].mxu0
      %v2602 = vpop.f32.mrb[0].mxu0
      %v2603 = vadd.f32 %v2495, %v2602
      %v2604 = vpop.f32.mrb[0].mxu0
      %2605 = vdwg.mxu0
      %s2606 = scalar_lea.vmem %s4, 32
      %v2607 = vld [vmem:[%s2606] sm:$0xf]
      %v2608 = vld [vmem:[%s2606 + $0x4] sm:$0xf]
      %v2609 = vld [vmem:[%s2606 + $0x8] sm:$0xf]
      %v2610 = vld [vmem:[%s2606 + $0xc] sm:$0xf]
      %s2611 = scalar_lea.vmem %s11, 2
      %v2612 = vld [vmem:[%s2611] sm:$0x1]
      %v2614 = vlaneseq
      %v2615 = vshrl.u32 %v2614, 7
      %v2616 = vsub.s32 0, %v2615
      %v2617 = vrot.slane %v2612, %v2616
      %v2623 = vunpack.c.l.b16 %v2607
      %v2624 = vunpack.c.l.b16 %v2608
      %v2625 = vunpack.c.l.b16 %v2609
      %v2626 = vunpack.c.l.b16 %v2610
      %v2627 = vpack.c.b16 %v2624, %v2623
      %v2628 = vpack.c.b16 %v2626, %v2625
      %2631 = vmatprep.subr.bf16.mxu0 0
      %2632 = vmatpush1.bf16.msra.mxu0 %v2627
      %2633 = vmatprep.subr.bf16.mxu0 0
      %2634 = vmatpush1.bf16.msra.mxu0 %v2628
      %2635 = vmatprep.subr.bf16.mxu0 0
      %2636 = vmatpush1.bf16.msra.mxu0 0
      %2637 = vmatprep.subr.bf16.mxu0 0
      %2638 = vmatpush1.bf16.msra.mxu0 0
      %2639 = vmatprep.subr.bf16.mxu0 0
      %2640 = vmatpush1.bf16.msra.mxu0 0
      %2641 = vmatprep.subr.bf16.mxu0 0
      %2642 = vmatpush1.bf16.msra.mxu0 0
      %2643 = vmatprep.subr.bf16.mxu0 0
      %2644 = vmatpush1.bf16.msra.mxu0 0
      %2645 = vmatprep.subr.bf16.mxu0 0
      %2646 = vmatpush1.bf16.msra.mxu0 0
      %2647 = vmatprep.subr.bf16.mxu0 0
      %2648 = vmatpush1.bf16.msra.mxu0 0
      %2649 = vmatprep.subr.bf16.mxu0 0
      %2650 = vmatpush1.bf16.msra.mxu0 0
      %2651 = vmatprep.subr.bf16.mxu0 0
      %2652 = vmatpush1.bf16.msra.mxu0 0
      %2653 = vmatprep.subr.bf16.mxu0 0
      %2654 = vmatpush1.bf16.msra.mxu0 0
      %2655 = vmatprep.subr.bf16.mxu0 0
      %2656 = vmatpush1.bf16.msra.mxu0 0
      %2657 = vmatprep.subr.bf16.mxu0 0
      %2658 = vmatpush1.bf16.msra.mxu0 0
      %2659 = vmatprep.subr.bf16.mxu0 0
      %2660 = vmatpush1.bf16.msra.mxu0 0
      %2661 = vmatprep.subr.bf16.mxu0 0
      %2662 = vmatpush1.bf16.msra.mxu0 0
      %2663 = vmatprep.mubr.bf16.mxu0 0
      %2664 = vmatmul.mubr.bf16.gmra.mrb[0].mxu0 %v741
      %v2665 = vpop.f32.mrb[0].mxu0
      %v2666 = vadd.f32 %v2617, %v2665
      %v2667 = vpop.f32.mrb[0].mxu0
      %v2668 = vpop.f32.mrb[0].mxu0
      %v2669 = vadd.f32 %v2617, %v2668
      %v2670 = vpop.f32.mrb[0].mxu0
      %2671 = vmatprep.mubr.bf16.mxu0 0
      %2672 = vmatmul.mubr.bf16.gmra.mrb[0].mxu0 %v744
      %v2673 = vpop.f32.mrb[0].mxu0
      %v2674 = vadd.f32 %v2617, %v2673
      %v2675 = vpop.f32.mrb[0].mxu0
      %v2676 = vpop.f32.mrb[0].mxu0
      %v2677 = vadd.f32 %v2617, %v2676
      %v2678 = vpop.f32.mrb[0].mxu0
      %2679 = vmatprep.mubr.bf16.mxu0 0
      %2680 = vmatmul.mubr.bf16.gmra.mrb[0].mxu0 %v747
      %v2681 = vpop.f32.mrb[0].mxu0
      %v2682 = vadd.f32 %v2617, %v2681
      %v2683 = vpop.f32.mrb[0].mxu0
      %v2684 = vpop.f32.mrb[0].mxu0
      %v2685 = vadd.f32 %v2617, %v2684
      %v2686 = vpop.f32.mrb[0].mxu0
      %2687 = vmatprep.mubr.bf16.mxu0 0
      %2688 = vmatmul.mubr.bf16.gmra.mrb[0].mxu0 %v750
      %v2689 = vpop.f32.mrb[0].mxu0
      %v2690 = vadd.f32 %v2617, %v2689
      %v2691 = vpop.f32.mrb[0].mxu0
      %v2692 = vpop.f32.mrb[0].mxu0
      %v2693 = vadd.f32 %v2617, %v2692
      %v2694 = vpop.f32.mrb[0].mxu0
      %2695 = vmatprep.mubr.bf16.mxu0 0
      %2696 = vmatmul.mubr.bf16.gmra.mrb[0].mxu0 %v753
      %v2697 = vpop.f32.mrb[0].mxu0
      %v2698 = vadd.f32 %v2617, %v2697
      %v2699 = vpop.f32.mrb[0].mxu0
      %v2700 = vpop.f32.mrb[0].mxu0
      %v2701 = vadd.f32 %v2617, %v2700
      %v2702 = vpop.f32.mrb[0].mxu0
      %2703 = vmatprep.mubr.bf16.mxu0 0
      %2704 = vmatmul.mubr.bf16.gmra.mrb[0].mxu0 %v756
      %v2705 = vpop.f32.mrb[0].mxu0
      %v2706 = vadd.f32 %v2617, %v2705
      %v2707 = vpop.f32.mrb[0].mxu0
      %v2708 = vpop.f32.mrb[0].mxu0
      %v2709 = vadd.f32 %v2617, %v2708
      %v2710 = vpop.f32.mrb[0].mxu0
      %2711 = vmatprep.mubr.bf16.mxu0 0
      %2712 = vmatmul.mubr.bf16.gmra.mrb[0].mxu0 %v759
      %v2713 = vpop.f32.mrb[0].mxu0
      %v2714 = vadd.f32 %v2617, %v2713
      %v2715 = vpop.f32.mrb[0].mxu0
      %v2716 = vpop.f32.mrb[0].mxu0
      %v2717 = vadd.f32 %v2617, %v2716
      %v2718 = vpop.f32.mrb[0].mxu0
      %2719 = vmatprep.mubr.bf16.mxu0 0
      %2720 = vmatmul.mubr.bf16.gmra.mrb[0].mxu0 %v762
      %v2721 = vpop.f32.mrb[0].mxu0
      %v2722 = vadd.f32 %v2617, %v2721
      %v2723 = vpop.f32.mrb[0].mxu0
      %v2724 = vpop.f32.mrb[0].mxu0
      %v2725 = vadd.f32 %v2617, %v2724
      %v2726 = vpop.f32.mrb[0].mxu0
      %2727 = vdwg.mxu0
      %s2728 = scalar_lea.vmem %s5, 32
      %v2729 = vld [vmem:[%s2728] sm:$0xf]
      %v2730 = vld [vmem:[%s2728 + $0x4] sm:$0xf]
      %v2731 = vld [vmem:[%s2728 + $0x8] sm:$0xf]
      %v2732 = vld [vmem:[%s2728 + $0xc] sm:$0xf]
      %s2733 = scalar_lea.vmem %s12, 2
      %v2734 = vld [vmem:[%s2733] sm:$0x1]
      %v2736 = vlaneseq
      %v2737 = vshrl.u32 %v2736, 7
      %v2738 = vsub.s32 0, %v2737
      %v2739 = vrot.slane %v2734, %v2738
      %v2745 = vunpack.c.l.b16 %v2729
      %v2746 = vunpack.c.l.b16 %v2730
      %v2747 = vunpack.c.l.b16 %v2731
      %v2748 = vunpack.c.l.b16 %v2732
      %v2749 = vpack.c.b16 %v2746, %v2745
      %v2750 = vpack.c.b16 %v2748, %v2747
      %2753 = vmatprep.subr.bf16.mxu0 0
      %2754 = vmatpush1.bf16.msra.mxu0 %v2749
      %2755 = vmatprep.subr.bf16.mxu0 0
      %2756 = vmatpush1.bf16.msra.mxu0 %v2750
      %2757 = vmatprep.subr.bf16.mxu0 0
      %2758 = vmatpush1.bf16.msra.mxu0 0
      %2759 = vmatprep.subr.bf16.mxu0 0
      %2760 = vmatpush1.bf16.msra.mxu0 0
      %2761 = vmatprep.subr.bf16.mxu0 0
      %2762 = vmatpush1.bf16.msra.mxu0 0
      %2763 = vmatprep.subr.bf16.mxu0 0
      %2764 = vmatpush1.bf16.msra.mxu0 0
      %2765 = vmatprep.subr.bf16.mxu0 0
      %2766 = vmatpush1.bf16.msra.mxu0 0
      %2767 = vmatprep.subr.bf16.mxu0 0
      %2768 = vmatpush1.bf16.msra.mxu0 0
      %2769 = vmatprep.subr.bf16.mxu0 0
      %2770 = vmatpush1.bf16.msra.mxu0 0
      %2771 = vmatprep.subr.bf16.mxu0 0
      %2772 = vmatpush1.bf16.msra.mxu0 0
      %2773 = vmatprep.subr.bf16.mxu0 0
      %2774 = vmatpush1.bf16.msra.mxu0 0
      %2775 = vmatprep.subr.bf16.mxu0 0
      %2776 = vmatpush1.bf16.msra.mxu0 0
      %2777 = vmatprep.subr.bf16.mxu0 0
      %2778 = vmatpush1.bf16.msra.mxu0 0
      %2779 = vmatprep.subr.bf16.mxu0 0
      %2780 = vmatpush1.bf16.msra.mxu0 0
      %2781 = vmatprep.subr.bf16.mxu0 0
      %2782 = vmatpush1.bf16.msra.mxu0 0
      %2783 = vmatprep.subr.bf16.mxu0 0
      %2784 = vmatpush1.bf16.msra.mxu0 0
      %2785 = vmatprep.mubr.bf16.mxu0 0
      %2786 = vmatmul.mubr.bf16.gmra.mrb[0].mxu0 %v741
      %v2787 = vpop.f32.mrb[0].mxu0
      %v2788 = vadd.f32 %v2739, %v2787
      %v2789 = vpop.f32.mrb[0].mxu0
      %v2790 = vpop.f32.mrb[0].mxu0
      %v2791 = vadd.f32 %v2739, %v2790
      %v2792 = vpop.f32.mrb[0].mxu0
      %2793 = vmatprep.mubr.bf16.mxu0 0
      %2794 = vmatmul.mubr.bf16.gmra.mrb[0].mxu0 %v744
      %v2795 = vpop.f32.mrb[0].mxu0
      %v2796 = vadd.f32 %v2739, %v2795
      %v2797 = vpop.f32.mrb[0].mxu0
      %v2798 = vpop.f32.mrb[0].mxu0
      %v2799 = vadd.f32 %v2739, %v2798
      %v2800 = vpop.f32.mrb[0].mxu0
      %2801 = vmatprep.mubr.bf16.mxu0 0
      %2802 = vmatmul.mubr.bf16.gmra.mrb[0].mxu0 %v747
      %v2803 = vpop.f32.mrb[0].mxu0
      %v2804 = vadd.f32 %v2739, %v2803
      %v2805 = vpop.f32.mrb[0].mxu0
      %v2806 = vpop.f32.mrb[0].mxu0
      %v2807 = vadd.f32 %v2739, %v2806
      %v2808 = vpop.f32.mrb[0].mxu0
      %2809 = vmatprep.mubr.bf16.mxu0 0
      %2810 = vmatmul.mubr.bf16.gmra.mrb[0].mxu0 %v750
      %v2811 = vpop.f32.mrb[0].mxu0
      %v2812 = vadd.f32 %v2739, %v2811
      %v2813 = vpop.f32.mrb[0].mxu0
      %v2814 = vpop.f32.mrb[0].mxu0
      %v2815 = vadd.f32 %v2739, %v2814
      %v2816 = vpop.f32.mrb[0].mxu0
      %2817 = vmatprep.mubr.bf16.mxu0 0
      %2818 = vmatmul.mubr.bf16.gmra.mrb[0].mxu0 %v753
      %v2819 = vpop.f32.mrb[0].mxu0
      %v2820 = vadd.f32 %v2739, %v2819
      %v2821 = vpop.f32.mrb[0].mxu0
      %v2822 = vpop.f32.mrb[0].mxu0
      %v2823 = vadd.f32 %v2739, %v2822
      %v2824 = vpop.f32.mrb[0].mxu0
      %2825 = vmatprep.mubr.bf16.mxu0 0
      %2826 = vmatmul.mubr.bf16.gmra.mrb[0].mxu0 %v756
      %v2827 = vpop.f32.mrb[0].mxu0
      %v2828 = vadd.f32 %v2739, %v2827
      %v2829 = vpop.f32.mrb[0].mxu0
      %v2830 = vpop.f32.mrb[0].mxu0
      %v2831 = vadd.f32 %v2739, %v2830
      %v2832 = vpop.f32.mrb[0].mxu0
      %2833 = vmatprep.mubr.bf16.mxu0 0
      %2834 = vmatmul.mubr.bf16.gmra.mrb[0].mxu0 %v759
      %v2835 = vpop.f32.mrb[0].mxu0
      %v2836 = vadd.f32 %v2739, %v2835
      %v2837 = vpop.f32.mrb[0].mxu0
      %v2838 = vpop.f32.mrb[0].mxu0
      %v2839 = vadd.f32 %v2739, %v2838
      %v2840 = vpop.f32.mrb[0].mxu0
      %2841 = vmatprep.mubr.bf16.mxu0 0
      %2842 = vmatmul.mubr.bf16.gmra.mrb[0].mxu0 %v762
      %v2843 = vpop.f32.mrb[0].mxu0
      %v2844 = vadd.f32 %v2739, %v2843
      %v2845 = vpop.f32.mrb[0].mxu0
      %v2846 = vpop.f32.mrb[0].mxu0
      %v2847 = vadd.f32 %v2739, %v2846
      %v2848 = vpop.f32.mrb[0].mxu0
      %2849 = vdwg.mxu0
      %v2850 = vmul.f32 %v2544, 0.35355338
      %v2851 = vmul.f32 %v2547, 0.35355338
      %v2852 = vmul.f32 %v2552, 0.35355338
      %v2853 = vmul.f32 %v2555, 0.35355338
      %v2854 = vmul.f32 %v2560, 0.35355338
      %v2855 = vmul.f32 %v2563, 0.35355338
      %v2856 = vmul.f32 %v2568, 0.35355338
      %v2857 = vmul.f32 %v2571, 0.35355338
      %v2858 = vmul.f32 %v2576, 0.35355338
      %v2859 = vmul.f32 %v2579, 0.35355338
      %v2860 = vmul.f32 %v2584, 0.35355338
      %v2861 = vmul.f32 %v2587, 0.35355338
      %v2862 = vmul.f32 %v2592, 0.35355338
      %v2863 = vmul.f32 %v2595, 0.35355338
      %v2864 = vmul.f32 %v2600, 0.35355338
      %v2865 = vmul.f32 %v2603, 0.35355338
      %v2866 = vpack.c.bf16 %v2851, %v2850
      %v2867 = vpack.c.bf16 %v2853, %v2852
      %v2868 = vpack.c.bf16 %v2855, %v2854
      %v2869 = vpack.c.bf16 %v2857, %v2856
      %v2870 = vpack.c.bf16 %v2859, %v2858
      %v2871 = vpack.c.bf16 %v2861, %v2860
      %v2872 = vpack.c.bf16 %v2863, %v2862
      %v2873 = vpack.c.bf16 %v2865, %v2864
      %v2874 = vpack.c.bf16 %v2669, %v2666
      %v2875 = vpack.c.bf16 %v2677, %v2674
      %v2876 = vpack.c.bf16 %v2685, %v2682
      %v2877 = vpack.c.bf16 %v2693, %v2690
      %v2878 = vpack.c.bf16 %v2701, %v2698
      %v2879 = vpack.c.bf16 %v2709, %v2706
      %v2880 = vpack.c.bf16 %v2717, %v2714
      %v2881 = vpack.c.bf16 %v2725, %v2722
      %v2882 = vpack.c.bf16 %v2791, %v2788
      %v2883 = vpack.c.bf16 %v2799, %v2796
      %v2884 = vpack.c.bf16 %v2807, %v2804
      %v2885 = vpack.c.bf16 %v2815, %v2812
      %v2886 = vpack.c.bf16 %v2823, %v2820
      %v2887 = vpack.c.bf16 %v2831, %v2828
      %v2888 = vpack.c.bf16 %v2839, %v2836
      %v2889 = vpack.c.bf16 %v2847, %v2844
      %v2891 = vsel %vm1021, %v2866, 0
      %v2894 = vsel %vm1021, %v2867, 0
      %v2897 = vsel %vm1021, %v2868, 0
      %v2900 = vsel %vm1021, %v2869, 0
      %v2903 = vsel %vm1021, %v2870, 0
      %v2906 = vsel %vm1021, %v2871, 0
      %v2909 = vsel %vm1021, %v2872, 0
      %v2912 = vsel %vm1021, %v2873, 0
      %v2915 = vsel %vm1021, %v2874, 0
      %v2918 = vsel %vm1021, %v2875, 0
      %v2921 = vsel %vm1021, %v2876, 0
      %v2924 = vsel %vm1021, %v2877, 0
      %v2927 = vsel %vm1021, %v2878, 0
      %v2930 = vsel %vm1021, %v2879, 0
      %v2933 = vsel %vm1021, %v2880, 0
      %v2936 = vsel %vm1021, %v2881, 0
      %2938 = vmatprep.subr.bf16.mxu0 0
      %2939 = vmatpush1.bf16.xpose.msra.mxu0 %v2915
      %2940 = vmatprep.subr.bf16.mxu0 0
      %2941 = vmatpush1.bf16.xpose.msra.mxu0 %v2918
      %2942 = vmatprep.subr.bf16.mxu0 0
      %2943 = vmatpush1.bf16.xpose.msra.mxu0 %v2921
      %2944 = vmatprep.subr.bf16.mxu0 0
      %2945 = vmatpush1.bf16.xpose.msra.mxu0 %v2924
      %2946 = vmatprep.subr.bf16.mxu0 0
      %2947 = vmatpush1.bf16.xpose.msra.mxu0 %v2927
      %2948 = vmatprep.subr.bf16.mxu0 0
      %2949 = vmatpush1.bf16.xpose.msra.mxu0 %v2930
      %2950 = vmatprep.subr.bf16.mxu0 0
      %2951 = vmatpush1.bf16.xpose.msra.mxu0 %v2933
      %2952 = vmatprep.subr.bf16.mxu0 0
      %2953 = vmatpush1.bf16.xpose.msra.mxu0 %v2936
      %2954 = vmatprep.subr.bf16.mxu0 0
      %2955 = vmatpush1.bf16.xpose.msra.mxu0 0
      %2956 = vmatprep.subr.bf16.mxu0 0
      %2957 = vmatpush1.bf16.xpose.msra.mxu0 0
      %2958 = vmatprep.subr.bf16.mxu0 0
      %2959 = vmatpush1.bf16.xpose.msra.mxu0 0
      %2960 = vmatprep.subr.bf16.mxu0 0
      %2961 = vmatpush1.bf16.xpose.msra.mxu0 0
      %2962 = vmatprep.subr.bf16.mxu0 0
      %2963 = vmatpush1.bf16.xpose.msra.mxu0 0
      %2964 = vmatprep.subr.bf16.mxu0 0
      %2965 = vmatpush1.bf16.xpose.msra.mxu0 0
      %2966 = vmatprep.subr.bf16.mxu0 0
      %2967 = vmatpush1.bf16.xpose.msra.mxu0 0
      %2968 = vmatprep.subr.bf16.mxu0 0
      %2969 = vmatpush1.bf16.xpose.msra.mxu0 0
      %2970 = vmatprep.mubr.bf16.mxu0 0
      %2971 = vmatmul.mubr.bf16.gmra.mrb[0].mxu0 %v2891
      %v2972 = vpop.f32.mrb[0].mxu0
      %v2973 = vadd.f32 %v571, %v2972
      %v2974 = vpop.f32.mrb[0].mxu0
      %v2975 = vpop.f32.mrb[0].mxu0
      %v2976 = vadd.f32 %v571, %v2975
      %v2977 = vpop.f32.mrb[0].mxu0
      %2978 = vmatprep.mubr.bf16.mxu0 0
      %2979 = vmatmul.mubr.bf16.gmra.mrb[0].mxu0 %v2894
      %v2980 = vpop.f32.mrb[0].mxu0
      %v2981 = vadd.f32 %v571, %v2980
      %v2982 = vpop.f32.mrb[0].mxu0
      %v2983 = vpop.f32.mrb[0].mxu0
      %v2984 = vadd.f32 %v571, %v2983
      %v2985 = vpop.f32.mrb[0].mxu0
      %2986 = vmatprep.mubr.bf16.mxu0 0
      %2987 = vmatmul.mubr.bf16.gmra.mrb[0].mxu0 %v2897
      %v2988 = vpop.f32.mrb[0].mxu0
      %v2989 = vadd.f32 %v571, %v2988
      %v2990 = vpop.f32.mrb[0].mxu0
      %v2991 = vpop.f32.mrb[0].mxu0
      %v2992 = vadd.f32 %v571, %v2991
      %v2993 = vpop.f32.mrb[0].mxu0
      %2994 = vmatprep.mubr.bf16.mxu0 0
      %2995 = vmatmul.mubr.bf16.gmra.mrb[0].mxu0 %v2900
      %v2996 = vpop.f32.mrb[0].mxu0
      %v2997 = vadd.f32 %v571, %v2996
      %v2998 = vpop.f32.mrb[0].mxu0
      %v2999 = vpop.f32.mrb[0].mxu0
      %v3000 = vadd.f32 %v571, %v2999
      %v3001 = vpop.f32.mrb[0].mxu0
      %3002 = vmatprep.mubr.bf16.mxu0 0
      %3003 = vmatmul.mubr.bf16.gmra.mrb[0].mxu0 %v2903
      %v3004 = vpop.f32.mrb[0].mxu0
      %v3005 = vadd.f32 %v571, %v3004
      %v3006 = vpop.f32.mrb[0].mxu0
      %v3007 = vpop.f32.mrb[0].mxu0
      %v3008 = vadd.f32 %v571, %v3007
      %v3009 = vpop.f32.mrb[0].mxu0
      %3010 = vmatprep.mubr.bf16.mxu0 0
      %3011 = vmatmul.mubr.bf16.gmra.mrb[0].mxu0 %v2906
      %v3012 = vpop.f32.mrb[0].mxu0
      %v3013 = vadd.f32 %v571, %v3012
      %v3014 = vpop.f32.mrb[0].mxu0
      %v3015 = vpop.f32.mrb[0].mxu0
      %v3016 = vadd.f32 %v571, %v3015
      %v3017 = vpop.f32.mrb[0].mxu0
      %3018 = vmatprep.mubr.bf16.mxu0 0
      %3019 = vmatmul.mubr.bf16.gmra.mrb[0].mxu0 %v2909
      %v3020 = vpop.f32.mrb[0].mxu0
      %v3021 = vadd.f32 %v571, %v3020
      %v3022 = vpop.f32.mrb[0].mxu0
      %v3023 = vpop.f32.mrb[0].mxu0
      %v3024 = vadd.f32 %v571, %v3023
      %v3025 = vpop.f32.mrb[0].mxu0
      %3026 = vmatprep.mubr.bf16.mxu0 0
      %3027 = vmatmul.mubr.bf16.gmra.mrb[0].mxu0 %v2912
      %v3028 = vpop.f32.mrb[0].mxu0
      %v3029 = vadd.f32 %v571, %v3028
      %v3030 = vpop.f32.mrb[0].mxu0
      %v3031 = vpop.f32.mrb[0].mxu0
      %v3032 = vadd.f32 %v571, %v3031
      %v3033 = vpop.f32.mrb[0].mxu0
      %3034 = vdwg.mxu0
      %3035 = vmax.xlane.f32.xlu0 %v2973
      %v3036 = vpop.xlane.xlu0 %3035
      %3037 = vmax.xlane.f32.xlu0 %v2976
      %v3038 = vpop.xlane.xlu0 %3037
      %3039 = vmax.xlane.f32.xlu0 %v2981
      %v3040 = vpop.xlane.xlu0 %3039
      %3041 = vmax.xlane.f32.xlu0 %v2984
      %v3042 = vpop.xlane.xlu0 %3041
      %3043 = vmax.xlane.f32.xlu0 %v2989
      %v3044 = vpop.xlane.xlu0 %3043
      %3045 = vmax.xlane.f32.xlu0 %v2992
      %v3046 = vpop.xlane.xlu0 %3045
      %3047 = vmax.xlane.f32.xlu0 %v2997
      %v3048 = vpop.xlane.xlu0 %3047
      %3049 = vmax.xlane.f32.xlu0 %v3000
      %v3050 = vpop.xlane.xlu0 %3049
      %3051 = vmax.xlane.f32.xlu0 %v3005
      %v3052 = vpop.xlane.xlu0 %3051
      %3053 = vmax.xlane.f32.xlu0 %v3008
      %v3054 = vpop.xlane.xlu0 %3053
      %3055 = vmax.xlane.f32.xlu0 %v3013
      %v3056 = vpop.xlane.xlu0 %3055
      %3057 = vmax.xlane.f32.xlu0 %v3016
      %v3058 = vpop.xlane.xlu0 %3057
      %3059 = vmax.xlane.f32.xlu0 %v3021
      %v3060 = vpop.xlane.xlu0 %3059
      %3061 = vmax.xlane.f32.xlu0 %v3024
      %v3062 = vpop.xlane.xlu0 %3061
      %3063 = vmax.xlane.f32.xlu0 %v3029
      %v3064 = vpop.xlane.xlu0 %3063
      %3065 = vmax.xlane.f32.xlu0 %v3032
      %v3066 = vpop.xlane.xlu0 %3065
      %v3067 = vsub.f32 %v2973, %v3036
      %v3068 = vsub.f32 %v2976, %v3038
      %v3069 = vsub.f32 %v2981, %v3040
      %v3070 = vsub.f32 %v2984, %v3042
      %v3071 = vsub.f32 %v2989, %v3044
      %v3072 = vsub.f32 %v2992, %v3046
      %v3073 = vsub.f32 %v2997, %v3048
      %v3074 = vsub.f32 %v3000, %v3050
      %v3075 = vsub.f32 %v3005, %v3052
      %v3076 = vsub.f32 %v3008, %v3054
      %v3077 = vsub.f32 %v3013, %v3056
      %v3078 = vsub.f32 %v3016, %v3058
      %v3079 = vsub.f32 %v3021, %v3060
      %v3080 = vsub.f32 %v3024, %v3062
      %v3081 = vsub.f32 %v3029, %v3064
      %v3082 = vsub.f32 %v3032, %v3066
      %v3083 = vmul.f32 %v3067, 1.442695
      %v3084 = vpow.pop %v3083
      %v3085 = vmul.f32 %v3068, 1.442695
      %v3086 = vpow.pop %v3085
      %v3087 = vmul.f32 %v3069, 1.442695
      %v3088 = vpow.pop %v3087
      %v3089 = vmul.f32 %v3070, 1.442695
      %v3090 = vpow.pop %v3089
      %v3091 = vmul.f32 %v3071, 1.442695
      %v3092 = vpow.pop %v3091
      %v3093 = vmul.f32 %v3072, 1.442695
      %v3094 = vpow.pop %v3093
      %v3095 = vmul.f32 %v3073, 1.442695
      %v3096 = vpow.pop %v3095
      %v3097 = vmul.f32 %v3074, 1.442695
      %v3098 = vpow.pop %v3097
      %v3099 = vmul.f32 %v3075, 1.442695
      %v3100 = vpow.pop %v3099
      %v3101 = vmul.f32 %v3076, 1.442695
      %v3102 = vpow.pop %v3101
      %v3103 = vmul.f32 %v3077, 1.442695
      %v3104 = vpow.pop %v3103
      %v3105 = vmul.f32 %v3078, 1.442695
      %v3106 = vpow.pop %v3105
      %v3107 = vmul.f32 %v3079, 1.442695
      %v3108 = vpow.pop %v3107
      %v3109 = vmul.f32 %v3080, 1.442695
      %v3110 = vpow.pop %v3109
      %v3111 = vmul.f32 %v3081, 1.442695
      %v3112 = vpow.pop %v3111
      %v3113 = vmul.f32 %v3082, 1.442695
      %v3114 = vpow.pop %v3113
      %3115 = vadd.xlane.f32.xlu0 %v3084
      %v3116 = vpop.xlane.xlu0 %3115
      %3117 = vadd.xlane.f32.xlu0 %v3086
      %v3118 = vpop.xlane.xlu0 %3117
      %3119 = vadd.xlane.f32.xlu0 %v3088
      %v3120 = vpop.xlane.xlu0 %3119
      %3121 = vadd.xlane.f32.xlu0 %v3090
      %v3122 = vpop.xlane.xlu0 %3121
      %3123 = vadd.xlane.f32.xlu0 %v3092
      %v3124 = vpop.xlane.xlu0 %3123
      %3125 = vadd.xlane.f32.xlu0 %v3094
      %v3126 = vpop.xlane.xlu0 %3125
      %3127 = vadd.xlane.f32.xlu0 %v3096
      %v3128 = vpop.xlane.xlu0 %3127
      %3129 = vadd.xlane.f32.xlu0 %v3098
      %v3130 = vpop.xlane.xlu0 %3129
      %3131 = vadd.xlane.f32.xlu0 %v3100
      %v3132 = vpop.xlane.xlu0 %3131
      %3133 = vadd.xlane.f32.xlu0 %v3102
      %v3134 = vpop.xlane.xlu0 %3133
      %3135 = vadd.xlane.f32.xlu0 %v3104
      %v3136 = vpop.xlane.xlu0 %3135
      %3137 = vadd.xlane.f32.xlu0 %v3106
      %v3138 = vpop.xlane.xlu0 %3137
      %3139 = vadd.xlane.f32.xlu0 %v3108
      %v3140 = vpop.xlane.xlu0 %3139
      %3141 = vadd.xlane.f32.xlu0 %v3110
      %v3142 = vpop.xlane.xlu0 %3141
      %3143 = vadd.xlane.f32.xlu0 %v3112
      %v3144 = vpop.xlane.xlu0 %3143
      %3145 = vadd.xlane.f32.xlu0 %v3114
      %v3146 = vpop.xlane.xlu0 %3145
      %v3147 = vpack.c.bf16 %v3086, %v3084
      %v3148 = vpack.c.bf16 %v3090, %v3088
      %v3149 = vpack.c.bf16 %v3094, %v3092
      %v3150 = vpack.c.bf16 %v3098, %v3096
      %v3151 = vpack.c.bf16 %v3102, %v3100
      %v3152 = vpack.c.bf16 %v3106, %v3104
      %v3153 = vpack.c.bf16 %v3110, %v3108
      %v3154 = vpack.c.bf16 %v3114, %v3112
      %3155 = vmatprep.subr.bf16.mxu0 0
      %3156 = vmatpush1.bf16.msra.mxu0 %v2882
      %3157 = vmatprep.subr.bf16.mxu0 0
      %3158 = vmatpush1.bf16.msra.mxu0 %v2883
      %3159 = vmatprep.subr.bf16.mxu0 0
      %3160 = vmatpush1.bf16.msra.mxu0 %v2884
      %3161 = vmatprep.subr.bf16.mxu0 0
      %3162 = vmatpush1.bf16.msra.mxu0 %v2885
      %3163 = vmatprep.subr.bf16.mxu0 0
      %3164 = vmatpush1.bf16.msra.mxu0 %v2886
      %3165 = vmatprep.subr.bf16.mxu0 0
      %3166 = vmatpush1.bf16.msra.mxu0 %v2887
      %3167 = vmatprep.subr.bf16.mxu0 0
      %3168 = vmatpush1.bf16.msra.mxu0 %v2888
      %3169 = vmatprep.subr.bf16.mxu0 0
      %3170 = vmatpush1.bf16.msra.mxu0 %v2889
      %3171 = vmatprep.subr.bf16.mxu0 0
      %3172 = vmatpush1.bf16.msra.mxu0 0
      %3173 = vmatprep.subr.bf16.mxu0 0
      %3174 = vmatpush1.bf16.msra.mxu0 0
      %3175 = vmatprep.subr.bf16.mxu0 0
      %3176 = vmatpush1.bf16.msra.mxu0 0
      %3177 = vmatprep.subr.bf16.mxu0 0
      %3178 = vmatpush1.bf16.msra.mxu0 0
      %3179 = vmatprep.subr.bf16.mxu0 0
      %3180 = vmatpush1.bf16.msra.mxu0 0
      %3181 = vmatprep.subr.bf16.mxu0 0
      %3182 = vmatpush1.bf16.msra.mxu0 0
      %3183 = vmatprep.subr.bf16.mxu0 0
      %3184 = vmatpush1.bf16.msra.mxu0 0
      %3185 = vmatprep.subr.bf16.mxu0 0
      %3186 = vmatpush1.bf16.msra.mxu0 0
      %3187 = vmatprep.mubr.bf16.mxu0 0
      %3188 = vmatmul.mubr.bf16.gmra.mrb[0].mxu0 %v3147
      %v3189 = vpop.f32.mrb[0].mxu0
      %v3190 = vadd.f32 0.0, %v3189
      %v3191 = vpop.f32.mrb[0].mxu0
      %v3192 = vpop.f32.mrb[0].mxu0
      %v3193 = vadd.f32 0.0, %v3192
      %v3194 = vpop.f32.mrb[0].mxu0
      %3195 = vmatprep.mubr.bf16.mxu0 0
      %3196 = vmatmul.mubr.bf16.gmra.mrb[0].mxu0 %v3148
      %v3197 = vpop.f32.mrb[0].mxu0
      %v3198 = vadd.f32 0.0, %v3197
      %v3199 = vpop.f32.mrb[0].mxu0
      %v3200 = vpop.f32.mrb[0].mxu0
      %v3201 = vadd.f32 0.0, %v3200
      %v3202 = vpop.f32.mrb[0].mxu0
      %3203 = vmatprep.mubr.bf16.mxu0 0
      %3204 = vmatmul.mubr.bf16.gmra.mrb[0].mxu0 %v3149
      %v3205 = vpop.f32.mrb[0].mxu0
      %v3206 = vadd.f32 0.0, %v3205
      %v3207 = vpop.f32.mrb[0].mxu0
      %v3208 = vpop.f32.mrb[0].mxu0
      %v3209 = vadd.f32 0.0, %v3208
      %v3210 = vpop.f32.mrb[0].mxu0
      %3211 = vmatprep.mubr.bf16.mxu0 0
      %3212 = vmatmul.mubr.bf16.gmra.mrb[0].mxu0 %v3150
      %v3213 = vpop.f32.mrb[0].mxu0
      %v3214 = vadd.f32 0.0, %v3213
      %v3215 = vpop.f32.mrb[0].mxu0
      %v3216 = vpop.f32.mrb[0].mxu0
      %v3217 = vadd.f32 0.0, %v3216
      %v3218 = vpop.f32.mrb[0].mxu0
      %3219 = vmatprep.mubr.bf16.mxu0 0
      %3220 = vmatmul.mubr.bf16.gmra.mrb[0].mxu0 %v3151
      %v3221 = vpop.f32.mrb[0].mxu0
      %v3222 = vadd.f32 0.0, %v3221
      %v3223 = vpop.f32.mrb[0].mxu0
      %v3224 = vpop.f32.mrb[0].mxu0
      %v3225 = vadd.f32 0.0, %v3224
      %v3226 = vpop.f32.mrb[0].mxu0
      %3227 = vmatprep.mubr.bf16.mxu0 0
      %3228 = vmatmul.mubr.bf16.gmra.mrb[0].mxu0 %v3152
      %v3229 = vpop.f32.mrb[0].mxu0
      %v3230 = vadd.f32 0.0, %v3229
      %v3231 = vpop.f32.mrb[0].mxu0
      %v3232 = vpop.f32.mrb[0].mxu0
      %v3233 = vadd.f32 0.0, %v3232
      %v3234 = vpop.f32.mrb[0].mxu0
      %3235 = vmatprep.mubr.bf16.mxu0 0
      %3236 = vmatmul.mubr.bf16.gmra.mrb[0].mxu0 %v3153
      %v3237 = vpop.f32.mrb[0].mxu0
      %v3238 = vadd.f32 0.0, %v3237
      %v3239 = vpop.f32.mrb[0].mxu0
      %v3240 = vpop.f32.mrb[0].mxu0
      %v3241 = vadd.f32 0.0, %v3240
      %v3242 = vpop.f32.mrb[0].mxu0
      %3243 = vmatprep.mubr.bf16.mxu0 0
      %3244 = vmatmul.mubr.bf16.gmra.mrb[0].mxu0 %v3154
      %v3245 = vpop.f32.mrb[0].mxu0
      %v3246 = vadd.f32 0.0, %v3245
      %v3247 = vpop.f32.mrb[0].mxu0
      %v3248 = vpop.f32.mrb[0].mxu0
      %v3249 = vadd.f32 0.0, %v3248
      %v3250 = vpop.f32.mrb[0].mxu0
      %3251 = vdwg.mxu0
      %v3252 = vrcp.pop %v3116
      %v3253 = vrcp.pop %v3118
      %v3254 = vrcp.pop %v3120
      %v3255 = vrcp.pop %v3122
      %v3256 = vrcp.pop %v3124
      %v3257 = vrcp.pop %v3126
      %v3258 = vrcp.pop %v3128
      %v3259 = vrcp.pop %v3130
      %v3260 = vrcp.pop %v3132
      %v3261 = vrcp.pop %v3134
      %v3262 = vrcp.pop %v3136
      %v3263 = vrcp.pop %v3138
      %v3264 = vrcp.pop %v3140
      %v3265 = vrcp.pop %v3142
      %v3266 = vrcp.pop %v3144
      %v3267 = vrcp.pop %v3146
      %v3268 = vmul.f32 %v3190, %v3252
      %v3269 = vmul.f32 %v3193, %v3253
      %v3270 = vmul.f32 %v3198, %v3254
      %v3271 = vmul.f32 %v3201, %v3255
      %v3272 = vmul.f32 %v3206, %v3256
      %v3273 = vmul.f32 %v3209, %v3257
      %v3274 = vmul.f32 %v3214, %v3258
      %v3275 = vmul.f32 %v3217, %v3259
      %v3276 = vmul.f32 %v3222, %v3260
      %v3277 = vmul.f32 %v3225, %v3261
      %v3278 = vmul.f32 %v3230, %v3262
      %v3279 = vmul.f32 %v3233, %v3263
      %v3280 = vmul.f32 %v3238, %v3264
      %v3281 = vmul.f32 %v3241, %v3265
      %v3282 = vmul.f32 %v3246, %v3266
      %v3283 = vmul.f32 %v3249, %v3267
      %v3284 = vpack.c.bf16 %v3269, %v3268
      %v3285 = vpack.c.bf16 %v3271, %v3270
      %v3286 = vpack.c.bf16 %v3273, %v3272
      %v3287 = vpack.c.bf16 %v3275, %v3274
      %v3288 = vpack.c.bf16 %v3277, %v3276
      %v3289 = vpack.c.bf16 %v3279, %v3278
      %v3290 = vpack.c.bf16 %v3281, %v3280
      %v3291 = vpack.c.bf16 %v3283, %v3282
      %s3292 = scalar_lea.vmem %s6, 8
      %v3293 = vld [vmem:[%s3292] sm:$0xf]
      %v3295 = vsel %vm1021, %v3284, 0
      %v3298 = vsel %vm1021, %v3285, 0
      %v3301 = vsel %vm1021, %v3286, 0
      %v3304 = vsel %vm1021, %v3287, 0
      %v3307 = vsel %vm1021, %v3288, 0
      %v3310 = vsel %vm1021, %v3289, 0
      %v3313 = vsel %vm1021, %v3290, 0
      %v3316 = vsel %vm1021, %v3291, 0
      %v3319 = vsel %vm2259, %v3293, 0
      %3321 = vmatprep.subr.bf16.mxu0 0
      %3322 = vmatpush1.bf16.msra.mxu0 %v3319
      %3323 = vmatprep.subr.bf16.mxu0 0
      %3324 = vmatpush1.bf16.msra.mxu0 0
      %3325 = vmatprep.subr.bf16.mxu0 0
      %3326 = vmatpush1.bf16.msra.mxu0 0
      %3327 = vmatprep.subr.bf16.mxu0 0
      %3328 = vmatpush1.bf16.msra.mxu0 0
      %3329 = vmatprep.subr.bf16.mxu0 0
      %3330 = vmatpush1.bf16.msra.mxu0 0
      %3331 = vmatprep.subr.bf16.mxu0 0
      %3332 = vmatpush1.bf16.msra.mxu0 0
      %3333 = vmatprep.subr.bf16.mxu0 0
      %3334 = vmatpush1.bf16.msra.mxu0 0
      %3335 = vmatprep.subr.bf16.mxu0 0
      %3336 = vmatpush1.bf16.msra.mxu0 0
      %3337 = vmatprep.subr.bf16.mxu0 0
      %3338 = vmatpush1.bf16.msra.mxu0 0
      %3339 = vmatprep.subr.bf16.mxu0 0
      %3340 = vmatpush1.bf16.msra.mxu0 0
      %3341 = vmatprep.subr.bf16.mxu0 0
      %3342 = vmatpush1.bf16.msra.mxu0 0
      %3343 = vmatprep.subr.bf16.mxu0 0
      %3344 = vmatpush1.bf16.msra.mxu0 0
      %3345 = vmatprep.subr.bf16.mxu0 0
      %3346 = vmatpush1.bf16.msra.mxu0 0
      %3347 = vmatprep.subr.bf16.mxu0 0
      %3348 = vmatpush1.bf16.msra.mxu0 0
      %3349 = vmatprep.subr.bf16.mxu0 0
      %3350 = vmatpush1.bf16.msra.mxu0 0
      %3351 = vmatprep.subr.bf16.mxu0 0
      %3352 = vmatpush1.bf16.msra.mxu0 0
      %3353 = vmatprep.mubr.bf16.mxu0 0
      %3354 = vmatmul.mubr.bf16.gmra.mrb[0].mxu0 %v3295
      %v3355 = vpop.f32.mrb[0].mxu0
      %v3356 = vadd.f32 0.0, %v3355
      %v3357 = vpop.f32.mrb[0].mxu0
      %v3358 = vpop.f32.mrb[0].mxu0
      %v3359 = vadd.f32 0.0, %v3358
      %v3360 = vpop.f32.mrb[0].mxu0
      %3361 = vmatprep.mubr.bf16.mxu0 0
      %3362 = vmatmul.mubr.bf16.gmra.mrb[0].mxu0 %v3298
      %v3363 = vpop.f32.mrb[0].mxu0
      %v3364 = vadd.f32 0.0, %v3363
      %v3365 = vpop.f32.mrb[0].mxu0
      %v3366 = vpop.f32.mrb[0].mxu0
      %v3367 = vadd.f32 0.0, %v3366
      %v3368 = vpop.f32.mrb[0].mxu0
      %3369 = vmatprep.mubr.bf16.mxu0 0
      %3370 = vmatmul.mubr.bf16.gmra.mrb[0].mxu0 %v3301
      %v3371 = vpop.f32.mrb[0].mxu0
      %v3372 = vadd.f32 0.0, %v3371
      %v3373 = vpop.f32.mrb[0].mxu0
      %v3374 = vpop.f32.mrb[0].mxu0
      %v3375 = vadd.f32 0.0, %v3374
      %v3376 = vpop.f32.mrb[0].mxu0
      %3377 = vmatprep.mubr.bf16.mxu0 0
      %3378 = vmatmul.mubr.bf16.gmra.mrb[0].mxu0 %v3304
      %v3379 = vpop.f32.mrb[0].mxu0
      %v3380 = vadd.f32 0.0, %v3379
      %v3381 = vpop.f32.mrb[0].mxu0
      %v3382 = vpop.f32.mrb[0].mxu0
      %v3383 = vadd.f32 0.0, %v3382
      %v3384 = vpop.f32.mrb[0].mxu0
      %3385 = vmatprep.mubr.bf16.mxu0 0
      %3386 = vmatmul.mubr.bf16.gmra.mrb[0].mxu0 %v3307
      %v3387 = vpop.f32.mrb[0].mxu0
      %v3388 = vadd.f32 0.0, %v3387
      %v3389 = vpop.f32.mrb[0].mxu0
      %v3390 = vpop.f32.mrb[0].mxu0
      %v3391 = vadd.f32 0.0, %v3390
      %v3392 = vpop.f32.mrb[0].mxu0
      %3393 = vmatprep.mubr.bf16.mxu0 0
      %3394 = vmatmul.mubr.bf16.gmra.mrb[0].mxu0 %v3310
      %v3395 = vpop.f32.mrb[0].mxu0
      %v3396 = vadd.f32 0.0, %v3395
      %v3397 = vpop.f32.mrb[0].mxu0
      %v3398 = vpop.f32.mrb[0].mxu0
      %v3399 = vadd.f32 0.0, %v3398
      %v3400 = vpop.f32.mrb[0].mxu0
      %3401 = vmatprep.mubr.bf16.mxu0 0
      %3402 = vmatmul.mubr.bf16.gmra.mrb[0].mxu0 %v3313
      %v3403 = vpop.f32.mrb[0].mxu0
      %v3404 = vadd.f32 0.0, %v3403
      %v3405 = vpop.f32.mrb[0].mxu0
      %v3406 = vpop.f32.mrb[0].mxu0
      %v3407 = vadd.f32 0.0, %v3406
      %v3408 = vpop.f32.mrb[0].mxu0
      %3409 = vmatprep.mubr.bf16.mxu0 0
      %3410 = vmatmul.mubr.bf16.gmra.mrb[0].mxu0 %v3316
      %v3411 = vpop.f32.mrb[0].mxu0
      %v3412 = vadd.f32 0.0, %v3411
      %v3413 = vpop.f32.mrb[0].mxu0
      %v3414 = vpop.f32.mrb[0].mxu0
      %v3415 = vadd.f32 0.0, %v3414
      %v3416 = vpop.f32.mrb[0].mxu0
      %3417 = vdwg.mxu0
      %v3418 = vadd.f32 %v2422, %v3356
      %v3419 = vadd.f32 %v2425, %v3359
      %v3420 = vadd.f32 %v2430, %v3364
      %v3421 = vadd.f32 %v2433, %v3367
      %v3422 = vadd.f32 %v2438, %v3372
      %v3423 = vadd.f32 %v2441, %v3375
      %v3424 = vadd.f32 %v2446, %v3380
      %v3425 = vadd.f32 %v2449, %v3383
      %v3426 = vadd.f32 %v2454, %v3388
      %v3427 = vadd.f32 %v2457, %v3391
      %v3428 = vadd.f32 %v2462, %v3396
      %v3429 = vadd.f32 %v2465, %v3399
      %v3430 = vadd.f32 %v2470, %v3404
      %v3431 = vadd.f32 %v2473, %v3407
      %v3432 = vadd.f32 %v2478, %v3412
      %v3433 = vadd.f32 %v2481, %v3415
      %s3434 = scalar_lea.vmem %s3, 48
      %v3435 = vld [vmem:[%s3434] sm:$0xf]
      %v3436 = vld [vmem:[%s3434 + $0x4] sm:$0xf]
      %v3437 = vld [vmem:[%s3434 + $0x8] sm:$0xf]
      %v3438 = vld [vmem:[%s3434 + $0xc] sm:$0xf]
      %s3439 = scalar_lea.vmem %s10, 3
      %v3440 = vld [vmem:[%s3439] sm:$0x1]
      %v3442 = vlaneseq
      %v3443 = vshrl.u32 %v3442, 7
      %v3444 = vsub.s32 0, %v3443
      %v3445 = vrot.slane %v3440, %v3444
      %v3451 = vunpack.c.l.b16 %v3435
      %v3452 = vunpack.c.l.b16 %v3436
      %v3453 = vunpack.c.l.b16 %v3437
      %v3454 = vunpack.c.l.b16 %v3438
      %v3455 = vpack.c.b16 %v3452, %v3451
      %v3456 = vpack.c.b16 %v3454, %v3453
      %3459 = vmatprep.subr.bf16.mxu0 0
      %3460 = vmatpush1.bf16.msra.mxu0 %v3455
      %3461 = vmatprep.subr.bf16.mxu0 0
      %3462 = vmatpush1.bf16.msra.mxu0 %v3456
      %3463 = vmatprep.subr.bf16.mxu0 0
      %3464 = vmatpush1.bf16.msra.mxu0 0
      %3465 = vmatprep.subr.bf16.mxu0 0
      %3466 = vmatpush1.bf16.msra.mxu0 0
      %3467 = vmatprep.subr.bf16.mxu0 0
      %3468 = vmatpush1.bf16.msra.mxu0 0
      %3469 = vmatprep.subr.bf16.mxu0 0
      %3470 = vmatpush1.bf16.msra.mxu0 0
      %3471 = vmatprep.subr.bf16.mxu0 0
      %3472 = vmatpush1.bf16.msra.mxu0 0
      %3473 = vmatprep.subr.bf16.mxu0 0
      %3474 = vmatpush1.bf16.msra.mxu0 0
      %3475 = vmatprep.subr.bf16.mxu0 0
      %3476 = vmatpush1.bf16.msra.mxu0 0
      %3477 = vmatprep.subr.bf16.mxu0 0
      %3478 = vmatpush1.bf16.msra.mxu0 0
      %3479 = vmatprep.subr.bf16.mxu0 0
      %3480 = vmatpush1.bf16.msra.mxu0 0
      %3481 = vmatprep.subr.bf16.mxu0 0
      %3482 = vmatpush1.bf16.msra.mxu0 0
      %3483 = vmatprep.subr.bf16.mxu0 0
      %3484 = vmatpush1.bf16.msra.mxu0 0
      %3485 = vmatprep.subr.bf16.mxu0 0
      %3486 = vmatpush1.bf16.msra.mxu0 0
      %3487 = vmatprep.subr.bf16.mxu0 0
      %3488 = vmatpush1.bf16.msra.mxu0 0
      %3489 = vmatprep.subr.bf16.mxu0 0
      %3490 = vmatpush1.bf16.msra.mxu0 0
      %3491 = vmatprep.mubr.bf16.mxu0 0
      %3492 = vmatmul.mubr.bf16.gmra.mrb[0].mxu0 %v597
      %v3493 = vpop.f32.mrb[0].mxu0
      %v3494 = vadd.f32 %v3445, %v3493
      %v3495 = vpop.f32.mrb[0].mxu0
      %v3496 = vpop.f32.mrb[0].mxu0
      %v3497 = vadd.f32 %v3445, %v3496
      %v3498 = vpop.f32.mrb[0].mxu0
      %3499 = vmatprep.mubr.bf16.mxu0 0
      %3500 = vmatmul.mubr.bf16.gmra.mrb[0].mxu0 %v600
      %v3501 = vpop.f32.mrb[0].mxu0
      %v3502 = vadd.f32 %v3445, %v3501
      %v3503 = vpop.f32.mrb[0].mxu0
      %v3504 = vpop.f32.mrb[0].mxu0
      %v3505 = vadd.f32 %v3445, %v3504
      %v3506 = vpop.f32.mrb[0].mxu0
      %3507 = vmatprep.mubr.bf16.mxu0 0
      %3508 = vmatmul.mubr.bf16.gmra.mrb[0].mxu0 %v603
      %v3509 = vpop.f32.mrb[0].mxu0
      %v3510 = vadd.f32 %v3445, %v3509
      %v3511 = vpop.f32.mrb[0].mxu0
      %v3512 = vpop.f32.mrb[0].mxu0
      %v3513 = vadd.f32 %v3445, %v3512
      %v3514 = vpop.f32.mrb[0].mxu0
      %3515 = vmatprep.mubr.bf16.mxu0 0
      %3516 = vmatmul.mubr.bf16.gmra.mrb[0].mxu0 %v606
      %v3517 = vpop.f32.mrb[0].mxu0
      %v3518 = vadd.f32 %v3445, %v3517
      %v3519 = vpop.f32.mrb[0].mxu0
      %v3520 = vpop.f32.mrb[0].mxu0
      %v3521 = vadd.f32 %v3445, %v3520
      %v3522 = vpop.f32.mrb[0].mxu0
      %3523 = vmatprep.mubr.bf16.mxu0 0
      %3524 = vmatmul.mubr.bf16.gmra.mrb[0].mxu0 %v609
      %v3525 = vpop.f32.mrb[0].mxu0
      %v3526 = vadd.f32 %v3445, %v3525
      %v3527 = vpop.f32.mrb[0].mxu0
      %v3528 = vpop.f32.mrb[0].mxu0
      %v3529 = vadd.f32 %v3445, %v3528
      %v3530 = vpop.f32.mrb[0].mxu0
      %3531 = vmatprep.mubr.bf16.mxu0 0
      %3532 = vmatmul.mubr.bf16.gmra.mrb[0].mxu0 %v612
      %v3533 = vpop.f32.mrb[0].mxu0
      %v3534 = vadd.f32 %v3445, %v3533
      %v3535 = vpop.f32.mrb[0].mxu0
      %v3536 = vpop.f32.mrb[0].mxu0
      %v3537 = vadd.f32 %v3445, %v3536
      %v3538 = vpop.f32.mrb[0].mxu0
      %3539 = vmatprep.mubr.bf16.mxu0 0
      %3540 = vmatmul.mubr.bf16.gmra.mrb[0].mxu0 %v615
      %v3541 = vpop.f32.mrb[0].mxu0
      %v3542 = vadd.f32 %v3445, %v3541
      %v3543 = vpop.f32.mrb[0].mxu0
      %v3544 = vpop.f32.mrb[0].mxu0
      %v3545 = vadd.f32 %v3445, %v3544
      %v3546 = vpop.f32.mrb[0].mxu0
      %3547 = vmatprep.mubr.bf16.mxu0 0
      %3548 = vmatmul.mubr.bf16.gmra.mrb[0].mxu0 %v618
      %v3549 = vpop.f32.mrb[0].mxu0
      %v3550 = vadd.f32 %v3445, %v3549
      %v3551 = vpop.f32.mrb[0].mxu0
      %v3552 = vpop.f32.mrb[0].mxu0
      %v3553 = vadd.f32 %v3445, %v3552
      %v3554 = vpop.f32.mrb[0].mxu0
      %3555 = vdwg.mxu0
      %s3556 = scalar_lea.vmem %s4, 48
      %v3557 = vld [vmem:[%s3556] sm:$0xf]
      %v3558 = vld [vmem:[%s3556 + $0x4] sm:$0xf]
      %v3559 = vld [vmem:[%s3556 + $0x8] sm:$0xf]
      %v3560 = vld [vmem:[%s3556 + $0xc] sm:$0xf]
      %s3561 = scalar_lea.vmem %s11, 3
      %v3562 = vld [vmem:[%s3561] sm:$0x1]
      %v3564 = vlaneseq
      %v3565 = vshrl.u32 %v3564, 7
      %v3566 = vsub.s32 0, %v3565
      %v3567 = vrot.slane %v3562, %v3566
      %v3573 = vunpack.c.l.b16 %v3557
      %v3574 = vunpack.c.l.b16 %v3558
      %v3575 = vunpack.c.l.b16 %v3559
      %v3576 = vunpack.c.l.b16 %v3560
      %v3577 = vpack.c.b16 %v3574, %v3573
      %v3578 = vpack.c.b16 %v3576, %v3575
      %3581 = vmatprep.subr.bf16.mxu0 0
      %3582 = vmatpush1.bf16.msra.mxu0 %v3577
      %3583 = vmatprep.subr.bf16.mxu0 0
      %3584 = vmatpush1.bf16.msra.mxu0 %v3578
      %3585 = vmatprep.subr.bf16.mxu0 0
      %3586 = vmatpush1.bf16.msra.mxu0 0
      %3587 = vmatprep.subr.bf16.mxu0 0
      %3588 = vmatpush1.bf16.msra.mxu0 0
      %3589 = vmatprep.subr.bf16.mxu0 0
      %3590 = vmatpush1.bf16.msra.mxu0 0
      %3591 = vmatprep.subr.bf16.mxu0 0
      %3592 = vmatpush1.bf16.msra.mxu0 0
      %3593 = vmatprep.subr.bf16.mxu0 0
      %3594 = vmatpush1.bf16.msra.mxu0 0
      %3595 = vmatprep.subr.bf16.mxu0 0
      %3596 = vmatpush1.bf16.msra.mxu0 0
      %3597 = vmatprep.subr.bf16.mxu0 0
      %3598 = vmatpush1.bf16.msra.mxu0 0
      %3599 = vmatprep.subr.bf16.mxu0 0
      %3600 = vmatpush1.bf16.msra.mxu0 0
      %3601 = vmatprep.subr.bf16.mxu0 0
      %3602 = vmatpush1.bf16.msra.mxu0 0
      %3603 = vmatprep.subr.bf16.mxu0 0
      %3604 = vmatpush1.bf16.msra.mxu0 0
      %3605 = vmatprep.subr.bf16.mxu0 0
      %3606 = vmatpush1.bf16.msra.mxu0 0
      %3607 = vmatprep.subr.bf16.mxu0 0
      %3608 = vmatpush1.bf16.msra.mxu0 0
      %3609 = vmatprep.subr.bf16.mxu0 0
      %3610 = vmatpush1.bf16.msra.mxu0 0
      %3611 = vmatprep.subr.bf16.mxu0 0
      %3612 = vmatpush1.bf16.msra.mxu0 0
      %3613 = vmatprep.mubr.bf16.mxu0 0
      %3614 = vmatmul.mubr.bf16.gmra.mrb[0].mxu0 %v741
      %v3615 = vpop.f32.mrb[0].mxu0
      %v3616 = vadd.f32 %v3567, %v3615
      %v3617 = vpop.f32.mrb[0].mxu0
      %v3618 = vpop.f32.mrb[0].mxu0
      %v3619 = vadd.f32 %v3567, %v3618
      %v3620 = vpop.f32.mrb[0].mxu0
      %3621 = vmatprep.mubr.bf16.mxu0 0
      %3622 = vmatmul.mubr.bf16.gmra.mrb[0].mxu0 %v744
      %v3623 = vpop.f32.mrb[0].mxu0
      %v3624 = vadd.f32 %v3567, %v3623
      %v3625 = vpop.f32.mrb[0].mxu0
      %v3626 = vpop.f32.mrb[0].mxu0
      %v3627 = vadd.f32 %v3567, %v3626
      %v3628 = vpop.f32.mrb[0].mxu0
      %3629 = vmatprep.mubr.bf16.mxu0 0
      %3630 = vmatmul.mubr.bf16.gmra.mrb[0].mxu0 %v747
      %v3631 = vpop.f32.mrb[0].mxu0
      %v3632 = vadd.f32 %v3567, %v3631
      %v3633 = vpop.f32.mrb[0].mxu0
      %v3634 = vpop.f32.mrb[0].mxu0
      %v3635 = vadd.f32 %v3567, %v3634
      %v3636 = vpop.f32.mrb[0].mxu0
      %3637 = vmatprep.mubr.bf16.mxu0 0
      %3638 = vmatmul.mubr.bf16.gmra.mrb[0].mxu0 %v750
      %v3639 = vpop.f32.mrb[0].mxu0
      %v3640 = vadd.f32 %v3567, %v3639
      %v3641 = vpop.f32.mrb[0].mxu0
      %v3642 = vpop.f32.mrb[0].mxu0
      %v3643 = vadd.f32 %v3567, %v3642
      %v3644 = vpop.f32.mrb[0].mxu0
      %3645 = vmatprep.mubr.bf16.mxu0 0
      %3646 = vmatmul.mubr.bf16.gmra.mrb[0].mxu0 %v753
      %v3647 = vpop.f32.mrb[0].mxu0
      %v3648 = vadd.f32 %v3567, %v3647
      %v3649 = vpop.f32.mrb[0].mxu0
      %v3650 = vpop.f32.mrb[0].mxu0
      %v3651 = vadd.f32 %v3567, %v3650
      %v3652 = vpop.f32.mrb[0].mxu0
      %3653 = vmatprep.mubr.bf16.mxu0 0
      %3654 = vmatmul.mubr.bf16.gmra.mrb[0].mxu0 %v756
      %v3655 = vpop.f32.mrb[0].mxu0
      %v3656 = vadd.f32 %v3567, %v3655
      %v3657 = vpop.f32.mrb[0].mxu0
      %v3658 = vpop.f32.mrb[0].mxu0
      %v3659 = vadd.f32 %v3567, %v3658
      %v3660 = vpop.f32.mrb[0].mxu0
      %3661 = vmatprep.mubr.bf16.mxu0 0
      %3662 = vmatmul.mubr.bf16.gmra.mrb[0].mxu0 %v759
      %v3663 = vpop.f32.mrb[0].mxu0
      %v3664 = vadd.f32 %v3567, %v3663
      %v3665 = vpop.f32.mrb[0].mxu0
      %v3666 = vpop.f32.mrb[0].mxu0
      %v3667 = vadd.f32 %v3567, %v3666
      %v3668 = vpop.f32.mrb[0].mxu0
      %3669 = vmatprep.mubr.bf16.mxu0 0
      %3670 = vmatmul.mubr.bf16.gmra.mrb[0].mxu0 %v762
      %v3671 = vpop.f32.mrb[0].mxu0
      %v3672 = vadd.f32 %v3567, %v3671
      %v3673 = vpop.f32.mrb[0].mxu0
      %v3674 = vpop.f32.mrb[0].mxu0
      %v3675 = vadd.f32 %v3567, %v3674
      %v3676 = vpop.f32.mrb[0].mxu0
      %3677 = vdwg.mxu0
      %s3678 = scalar_lea.vmem %s5, 48
      %v3679 = vld [vmem:[%s3678] sm:$0xf]
      %v3680 = vld [vmem:[%s3678 + $0x4] sm:$0xf]
      %v3681 = vld [vmem:[%s3678 + $0x8] sm:$0xf]
      %v3682 = vld [vmem:[%s3678 + $0xc] sm:$0xf]
      %s3683 = scalar_lea.vmem %s12, 3
      %v3684 = vld [vmem:[%s3683] sm:$0x1]
      %v3686 = vlaneseq
      %v3687 = vshrl.u32 %v3686, 7
      %v3688 = vsub.s32 0, %v3687
      %v3689 = vrot.slane %v3684, %v3688
      %v3695 = vunpack.c.l.b16 %v3679
      %v3696 = vunpack.c.l.b16 %v3680
      %v3697 = vunpack.c.l.b16 %v3681
      %v3698 = vunpack.c.l.b16 %v3682
      %v3699 = vpack.c.b16 %v3696, %v3695
      %v3700 = vpack.c.b16 %v3698, %v3697
      %3703 = vmatprep.subr.bf16.mxu0 0
      %3704 = vmatpush1.bf16.msra.mxu0 %v3699
      %3705 = vmatprep.subr.bf16.mxu0 0
      %3706 = vmatpush1.bf16.msra.mxu0 %v3700
      %3707 = vmatprep.subr.bf16.mxu0 0
      %3708 = vmatpush1.bf16.msra.mxu0 0
      %3709 = vmatprep.subr.bf16.mxu0 0
      %3710 = vmatpush1.bf16.msra.mxu0 0
      %3711 = vmatprep.subr.bf16.mxu0 0
      %3712 = vmatpush1.bf16.msra.mxu0 0
      %3713 = vmatprep.subr.bf16.mxu0 0
      %3714 = vmatpush1.bf16.msra.mxu0 0
      %3715 = vmatprep.subr.bf16.mxu0 0
      %3716 = vmatpush1.bf16.msra.mxu0 0
      %3717 = vmatprep.subr.bf16.mxu0 0
      %3718 = vmatpush1.bf16.msra.mxu0 0
      %3719 = vmatprep.subr.bf16.mxu0 0
      %3720 = vmatpush1.bf16.msra.mxu0 0
      %3721 = vmatprep.subr.bf16.mxu0 0
      %3722 = vmatpush1.bf16.msra.mxu0 0
      %3723 = vmatprep.subr.bf16.mxu0 0
      %3724 = vmatpush1.bf16.msra.mxu0 0
      %3725 = vmatprep.subr.bf16.mxu0 0
      %3726 = vmatpush1.bf16.msra.mxu0 0
      %3727 = vmatprep.subr.bf16.mxu0 0
      %3728 = vmatpush1.bf16.msra.mxu0 0
      %3729 = vmatprep.subr.bf16.mxu0 0
      %3730 = vmatpush1.bf16.msra.mxu0 0
      %3731 = vmatprep.subr.bf16.mxu0 0
      %3732 = vmatpush1.bf16.msra.mxu0 0
      %3733 = vmatprep.subr.bf16.mxu0 0
      %3734 = vmatpush1.bf16.msra.mxu0 0
      %3735 = vmatprep.mubr.bf16.mxu0 0
      %3736 = vmatmul.mubr.bf16.gmra.mrb[0].mxu0 %v741
      %v3737 = vpop.f32.mrb[0].mxu0
      %v3738 = vadd.f32 %v3689, %v3737
      %v3739 = vpop.f32.mrb[0].mxu0
      %v3740 = vpop.f32.mrb[0].mxu0
      %v3741 = vadd.f32 %v3689, %v3740
      %v3742 = vpop.f32.mrb[0].mxu0
      %3743 = vmatprep.mubr.bf16.mxu0 0
      %3744 = vmatmul.mubr.bf16.gmra.mrb[0].mxu0 %v744
      %v3745 = vpop.f32.mrb[0].mxu0
      %v3746 = vadd.f32 %v3689, %v3745
      %v3747 = vpop.f32.mrb[0].mxu0
      %v3748 = vpop.f32.mrb[0].mxu0
      %v3749 = vadd.f32 %v3689, %v3748
      %v3750 = vpop.f32.mrb[0].mxu0
      %3751 = vmatprep.mubr.bf16.mxu0 0
      %3752 = vmatmul.mubr.bf16.gmra.mrb[0].mxu0 %v747
      %v3753 = vpop.f32.mrb[0].mxu0
      %v3754 = vadd.f32 %v3689, %v3753
      %v3755 = vpop.f32.mrb[0].mxu0
      %v3756 = vpop.f32.mrb[0].mxu0
      %v3757 = vadd.f32 %v3689, %v3756
      %v3758 = vpop.f32.mrb[0].mxu0
      %3759 = vmatprep.mubr.bf16.mxu0 0
      %3760 = vmatmul.mubr.bf16.gmra.mrb[0].mxu0 %v750
      %v3761 = vpop.f32.mrb[0].mxu0
      %v3762 = vadd.f32 %v3689, %v3761
      %v3763 = vpop.f32.mrb[0].mxu0
      %v3764 = vpop.f32.mrb[0].mxu0
      %v3765 = vadd.f32 %v3689, %v3764
      %v3766 = vpop.f32.mrb[0].mxu0
      %3767 = vmatprep.mubr.bf16.mxu0 0
      %3768 = vmatmul.mubr.bf16.gmra.mrb[0].mxu0 %v753
      %v3769 = vpop.f32.mrb[0].mxu0
      %v3770 = vadd.f32 %v3689, %v3769
      %v3771 = vpop.f32.mrb[0].mxu0
      %v3772 = vpop.f32.mrb[0].mxu0
      %v3773 = vadd.f32 %v3689, %v3772
      %v3774 = vpop.f32.mrb[0].mxu0
      %3775 = vmatprep.mubr.bf16.mxu0 0
      %3776 = vmatmul.mubr.bf16.gmra.mrb[0].mxu0 %v756
      %v3777 = vpop.f32.mrb[0].mxu0
      %v3778 = vadd.f32 %v3689, %v3777
      %v3779 = vpop.f32.mrb[0].mxu0
      %v3780 = vpop.f32.mrb[0].mxu0
      %v3781 = vadd.f32 %v3689, %v3780
      %v3782 = vpop.f32.mrb[0].mxu0
      %3783 = vmatprep.mubr.bf16.mxu0 0
      %3784 = vmatmul.mubr.bf16.gmra.mrb[0].mxu0 %v759
      %v3785 = vpop.f32.mrb[0].mxu0
      %v3786 = vadd.f32 %v3689, %v3785
      %v3787 = vpop.f32.mrb[0].mxu0
      %v3788 = vpop.f32.mrb[0].mxu0
      %v3789 = vadd.f32 %v3689, %v3788
      %v3790 = vpop.f32.mrb[0].mxu0
      %3791 = vmatprep.mubr.bf16.mxu0 0
      %3792 = vmatmul.mubr.bf16.gmra.mrb[0].mxu0 %v762
      %v3793 = vpop.f32.mrb[0].mxu0
      %v3794 = vadd.f32 %v3689, %v3793
      %v3795 = vpop.f32.mrb[0].mxu0
      %v3796 = vpop.f32.mrb[0].mxu0
      %v3797 = vadd.f32 %v3689, %v3796
      %v3798 = vpop.f32.mrb[0].mxu0
      %3799 = vdwg.mxu0
      %v3800 = vmul.f32 %v3494, 0.35355338
      %v3801 = vmul.f32 %v3497, 0.35355338
      %v3802 = vmul.f32 %v3502, 0.35355338
      %v3803 = vmul.f32 %v3505, 0.35355338
      %v3804 = vmul.f32 %v3510, 0.35355338
      %v3805 = vmul.f32 %v3513, 0.35355338
      %v3806 = vmul.f32 %v3518, 0.35355338
      %v3807 = vmul.f32 %v3521, 0.35355338
      %v3808 = vmul.f32 %v3526, 0.35355338
      %v3809 = vmul.f32 %v3529, 0.35355338
      %v3810 = vmul.f32 %v3534, 0.35355338
      %v3811 = vmul.f32 %v3537, 0.35355338
      %v3812 = vmul.f32 %v3542, 0.35355338
      %v3813 = vmul.f32 %v3545, 0.35355338
      %v3814 = vmul.f32 %v3550, 0.35355338
      %v3815 = vmul.f32 %v3553, 0.35355338
      %v3816 = vpack.c.bf16 %v3801, %v3800
      %v3817 = vpack.c.bf16 %v3803, %v3802
      %v3818 = vpack.c.bf16 %v3805, %v3804
      %v3819 = vpack.c.bf16 %v3807, %v3806
      %v3820 = vpack.c.bf16 %v3809, %v3808
      %v3821 = vpack.c.bf16 %v3811, %v3810
      %v3822 = vpack.c.bf16 %v3813, %v3812
      %v3823 = vpack.c.bf16 %v3815, %v3814
      %v3824 = vpack.c.bf16 %v3619, %v3616
      %v3825 = vpack.c.bf16 %v3627, %v3624
      %v3826 = vpack.c.bf16 %v3635, %v3632
      %v3827 = vpack.c.bf16 %v3643, %v3640
      %v3828 = vpack.c.bf16 %v3651, %v3648
      %v3829 = vpack.c.bf16 %v3659, %v3656
      %v3830 = vpack.c.bf16 %v3667, %v3664
      %v3831 = vpack.c.bf16 %v3675, %v3672
      %v3832 = vpack.c.bf16 %v3741, %v3738
      %v3833 = vpack.c.bf16 %v3749, %v3746
      %v3834 = vpack.c.bf16 %v3757, %v3754
      %v3835 = vpack.c.bf16 %v3765, %v3762
      %v3836 = vpack.c.bf16 %v3773, %v3770
      %v3837 = vpack.c.bf16 %v3781, %v3778
      %v3838 = vpack.c.bf16 %v3789, %v3786
      %v3839 = vpack.c.bf16 %v3797, %v3794
      %v3841 = vsel %vm1021, %v3816, 0
      %v3844 = vsel %vm1021, %v3817, 0
      %v3847 = vsel %vm1021, %v3818, 0
      %v3850 = vsel %vm1021, %v3819, 0
      %v3853 = vsel %vm1021, %v3820, 0
      %v3856 = vsel %vm1021, %v3821, 0
      %v3859 = vsel %vm1021, %v3822, 0
      %v3862 = vsel %vm1021, %v3823, 0
      %v3865 = vsel %vm1021, %v3824, 0
      %v3868 = vsel %vm1021, %v3825, 0
      %v3871 = vsel %vm1021, %v3826, 0
      %v3874 = vsel %vm1021, %v3827, 0
      %v3877 = vsel %vm1021, %v3828, 0
      %v3880 = vsel %vm1021, %v3829, 0
      %v3883 = vsel %vm1021, %v3830, 0
      %v3886 = vsel %vm1021, %v3831, 0
      %3888 = vmatprep.subr.bf16.mxu0 0
      %3889 = vmatpush1.bf16.xpose.msra.mxu0 %v3865
      %3890 = vmatprep.subr.bf16.mxu0 0
      %3891 = vmatpush1.bf16.xpose.msra.mxu0 %v3868
      %3892 = vmatprep.subr.bf16.mxu0 0
      %3893 = vmatpush1.bf16.xpose.msra.mxu0 %v3871
      %3894 = vmatprep.subr.bf16.mxu0 0
      %3895 = vmatpush1.bf16.xpose.msra.mxu0 %v3874
      %3896 = vmatprep.subr.bf16.mxu0 0
      %3897 = vmatpush1.bf16.xpose.msra.mxu0 %v3877
      %3898 = vmatprep.subr.bf16.mxu0 0
      %3899 = vmatpush1.bf16.xpose.msra.mxu0 %v3880
      %3900 = vmatprep.subr.bf16.mxu0 0
      %3901 = vmatpush1.bf16.xpose.msra.mxu0 %v3883
      %3902 = vmatprep.subr.bf16.mxu0 0
      %3903 = vmatpush1.bf16.xpose.msra.mxu0 %v3886
      %3904 = vmatprep.subr.bf16.mxu0 0
      %3905 = vmatpush1.bf16.xpose.msra.mxu0 0
      %3906 = vmatprep.subr.bf16.mxu0 0
      %3907 = vmatpush1.bf16.xpose.msra.mxu0 0
      %3908 = vmatprep.subr.bf16.mxu0 0
      %3909 = vmatpush1.bf16.xpose.msra.mxu0 0
      %3910 = vmatprep.subr.bf16.mxu0 0
      %3911 = vmatpush1.bf16.xpose.msra.mxu0 0
      %3912 = vmatprep.subr.bf16.mxu0 0
      %3913 = vmatpush1.bf16.xpose.msra.mxu0 0
      %3914 = vmatprep.subr.bf16.mxu0 0
      %3915 = vmatpush1.bf16.xpose.msra.mxu0 0
      %3916 = vmatprep.subr.bf16.mxu0 0
      %3917 = vmatpush1.bf16.xpose.msra.mxu0 0
      %3918 = vmatprep.subr.bf16.mxu0 0
      %3919 = vmatpush1.bf16.xpose.msra.mxu0 0
      %3920 = vmatprep.mubr.bf16.mxu0 0
      %3921 = vmatmul.mubr.bf16.gmra.mrb[0].mxu0 %v3841
      %v3922 = vpop.f32.mrb[0].mxu0
      %v3923 = vadd.f32 %v571, %v3922
      %v3924 = vpop.f32.mrb[0].mxu0
      %v3925 = vpop.f32.mrb[0].mxu0
      %v3926 = vadd.f32 %v571, %v3925
      %v3927 = vpop.f32.mrb[0].mxu0
      %3928 = vmatprep.mubr.bf16.mxu0 0
      %3929 = vmatmul.mubr.bf16.gmra.mrb[0].mxu0 %v3844
      %v3930 = vpop.f32.mrb[0].mxu0
      %v3931 = vadd.f32 %v571, %v3930
      %v3932 = vpop.f32.mrb[0].mxu0
      %v3933 = vpop.f32.mrb[0].mxu0
      %v3934 = vadd.f32 %v571, %v3933
      %v3935 = vpop.f32.mrb[0].mxu0
      %3936 = vmatprep.mubr.bf16.mxu0 0
      %3937 = vmatmul.mubr.bf16.gmra.mrb[0].mxu0 %v3847
      %v3938 = vpop.f32.mrb[0].mxu0
      %v3939 = vadd.f32 %v571, %v3938
      %v3940 = vpop.f32.mrb[0].mxu0
      %v3941 = vpop.f32.mrb[0].mxu0
      %v3942 = vadd.f32 %v571, %v3941
      %v3943 = vpop.f32.mrb[0].mxu0
      %3944 = vmatprep.mubr.bf16.mxu0 0
      %3945 = vmatmul.mubr.bf16.gmra.mrb[0].mxu0 %v3850
      %v3946 = vpop.f32.mrb[0].mxu0
      %v3947 = vadd.f32 %v571, %v3946
      %v3948 = vpop.f32.mrb[0].mxu0
      %v3949 = vpop.f32.mrb[0].mxu0
      %v3950 = vadd.f32 %v571, %v3949
      %v3951 = vpop.f32.mrb[0].mxu0
      %3952 = vmatprep.mubr.bf16.mxu0 0
      %3953 = vmatmul.mubr.bf16.gmra.mrb[0].mxu0 %v3853
      %v3954 = vpop.f32.mrb[0].mxu0
      %v3955 = vadd.f32 %v571, %v3954
      %v3956 = vpop.f32.mrb[0].mxu0
      %v3957 = vpop.f32.mrb[0].mxu0
      %v3958 = vadd.f32 %v571, %v3957
      %v3959 = vpop.f32.mrb[0].mxu0
      %3960 = vmatprep.mubr.bf16.mxu0 0
      %3961 = vmatmul.mubr.bf16.gmra.mrb[0].mxu0 %v3856
      %v3962 = vpop.f32.mrb[0].mxu0
      %v3963 = vadd.f32 %v571, %v3962
      %v3964 = vpop.f32.mrb[0].mxu0
      %v3965 = vpop.f32.mrb[0].mxu0
      %v3966 = vadd.f32 %v571, %v3965
      %v3967 = vpop.f32.mrb[0].mxu0
      %3968 = vmatprep.mubr.bf16.mxu0 0
      %3969 = vmatmul.mubr.bf16.gmra.mrb[0].mxu0 %v3859
      %v3970 = vpop.f32.mrb[0].mxu0
      %v3971 = vadd.f32 %v571, %v3970
      %v3972 = vpop.f32.mrb[0].mxu0
      %v3973 = vpop.f32.mrb[0].mxu0
      %v3974 = vadd.f32 %v571, %v3973
      %v3975 = vpop.f32.mrb[0].mxu0
      %3976 = vmatprep.mubr.bf16.mxu0 0
      %3977 = vmatmul.mubr.bf16.gmra.mrb[0].mxu0 %v3862
      %v3978 = vpop.f32.mrb[0].mxu0
      %v3979 = vadd.f32 %v571, %v3978
      %v3980 = vpop.f32.mrb[0].mxu0
      %v3981 = vpop.f32.mrb[0].mxu0
      %v3982 = vadd.f32 %v571, %v3981
      %v3983 = vpop.f32.mrb[0].mxu0
      %3984 = vdwg.mxu0
      %3985 = vmax.xlane.f32.xlu0 %v3923
      %v3986 = vpop.xlane.xlu0 %3985
      %3987 = vmax.xlane.f32.xlu0 %v3926
      %v3988 = vpop.xlane.xlu0 %3987
      %3989 = vmax.xlane.f32.xlu0 %v3931
      %v3990 = vpop.xlane.xlu0 %3989
      %3991 = vmax.xlane.f32.xlu0 %v3934
      %v3992 = vpop.xlane.xlu0 %3991
      %3993 = vmax.xlane.f32.xlu0 %v3939
      %v3994 = vpop.xlane.xlu0 %3993
      %3995 = vmax.xlane.f32.xlu0 %v3942
      %v3996 = vpop.xlane.xlu0 %3995
      %3997 = vmax.xlane.f32.xlu0 %v3947
      %v3998 = vpop.xlane.xlu0 %3997
      %3999 = vmax.xlane.f32.xlu0 %v3950
      %v4000 = vpop.xlane.xlu0 %3999
      %4001 = vmax.xlane.f32.xlu0 %v3955
      %v4002 = vpop.xlane.xlu0 %4001
      %4003 = vmax.xlane.f32.xlu0 %v3958
      %v4004 = vpop.xlane.xlu0 %4003
      %4005 = vmax.xlane.f32.xlu0 %v3963
      %v4006 = vpop.xlane.xlu0 %4005
      %4007 = vmax.xlane.f32.xlu0 %v3966
      %v4008 = vpop.xlane.xlu0 %4007
      %4009 = vmax.xlane.f32.xlu0 %v3971
      %v4010 = vpop.xlane.xlu0 %4009
      %4011 = vmax.xlane.f32.xlu0 %v3974
      %v4012 = vpop.xlane.xlu0 %4011
      %4013 = vmax.xlane.f32.xlu0 %v3979
      %v4014 = vpop.xlane.xlu0 %4013
      %4015 = vmax.xlane.f32.xlu0 %v3982
      %v4016 = vpop.xlane.xlu0 %4015
      %v4017 = vsub.f32 %v3923, %v3986
      %v4018 = vsub.f32 %v3926, %v3988
      %v4019 = vsub.f32 %v3931, %v3990
      %v4020 = vsub.f32 %v3934, %v3992
      %v4021 = vsub.f32 %v3939, %v3994
      %v4022 = vsub.f32 %v3942, %v3996
      %v4023 = vsub.f32 %v3947, %v3998
      %v4024 = vsub.f32 %v3950, %v4000
      %v4025 = vsub.f32 %v3955, %v4002
      %v4026 = vsub.f32 %v3958, %v4004
      %v4027 = vsub.f32 %v3963, %v4006
      %v4028 = vsub.f32 %v3966, %v4008
      %v4029 = vsub.f32 %v3971, %v4010
      %v4030 = vsub.f32 %v3974, %v4012
      %v4031 = vsub.f32 %v3979, %v4014
      %v4032 = vsub.f32 %v3982, %v4016
      %v4033 = vmul.f32 %v4017, 1.442695
      %v4034 = vpow.pop %v4033
      %v4035 = vmul.f32 %v4018, 1.442695
      %v4036 = vpow.pop %v4035
      %v4037 = vmul.f32 %v4019, 1.442695
      %v4038 = vpow.pop %v4037
      %v4039 = vmul.f32 %v4020, 1.442695
      %v4040 = vpow.pop %v4039
      %v4041 = vmul.f32 %v4021, 1.442695
      %v4042 = vpow.pop %v4041
      %v4043 = vmul.f32 %v4022, 1.442695
      %v4044 = vpow.pop %v4043
      %v4045 = vmul.f32 %v4023, 1.442695
      %v4046 = vpow.pop %v4045
      %v4047 = vmul.f32 %v4024, 1.442695
      %v4048 = vpow.pop %v4047
      %v4049 = vmul.f32 %v4025, 1.442695
      %v4050 = vpow.pop %v4049
      %v4051 = vmul.f32 %v4026, 1.442695
      %v4052 = vpow.pop %v4051
      %v4053 = vmul.f32 %v4027, 1.442695
      %v4054 = vpow.pop %v4053
      %v4055 = vmul.f32 %v4028, 1.442695
      %v4056 = vpow.pop %v4055
      %v4057 = vmul.f32 %v4029, 1.442695
      %v4058 = vpow.pop %v4057
      %v4059 = vmul.f32 %v4030, 1.442695
      %v4060 = vpow.pop %v4059
      %v4061 = vmul.f32 %v4031, 1.442695
      %v4062 = vpow.pop %v4061
      %v4063 = vmul.f32 %v4032, 1.442695
      %v4064 = vpow.pop %v4063
      %4065 = vadd.xlane.f32.xlu0 %v4034
      %v4066 = vpop.xlane.xlu0 %4065
      %4067 = vadd.xlane.f32.xlu0 %v4036
      %v4068 = vpop.xlane.xlu0 %4067
      %4069 = vadd.xlane.f32.xlu0 %v4038
      %v4070 = vpop.xlane.xlu0 %4069
      %4071 = vadd.xlane.f32.xlu0 %v4040
      %v4072 = vpop.xlane.xlu0 %4071
      %4073 = vadd.xlane.f32.xlu0 %v4042
      %v4074 = vpop.xlane.xlu0 %4073
      %4075 = vadd.xlane.f32.xlu0 %v4044
      %v4076 = vpop.xlane.xlu0 %4075
      %4077 = vadd.xlane.f32.xlu0 %v4046
      %v4078 = vpop.xlane.xlu0 %4077
      %4079 = vadd.xlane.f32.xlu0 %v4048
      %v4080 = vpop.xlane.xlu0 %4079
      %4081 = vadd.xlane.f32.xlu0 %v4050
      %v4082 = vpop.xlane.xlu0 %4081
      %4083 = vadd.xlane.f32.xlu0 %v4052
      %v4084 = vpop.xlane.xlu0 %4083
      %4085 = vadd.xlane.f32.xlu0 %v4054
      %v4086 = vpop.xlane.xlu0 %4085
      %4087 = vadd.xlane.f32.xlu0 %v4056
      %v4088 = vpop.xlane.xlu0 %4087
      %4089 = vadd.xlane.f32.xlu0 %v4058
      %v4090 = vpop.xlane.xlu0 %4089
      %4091 = vadd.xlane.f32.xlu0 %v4060
      %v4092 = vpop.xlane.xlu0 %4091
      %4093 = vadd.xlane.f32.xlu0 %v4062
      %v4094 = vpop.xlane.xlu0 %4093
      %4095 = vadd.xlane.f32.xlu0 %v4064
      %v4096 = vpop.xlane.xlu0 %4095
      %v4097 = vpack.c.bf16 %v4036, %v4034
      %v4098 = vpack.c.bf16 %v4040, %v4038
      %v4099 = vpack.c.bf16 %v4044, %v4042
      %v4100 = vpack.c.bf16 %v4048, %v4046
      %v4101 = vpack.c.bf16 %v4052, %v4050
      %v4102 = vpack.c.bf16 %v4056, %v4054
      %v4103 = vpack.c.bf16 %v4060, %v4058
      %v4104 = vpack.c.bf16 %v4064, %v4062
      %4105 = vmatprep.subr.bf16.mxu0 0
      %4106 = vmatpush1.bf16.msra.mxu0 %v3832
      %4107 = vmatprep.subr.bf16.mxu0 0
      %4108 = vmatpush1.bf16.msra.mxu0 %v3833
      %4109 = vmatprep.subr.bf16.mxu0 0
      %4110 = vmatpush1.bf16.msra.mxu0 %v3834
      %4111 = vmatprep.subr.bf16.mxu0 0
      %4112 = vmatpush1.bf16.msra.mxu0 %v3835
      %4113 = vmatprep.subr.bf16.mxu0 0
      %4114 = vmatpush1.bf16.msra.mxu0 %v3836
      %4115 = vmatprep.subr.bf16.mxu0 0
      %4116 = vmatpush1.bf16.msra.mxu0 %v3837
      %4117 = vmatprep.subr.bf16.mxu0 0
      %4118 = vmatpush1.bf16.msra.mxu0 %v3838
      %4119 = vmatprep.subr.bf16.mxu0 0
      %4120 = vmatpush1.bf16.msra.mxu0 %v3839
      %4121 = vmatprep.subr.bf16.mxu0 0
      %4122 = vmatpush1.bf16.msra.mxu0 0
      %4123 = vmatprep.subr.bf16.mxu0 0
      %4124 = vmatpush1.bf16.msra.mxu0 0
      %4125 = vmatprep.subr.bf16.mxu0 0
      %4126 = vmatpush1.bf16.msra.mxu0 0
      %4127 = vmatprep.subr.bf16.mxu0 0
      %4128 = vmatpush1.bf16.msra.mxu0 0
      %4129 = vmatprep.subr.bf16.mxu0 0
      %4130 = vmatpush1.bf16.msra.mxu0 0
      %4131 = vmatprep.subr.bf16.mxu0 0
      %4132 = vmatpush1.bf16.msra.mxu0 0
      %4133 = vmatprep.subr.bf16.mxu0 0
      %4134 = vmatpush1.bf16.msra.mxu0 0
      %4135 = vmatprep.subr.bf16.mxu0 0
      %4136 = vmatpush1.bf16.msra.mxu0 0
      %4137 = vmatprep.mubr.bf16.mxu0 0
      %4138 = vmatmul.mubr.bf16.gmra.mrb[0].mxu0 %v4097
      %v4139 = vpop.f32.mrb[0].mxu0
      %v4140 = vadd.f32 0.0, %v4139
      %v4141 = vpop.f32.mrb[0].mxu0
      %v4142 = vpop.f32.mrb[0].mxu0
      %v4143 = vadd.f32 0.0, %v4142
      %v4144 = vpop.f32.mrb[0].mxu0
      %4145 = vmatprep.mubr.bf16.mxu0 0
      %4146 = vmatmul.mubr.bf16.gmra.mrb[0].mxu0 %v4098
      %v4147 = vpop.f32.mrb[0].mxu0
      %v4148 = vadd.f32 0.0, %v4147
      %v4149 = vpop.f32.mrb[0].mxu0
      %v4150 = vpop.f32.mrb[0].mxu0
      %v4151 = vadd.f32 0.0, %v4150
      %v4152 = vpop.f32.mrb[0].mxu0
      %4153 = vmatprep.mubr.bf16.mxu0 0
      %4154 = vmatmul.mubr.bf16.gmra.mrb[0].mxu0 %v4099
      %v4155 = vpop.f32.mrb[0].mxu0
      %v4156 = vadd.f32 0.0, %v4155
      %v4157 = vpop.f32.mrb[0].mxu0
      %v4158 = vpop.f32.mrb[0].mxu0
      %v4159 = vadd.f32 0.0, %v4158
      %v4160 = vpop.f32.mrb[0].mxu0
      %4161 = vmatprep.mubr.bf16.mxu0 0
      %4162 = vmatmul.mubr.bf16.gmra.mrb[0].mxu0 %v4100
      %v4163 = vpop.f32.mrb[0].mxu0
      %v4164 = vadd.f32 0.0, %v4163
      %v4165 = vpop.f32.mrb[0].mxu0
      %v4166 = vpop.f32.mrb[0].mxu0
      %v4167 = vadd.f32 0.0, %v4166
      %v4168 = vpop.f32.mrb[0].mxu0
      %4169 = vmatprep.mubr.bf16.mxu0 0
      %4170 = vmatmul.mubr.bf16.gmra.mrb[0].mxu0 %v4101
      %v4171 = vpop.f32.mrb[0].mxu0
      %v4172 = vadd.f32 0.0, %v4171
      %v4173 = vpop.f32.mrb[0].mxu0
      %v4174 = vpop.f32.mrb[0].mxu0
      %v4175 = vadd.f32 0.0, %v4174
      %v4176 = vpop.f32.mrb[0].mxu0
      %4177 = vmatprep.mubr.bf16.mxu0 0
      %4178 = vmatmul.mubr.bf16.gmra.mrb[0].mxu0 %v4102
      %v4179 = vpop.f32.mrb[0].mxu0
      %v4180 = vadd.f32 0.0, %v4179
      %v4181 = vpop.f32.mrb[0].mxu0
      %v4182 = vpop.f32.mrb[0].mxu0
      %v4183 = vadd.f32 0.0, %v4182
      %v4184 = vpop.f32.mrb[0].mxu0
      %4185 = vmatprep.mubr.bf16.mxu0 0
      %4186 = vmatmul.mubr.bf16.gmra.mrb[0].mxu0 %v4103
      %v4187 = vpop.f32.mrb[0].mxu0
      %v4188 = vadd.f32 0.0, %v4187
      %v4189 = vpop.f32.mrb[0].mxu0
      %v4190 = vpop.f32.mrb[0].mxu0
      %v4191 = vadd.f32 0.0, %v4190
      %v4192 = vpop.f32.mrb[0].mxu0
      %4193 = vmatprep.mubr.bf16.mxu0 0
      %4194 = vmatmul.mubr.bf16.gmra.mrb[0].mxu0 %v4104
      %v4195 = vpop.f32.mrb[0].mxu0
      %v4196 = vadd.f32 0.0, %v4195
      %v4197 = vpop.f32.mrb[0].mxu0
      %v4198 = vpop.f32.mrb[0].mxu0
      %v4199 = vadd.f32 0.0, %v4198
      %v4200 = vpop.f32.mrb[0].mxu0
      %4201 = vdwg.mxu0
      %v4202 = vrcp.pop %v4066
      %v4203 = vrcp.pop %v4068
      %v4204 = vrcp.pop %v4070
      %v4205 = vrcp.pop %v4072
      %v4206 = vrcp.pop %v4074
      %v4207 = vrcp.pop %v4076
      %v4208 = vrcp.pop %v4078
      %v4209 = vrcp.pop %v4080
      %v4210 = vrcp.pop %v4082
      %v4211 = vrcp.pop %v4084
      %v4212 = vrcp.pop %v4086
      %v4213 = vrcp.pop %v4088
      %v4214 = vrcp.pop %v4090
      %v4215 = vrcp.pop %v4092
      %v4216 = vrcp.pop %v4094
      %v4217 = vrcp.pop %v4096
      %v4218 = vmul.f32 %v4140, %v4202
      %v4219 = vmul.f32 %v4143, %v4203
      %v4220 = vmul.f32 %v4148, %v4204
      %v4221 = vmul.f32 %v4151, %v4205
      %v4222 = vmul.f32 %v4156, %v4206
      %v4223 = vmul.f32 %v4159, %v4207
      %v4224 = vmul.f32 %v4164, %v4208
      %v4225 = vmul.f32 %v4167, %v4209
      %v4226 = vmul.f32 %v4172, %v4210
      %v4227 = vmul.f32 %v4175, %v4211
      %v4228 = vmul.f32 %v4180, %v4212
      %v4229 = vmul.f32 %v4183, %v4213
      %v4230 = vmul.f32 %v4188, %v4214
      %v4231 = vmul.f32 %v4191, %v4215
      %v4232 = vmul.f32 %v4196, %v4216
      %v4233 = vmul.f32 %v4199, %v4217
      %v4234 = vpack.c.bf16 %v4219, %v4218
      %v4235 = vpack.c.bf16 %v4221, %v4220
      %v4236 = vpack.c.bf16 %v4223, %v4222
      %v4237 = vpack.c.bf16 %v4225, %v4224
      %v4238 = vpack.c.bf16 %v4227, %v4226
      %v4239 = vpack.c.bf16 %v4229, %v4228
      %v4240 = vpack.c.bf16 %v4231, %v4230
      %v4241 = vpack.c.bf16 %v4233, %v4232
      %s4242 = scalar_lea.vmem %s6, 12
      %v4243 = vld [vmem:[%s4242] sm:$0xf]
      %v4245 = vsel %vm1021, %v4234, 0
      %v4248 = vsel %vm1021, %v4235, 0
      %v4251 = vsel %vm1021, %v4236, 0
      %v4254 = vsel %vm1021, %v4237, 0
      %v4257 = vsel %vm1021, %v4238, 0
      %v4260 = vsel %vm1021, %v4239, 0
      %v4263 = vsel %vm1021, %v4240, 0
      %v4266 = vsel %vm1021, %v4241, 0
      %v4269 = vsel %vm2259, %v4243, 0
      %4271 = vmatprep.subr.bf16.mxu0 0
      %4272 = vmatpush1.bf16.msra.mxu0 %v4269
      %4273 = vmatprep.subr.bf16.mxu0 0
      %4274 = vmatpush1.bf16.msra.mxu0 0
      %4275 = vmatprep.subr.bf16.mxu0 0
      %4276 = vmatpush1.bf16.msra.mxu0 0
      %4277 = vmatprep.subr.bf16.mxu0 0
      %4278 = vmatpush1.bf16.msra.mxu0 0
      %4279 = vmatprep.subr.bf16.mxu0 0
      %4280 = vmatpush1.bf16.msra.mxu0 0
      %4281 = vmatprep.subr.bf16.mxu0 0
      %4282 = vmatpush1.bf16.msra.mxu0 0
      %4283 = vmatprep.subr.bf16.mxu0 0
      %4284 = vmatpush1.bf16.msra.mxu0 0
      %4285 = vmatprep.subr.bf16.mxu0 0
      %4286 = vmatpush1.bf16.msra.mxu0 0
      %4287 = vmatprep.subr.bf16.mxu0 0
      %4288 = vmatpush1.bf16.msra.mxu0 0
      %4289 = vmatprep.subr.bf16.mxu0 0
      %4290 = vmatpush1.bf16.msra.mxu0 0
      %4291 = vmatprep.subr.bf16.mxu0 0
      %4292 = vmatpush1.bf16.msra.mxu0 0
      %4293 = vmatprep.subr.bf16.mxu0 0
      %4294 = vmatpush1.bf16.msra.mxu0 0
      %4295 = vmatprep.subr.bf16.mxu0 0
      %4296 = vmatpush1.bf16.msra.mxu0 0
      %4297 = vmatprep.subr.bf16.mxu0 0
      %4298 = vmatpush1.bf16.msra.mxu0 0
      %4299 = vmatprep.subr.bf16.mxu0 0
      %4300 = vmatpush1.bf16.msra.mxu0 0
      %4301 = vmatprep.subr.bf16.mxu0 0
      %4302 = vmatpush1.bf16.msra.mxu0 0
      %4303 = vmatprep.mubr.bf16.mxu0 0
      %4304 = vmatmul.mubr.bf16.gmra.mrb[0].mxu0 %v4245
      %v4305 = vpop.f32.mrb[0].mxu0
      %v4306 = vadd.f32 0.0, %v4305
      %v4307 = vpop.f32.mrb[0].mxu0
      %v4308 = vpop.f32.mrb[0].mxu0
      %v4309 = vadd.f32 0.0, %v4308
      %v4310 = vpop.f32.mrb[0].mxu0
      %4311 = vmatprep.mubr.bf16.mxu0 0
      %4312 = vmatmul.mubr.bf16.gmra.mrb[0].mxu0 %v4248
      %v4313 = vpop.f32.mrb[0].mxu0
      %v4314 = vadd.f32 0.0, %v4313
      %v4315 = vpop.f32.mrb[0].mxu0
      %v4316 = vpop.f32.mrb[0].mxu0
      %v4317 = vadd.f32 0.0, %v4316
      %v4318 = vpop.f32.mrb[0].mxu0
      %4319 = vmatprep.mubr.bf16.mxu0 0
      %4320 = vmatmul.mubr.bf16.gmra.mrb[0].mxu0 %v4251
      %v4321 = vpop.f32.mrb[0].mxu0
      %v4322 = vadd.f32 0.0, %v4321
      %v4323 = vpop.f32.mrb[0].mxu0
      %v4324 = vpop.f32.mrb[0].mxu0
      %v4325 = vadd.f32 0.0, %v4324
      %v4326 = vpop.f32.mrb[0].mxu0
      %4327 = vmatprep.mubr.bf16.mxu0 0
      %4328 = vmatmul.mubr.bf16.gmra.mrb[0].mxu0 %v4254
      %v4329 = vpop.f32.mrb[0].mxu0
      %v4330 = vadd.f32 0.0, %v4329
      %v4331 = vpop.f32.mrb[0].mxu0
      %v4332 = vpop.f32.mrb[0].mxu0
      %v4333 = vadd.f32 0.0, %v4332
      %v4334 = vpop.f32.mrb[0].mxu0
      %4335 = vmatprep.mubr.bf16.mxu0 0
      %4336 = vmatmul.mubr.bf16.gmra.mrb[0].mxu0 %v4257
      %v4337 = vpop.f32.mrb[0].mxu0
      %v4338 = vadd.f32 0.0, %v4337
      %v4339 = vpop.f32.mrb[0].mxu0
      %v4340 = vpop.f32.mrb[0].mxu0
      %v4341 = vadd.f32 0.0, %v4340
      %v4342 = vpop.f32.mrb[0].mxu0
      %4343 = vmatprep.mubr.bf16.mxu0 0
      %4344 = vmatmul.mubr.bf16.gmra.mrb[0].mxu0 %v4260
      %v4345 = vpop.f32.mrb[0].mxu0
      %v4346 = vadd.f32 0.0, %v4345
      %v4347 = vpop.f32.mrb[0].mxu0
      %v4348 = vpop.f32.mrb[0].mxu0
      %v4349 = vadd.f32 0.0, %v4348
      %v4350 = vpop.f32.mrb[0].mxu0
      %4351 = vmatprep.mubr.bf16.mxu0 0
      %4352 = vmatmul.mubr.bf16.gmra.mrb[0].mxu0 %v4263
      %v4353 = vpop.f32.mrb[0].mxu0
      %v4354 = vadd.f32 0.0, %v4353
      %v4355 = vpop.f32.mrb[0].mxu0
      %v4356 = vpop.f32.mrb[0].mxu0
      %v4357 = vadd.f32 0.0, %v4356
      %v4358 = vpop.f32.mrb[0].mxu0
      %4359 = vmatprep.mubr.bf16.mxu0 0
      %4360 = vmatmul.mubr.bf16.gmra.mrb[0].mxu0 %v4266
      %v4361 = vpop.f32.mrb[0].mxu0
      %v4362 = vadd.f32 0.0, %v4361
      %v4363 = vpop.f32.mrb[0].mxu0
      %v4364 = vpop.f32.mrb[0].mxu0
      %v4365 = vadd.f32 0.0, %v4364
      %v4366 = vpop.f32.mrb[0].mxu0
      %4367 = vdwg.mxu0
      %v4368 = vadd.f32 %v3418, %v4306
      %v4369 = vadd.f32 %v3419, %v4309
      %v4370 = vadd.f32 %v3420, %v4314
      %v4371 = vadd.f32 %v3421, %v4317
      %v4372 = vadd.f32 %v3422, %v4322
      %v4373 = vadd.f32 %v3423, %v4325
      %v4374 = vadd.f32 %v3424, %v4330
      %v4375 = vadd.f32 %v3425, %v4333
      %v4376 = vadd.f32 %v3426, %v4338
      %v4377 = vadd.f32 %v3427, %v4341
      %v4378 = vadd.f32 %v3428, %v4346
      %v4379 = vadd.f32 %v3429, %v4349
      %v4380 = vadd.f32 %v3430, %v4354
      %v4381 = vadd.f32 %v3431, %v4357
      %v4382 = vadd.f32 %v3432, %v4362
      %v4383 = vadd.f32 %v3433, %v4365
      %v4384 = vld [vmem:[%s13] sm:$0x1]
      %v4386 = vlaneseq
      %v4387 = vshrl.u32 %v4386, 7
      %v4388 = vsub.s32 0, %v4387
      %v4389 = vrot.slane %v4384, %v4388
      %v4391 = vadd.f32 %v4368, %v4389
      %v4392 = vadd.f32 %v4369, %v4389
      %v4393 = vadd.f32 %v4370, %v4389
      %v4394 = vadd.f32 %v4371, %v4389
      %v4395 = vadd.f32 %v4372, %v4389
      %v4396 = vadd.f32 %v4373, %v4389
      %v4397 = vadd.f32 %v4374, %v4389
      %v4398 = vadd.f32 %v4375, %v4389
      %v4399 = vadd.f32 %v4376, %v4389
      %v4400 = vadd.f32 %v4377, %v4389
      %v4401 = vadd.f32 %v4378, %v4389
      %v4402 = vadd.f32 %v4379, %v4389
      %v4403 = vadd.f32 %v4380, %v4389
      %v4404 = vadd.f32 %v4381, %v4389
      %v4405 = vadd.f32 %v4382, %v4389
      %v4406 = vadd.f32 %v4383, %v4389
      %v4407 = vld [vmem:[%s7] sm:$0xf]
      %v4408 = vld [vmem:[%s7 + $0x4] sm:$0xf]
      %v4409 = vld [vmem:[%s7 + $0x8] sm:$0xf]
      %v4410 = vld [vmem:[%s7 + $0xc] sm:$0xf]
      %v4411 = vpack.c.bf16 %v4392, %v4391
      %v4412 = vpack.c.bf16 %v4394, %v4393
      %v4413 = vpack.c.bf16 %v4396, %v4395
      %v4414 = vpack.c.bf16 %v4398, %v4397
      %v4415 = vpack.c.bf16 %v4400, %v4399
      %v4416 = vpack.c.bf16 %v4402, %v4401
      %v4417 = vpack.c.bf16 %v4404, %v4403
      %v4418 = vpack.c.bf16 %v4406, %v4405
      %v4419 = vld [vmem:[%s8] sm:$0xf]
      %v4420 = vld [vmem:[%s8 + $0x4] sm:$0xf]
      %v4421 = vld [vmem:[%s8 + $0x8] sm:$0xf]
      %v4422 = vld [vmem:[%s8 + $0xc] sm:$0xf]
      %v4427 = vunpack.c.l.b16 %v4419
      %v4428 = vunpack.c.l.b16 %v4420
      %v4429 = vunpack.c.l.b16 %v4421
      %v4430 = vunpack.c.l.b16 %v4422
      %v4431 = vpack.c.b16 %v4428, %v4427
      %v4432 = vpack.c.b16 %v4430, %v4429
      %v4436 = vsel %vm595, %v4411, 0
      %v4439 = vsel %vm595, %v4412, 0
      %v4442 = vsel %vm595, %v4413, 0
      %v4445 = vsel %vm595, %v4414, 0
      %v4448 = vsel %vm595, %v4415, 0
      %v4451 = vsel %vm595, %v4416, 0
      %v4454 = vsel %vm595, %v4417, 0
      %v4457 = vsel %vm595, %v4418, 0
      %4459 = vmatprep.subr.bf16.mxu0 0
      %4460 = vmatpush1.bf16.msra.mxu0 %v4431
      %4461 = vmatprep.subr.bf16.mxu0 0
      %4462 = vmatpush1.bf16.msra.mxu0 %v4432
      %4463 = vmatprep.subr.bf16.mxu0 0
      %4464 = vmatpush1.bf16.msra.mxu0 0
      %4465 = vmatprep.subr.bf16.mxu0 0
      %4466 = vmatpush1.bf16.msra.mxu0 0
      %4467 = vmatprep.subr.bf16.mxu0 0
      %4468 = vmatpush1.bf16.msra.mxu0 0
      %4469 = vmatprep.subr.bf16.mxu0 0
      %4470 = vmatpush1.bf16.msra.mxu0 0
      %4471 = vmatprep.subr.bf16.mxu0 0
      %4472 = vmatpush1.bf16.msra.mxu0 0
      %4473 = vmatprep.subr.bf16.mxu0 0
      %4474 = vmatpush1.bf16.msra.mxu0 0
      %4475 = vmatprep.subr.bf16.mxu0 0
      %4476 = vmatpush1.bf16.msra.mxu0 0
      %4477 = vmatprep.subr.bf16.mxu0 0
      %4478 = vmatpush1.bf16.msra.mxu0 0
      %4479 = vmatprep.subr.bf16.mxu0 0
      %4480 = vmatpush1.bf16.msra.mxu0 0
      %4481 = vmatprep.subr.bf16.mxu0 0
      %4482 = vmatpush1.bf16.msra.mxu0 0
      %4483 = vmatprep.subr.bf16.mxu0 0
      %4484 = vmatpush1.bf16.msra.mxu0 0
      %4485 = vmatprep.subr.bf16.mxu0 0
      %4486 = vmatpush1.bf16.msra.mxu0 0
      %4487 = vmatprep.subr.bf16.mxu0 0
      %4488 = vmatpush1.bf16.msra.mxu0 0
      %4489 = vmatprep.subr.bf16.mxu0 0
      %4490 = vmatpush1.bf16.msra.mxu0 0
      %4491 = vmatprep.mubr.bf16.mxu0 0
      %4492 = vmatmul.mubr.bf16.gmra.mrb[0].mxu0 %v4436
      %v4493 = vpop.f32.mrb[0].mxu0
      %v4494 = vadd.f32 0.0, %v4493
      %v4495 = vpop.f32.mrb[0].mxu0
      %v4496 = vpop.f32.mrb[0].mxu0
      %v4497 = vadd.f32 0.0, %v4496
      %v4498 = vpop.f32.mrb[0].mxu0
      %4499 = vmatprep.mubr.bf16.mxu0 0
      %4500 = vmatmul.mubr.bf16.gmra.mrb[0].mxu0 %v4439
      %v4501 = vpop.f32.mrb[0].mxu0
      %v4502 = vadd.f32 0.0, %v4501
      %v4503 = vpop.f32.mrb[0].mxu0
      %v4504 = vpop.f32.mrb[0].mxu0
      %v4505 = vadd.f32 0.0, %v4504
      %v4506 = vpop.f32.mrb[0].mxu0
      %4507 = vmatprep.mubr.bf16.mxu0 0
      %4508 = vmatmul.mubr.bf16.gmra.mrb[0].mxu0 %v4442
      %v4509 = vpop.f32.mrb[0].mxu0
      %v4510 = vadd.f32 0.0, %v4509
      %v4511 = vpop.f32.mrb[0].mxu0
      %v4512 = vpop.f32.mrb[0].mxu0
      %v4513 = vadd.f32 0.0, %v4512
      %v4514 = vpop.f32.mrb[0].mxu0
      %4515 = vmatprep.mubr.bf16.mxu0 0
      %4516 = vmatmul.mubr.bf16.gmra.mrb[0].mxu0 %v4445
      %v4517 = vpop.f32.mrb[0].mxu0
      %v4518 = vadd.f32 0.0, %v4517
      %v4519 = vpop.f32.mrb[0].mxu0
      %v4520 = vpop.f32.mrb[0].mxu0
      %v4521 = vadd.f32 0.0, %v4520
      %v4522 = vpop.f32.mrb[0].mxu0
      %4523 = vmatprep.mubr.bf16.mxu0 0
      %4524 = vmatmul.mubr.bf16.gmra.mrb[0].mxu0 %v4448
      %v4525 = vpop.f32.mrb[0].mxu0
      %v4526 = vadd.f32 0.0, %v4525
      %v4527 = vpop.f32.mrb[0].mxu0
      %v4528 = vpop.f32.mrb[0].mxu0
      %v4529 = vadd.f32 0.0, %v4528
      %v4530 = vpop.f32.mrb[0].mxu0
      %4531 = vmatprep.mubr.bf16.mxu0 0
      %4532 = vmatmul.mubr.bf16.gmra.mrb[0].mxu0 %v4451
      %v4533 = vpop.f32.mrb[0].mxu0
      %v4534 = vadd.f32 0.0, %v4533
      %v4535 = vpop.f32.mrb[0].mxu0
      %v4536 = vpop.f32.mrb[0].mxu0
      %v4537 = vadd.f32 0.0, %v4536
      %v4538 = vpop.f32.mrb[0].mxu0
      %4539 = vmatprep.mubr.bf16.mxu0 0
      %4540 = vmatmul.mubr.bf16.gmra.mrb[0].mxu0 %v4454
      %v4541 = vpop.f32.mrb[0].mxu0
      %v4542 = vadd.f32 0.0, %v4541
      %v4543 = vpop.f32.mrb[0].mxu0
      %v4544 = vpop.f32.mrb[0].mxu0
      %v4545 = vadd.f32 0.0, %v4544
      %v4546 = vpop.f32.mrb[0].mxu0
      %4547 = vmatprep.mubr.bf16.mxu0 0
      %4548 = vmatmul.mubr.bf16.gmra.mrb[0].mxu0 %v4457
      %v4549 = vpop.f32.mrb[0].mxu0
      %v4550 = vadd.f32 0.0, %v4549
      %v4551 = vpop.f32.mrb[0].mxu0
      %v4552 = vpop.f32.mrb[0].mxu0
      %v4553 = vadd.f32 0.0, %v4552
      %v4554 = vpop.f32.mrb[0].mxu0
      %4555 = vdwg.mxu0
      %v4560 = vunpack.c.l.b16 %v4407
      %v4561 = vunpack.c.l.b16 %v4408
      %v4562 = vunpack.c.l.b16 %v4409
      %v4563 = vunpack.c.l.b16 %v4410
      %v4564 = vpack.c.b16 %v4561, %v4560
      %v4565 = vpack.c.b16 %v4563, %v4562
      %4568 = vmatprep.subr.bf16.mxu0 0
      %4569 = vmatpush1.bf16.msra.mxu0 %v4564
      %4570 = vmatprep.subr.bf16.mxu0 0
      %4571 = vmatpush1.bf16.msra.mxu0 %v4565
      %4572 = vmatprep.subr.bf16.mxu0 0
      %4573 = vmatpush1.bf16.msra.mxu0 0
      %4574 = vmatprep.subr.bf16.mxu0 0
      %4575 = vmatpush1.bf16.msra.mxu0 0
      %4576 = vmatprep.subr.bf16.mxu0 0
      %4577 = vmatpush1.bf16.msra.mxu0 0
      %4578 = vmatprep.subr.bf16.mxu0 0
      %4579 = vmatpush1.bf16.msra.mxu0 0
      %4580 = vmatprep.subr.bf16.mxu0 0
      %4581 = vmatpush1.bf16.msra.mxu0 0
      %4582 = vmatprep.subr.bf16.mxu0 0
      %4583 = vmatpush1.bf16.msra.mxu0 0
      %4584 = vmatprep.subr.bf16.mxu0 0
      %4585 = vmatpush1.bf16.msra.mxu0 0
      %4586 = vmatprep.subr.bf16.mxu0 0
      %4587 = vmatpush1.bf16.msra.mxu0 0
      %4588 = vmatprep.subr.bf16.mxu0 0
      %4589 = vmatpush1.bf16.msra.mxu0 0
      %4590 = vmatprep.subr.bf16.mxu0 0
      %4591 = vmatpush1.bf16.msra.mxu0 0
      %4592 = vmatprep.subr.bf16.mxu0 0
      %4593 = vmatpush1.bf16.msra.mxu0 0
      %4594 = vmatprep.subr.bf16.mxu0 0
      %4595 = vmatpush1.bf16.msra.mxu0 0
      %4596 = vmatprep.subr.bf16.mxu0 0
      %4597 = vmatpush1.bf16.msra.mxu0 0
      %4598 = vmatprep.subr.bf16.mxu0 0
      %4599 = vmatpush1.bf16.msra.mxu0 0
      %4600 = vmatprep.mubr.bf16.mxu0 0
      %4601 = vmatmul.mubr.bf16.gmra.mrb[0].mxu0 %v597
      %v4602 = vpop.f32.mrb[0].mxu0
      %v4603 = vadd.f32 %v4494, %v4602
      %v4604 = vpop.f32.mrb[0].mxu0
      %v4605 = vpop.f32.mrb[0].mxu0
      %v4606 = vadd.f32 %v4497, %v4605
      %v4607 = vpop.f32.mrb[0].mxu0
      %4608 = vmatprep.mubr.bf16.mxu0 0
      %4609 = vmatmul.mubr.bf16.gmra.mrb[0].mxu0 %v600
      %v4610 = vpop.f32.mrb[0].mxu0
      %v4611 = vadd.f32 %v4502, %v4610
      %v4612 = vpop.f32.mrb[0].mxu0
      %v4613 = vpop.f32.mrb[0].mxu0
      %v4614 = vadd.f32 %v4505, %v4613
      %v4615 = vpop.f32.mrb[0].mxu0
      %4616 = vmatprep.mubr.bf16.mxu0 0
      %4617 = vmatmul.mubr.bf16.gmra.mrb[0].mxu0 %v603
      %v4618 = vpop.f32.mrb[0].mxu0
      %v4619 = vadd.f32 %v4510, %v4618
      %v4620 = vpop.f32.mrb[0].mxu0
      %v4621 = vpop.f32.mrb[0].mxu0
      %v4622 = vadd.f32 %v4513, %v4621
      %v4623 = vpop.f32.mrb[0].mxu0
      %4624 = vmatprep.mubr.bf16.mxu0 0
      %4625 = vmatmul.mubr.bf16.gmra.mrb[0].mxu0 %v606
      %v4626 = vpop.f32.mrb[0].mxu0
      %v4627 = vadd.f32 %v4518, %v4626
      %v4628 = vpop.f32.mrb[0].mxu0
      %v4629 = vpop.f32.mrb[0].mxu0
      %v4630 = vadd.f32 %v4521, %v4629
      %v4631 = vpop.f32.mrb[0].mxu0
      %4632 = vmatprep.mubr.bf16.mxu0 0
      %4633 = vmatmul.mubr.bf16.gmra.mrb[0].mxu0 %v609
      %v4634 = vpop.f32.mrb[0].mxu0
      %v4635 = vadd.f32 %v4526, %v4634
      %v4636 = vpop.f32.mrb[0].mxu0
      %v4637 = vpop.f32.mrb[0].mxu0
      %v4638 = vadd.f32 %v4529, %v4637
      %v4639 = vpop.f32.mrb[0].mxu0
      %4640 = vmatprep.mubr.bf16.mxu0 0
      %4641 = vmatmul.mubr.bf16.gmra.mrb[0].mxu0 %v612
      %v4642 = vpop.f32.mrb[0].mxu0
      %v4643 = vadd.f32 %v4534, %v4642
      %v4644 = vpop.f32.mrb[0].mxu0
      %v4645 = vpop.f32.mrb[0].mxu0
      %v4646 = vadd.f32 %v4537, %v4645
      %v4647 = vpop.f32.mrb[0].mxu0
      %4648 = vmatprep.mubr.bf16.mxu0 0
      %4649 = vmatmul.mubr.bf16.gmra.mrb[0].mxu0 %v615
      %v4650 = vpop.f32.mrb[0].mxu0
      %v4651 = vadd.f32 %v4542, %v4650
      %v4652 = vpop.f32.mrb[0].mxu0
      %v4653 = vpop.f32.mrb[0].mxu0
      %v4654 = vadd.f32 %v4545, %v4653
      %v4655 = vpop.f32.mrb[0].mxu0
      %4656 = vmatprep.mubr.bf16.mxu0 0
      %4657 = vmatmul.mubr.bf16.gmra.mrb[0].mxu0 %v618
      %v4658 = vpop.f32.mrb[0].mxu0
      %v4659 = vadd.f32 %v4550, %v4658
      %v4660 = vpop.f32.mrb[0].mxu0
      %v4661 = vpop.f32.mrb[0].mxu0
      %v4662 = vadd.f32 %v4553, %v4661
      %v4663 = vpop.f32.mrb[0].mxu0
      %4664 = vdwg.mxu0
      %v4665 = vld [vmem:[%s14] sm:$0x1]
      %v4667 = vlaneseq
      %v4668 = vshrl.u32 %v4667, 7
      %v4669 = vsub.s32 0, %v4668
      %v4670 = vrot.slane %v4665, %v4669
      %v4672 = vadd.f32 %v4603, %v4670
      %v4673 = vadd.f32 %v4606, %v4670
      %v4674 = vadd.f32 %v4611, %v4670
      %v4675 = vadd.f32 %v4614, %v4670
      %v4676 = vadd.f32 %v4619, %v4670
      %v4677 = vadd.f32 %v4622, %v4670
      %v4678 = vadd.f32 %v4627, %v4670
      %v4679 = vadd.f32 %v4630, %v4670
      %v4680 = vadd.f32 %v4635, %v4670
      %v4681 = vadd.f32 %v4638, %v4670
      %v4682 = vadd.f32 %v4643, %v4670
      %v4683 = vadd.f32 %v4646, %v4670
      %v4684 = vadd.f32 %v4651, %v4670
      %v4685 = vadd.f32 %v4654, %v4670
      %v4686 = vadd.f32 %v4659, %v4670
      %v4687 = vadd.f32 %v4662, %v4670
      %v4688 = vmax.f32 %v4672, 0.0
      %v4689 = vmax.f32 %v4673, 0.0
      %v4690 = vmax.f32 %v4674, 0.0
      %v4691 = vmax.f32 %v4675, 0.0
      %v4692 = vmax.f32 %v4676, 0.0
      %v4693 = vmax.f32 %v4677, 0.0
      %v4694 = vmax.f32 %v4678, 0.0
      %v4695 = vmax.f32 %v4679, 0.0
      %v4696 = vmax.f32 %v4680, 0.0
      %v4697 = vmax.f32 %v4681, 0.0
      %v4698 = vmax.f32 %v4682, 0.0
      %v4699 = vmax.f32 %v4683, 0.0
      %v4700 = vmax.f32 %v4684, 0.0
      %v4701 = vmax.f32 %v4685, 0.0
      %v4702 = vmax.f32 %v4686, 0.0
      %v4703 = vmax.f32 %v4687, 0.0
      %v4704 = vpack.c.bf16 %v4689, %v4688
      %v4705 = vpack.c.bf16 %v4691, %v4690
      %v4706 = vpack.c.bf16 %v4693, %v4692
      %v4707 = vpack.c.bf16 %v4695, %v4694
      %v4708 = vpack.c.bf16 %v4697, %v4696
      %v4709 = vpack.c.bf16 %v4699, %v4698
      %v4710 = vpack.c.bf16 %v4701, %v4700
      %v4711 = vpack.c.bf16 %v4703, %v4702
      %v4712 = vld [vmem:[%s9] sm:$0xf]
      %v4713 = vld [vmem:[%s9 + $0x4] sm:$0xf]
      %v4714 = vld [vmem:[%s9 + $0x8] sm:$0xf]
      %v4715 = vld [vmem:[%s9 + $0xc] sm:$0xf]
      %v4716 = vld [vmem:[%s9 + $0x10] sm:$0xf]
      %v4717 = vld [vmem:[%s9 + $0x14] sm:$0xf]
      %v4718 = vld [vmem:[%s9 + $0x18] sm:$0xf]
      %v4719 = vld [vmem:[%s9 + $0x1c] sm:$0xf]
      %v4720 = vld [vmem:[%s15] sm:$0x1]
      %v4722 = vlaneseq
      %v4723 = vshrl.u32 %v4722, 7
      %v4724 = vsub.s32 0, %v4723
      %v4725 = vrot.slane %v4720, %v4724
      %v4735 = vunpack.c.l.b16 %v4712
      %v4736 = vunpack.c.l.b16 %v4713
      %v4737 = vunpack.c.l.b16 %v4714
      %v4738 = vunpack.c.l.b16 %v4715
      %v4739 = vunpack.c.l.b16 %v4716
      %v4740 = vunpack.c.l.b16 %v4717
      %v4741 = vunpack.c.l.b16 %v4718
      %v4742 = vunpack.c.l.b16 %v4719
      %v4743 = vpack.c.b16 %v4736, %v4735
      %v4744 = vpack.c.b16 %v4738, %v4737
      %v4745 = vpack.c.b16 %v4740, %v4739
      %v4746 = vpack.c.b16 %v4742, %v4741
      %vm4751 = vcmask 523264
      %v4753 = vsel %vm4751, %v4704, 0
      %v4756 = vsel %vm4751, %v4705, 0
      %v4759 = vsel %vm4751, %v4706, 0
      %v4762 = vsel %vm4751, %v4707, 0
      %v4765 = vsel %vm4751, %v4708, 0
      %v4768 = vsel %vm4751, %v4709, 0
      %v4771 = vsel %vm4751, %v4710, 0
      %v4774 = vsel %vm4751, %v4711, 0
      %4776 = vmatprep.subr.bf16.mxu0 0
      %4777 = vmatpush1.bf16.msra.mxu0 %v4743
      %4778 = vmatprep.subr.bf16.mxu0 0
      %4779 = vmatpush1.bf16.msra.mxu0 %v4744
      %4780 = vmatprep.subr.bf16.mxu0 0
      %4781 = vmatpush1.bf16.msra.mxu0 %v4745
      %4782 = vmatprep.subr.bf16.mxu0 0
      %4783 = vmatpush1.bf16.msra.mxu0 %v4746
      %4784 = vmatprep.subr.bf16.mxu0 0
      %4785 = vmatpush1.bf16.msra.mxu0 0
      %4786 = vmatprep.subr.bf16.mxu0 0
      %4787 = vmatpush1.bf16.msra.mxu0 0
      %4788 = vmatprep.subr.bf16.mxu0 0
      %4789 = vmatpush1.bf16.msra.mxu0 0
      %4790 = vmatprep.subr.bf16.mxu0 0
      %4791 = vmatpush1.bf16.msra.mxu0 0
      %4792 = vmatprep.subr.bf16.mxu0 0
      %4793 = vmatpush1.bf16.msra.mxu0 0
      %4794 = vmatprep.subr.bf16.mxu0 0
      %4795 = vmatpush1.bf16.msra.mxu0 0
      %4796 = vmatprep.subr.bf16.mxu0 0
      %4797 = vmatpush1.bf16.msra.mxu0 0
      %4798 = vmatprep.subr.bf16.mxu0 0
      %4799 = vmatpush1.bf16.msra.mxu0 0
      %4800 = vmatprep.subr.bf16.mxu0 0
      %4801 = vmatpush1.bf16.msra.mxu0 0
      %4802 = vmatprep.subr.bf16.mxu0 0
      %4803 = vmatpush1.bf16.msra.mxu0 0
      %4804 = vmatprep.subr.bf16.mxu0 0
      %4805 = vmatpush1.bf16.msra.mxu0 0
      %4806 = vmatprep.subr.bf16.mxu0 0
      %4807 = vmatpush1.bf16.msra.mxu0 0
      %4808 = vmatprep.mubr.bf16.mxu0 0
      %4809 = vmatmul.mubr.bf16.gmra.mrb[0].mxu0 %v4753
      %v4810 = vpop.f32.mrb[0].mxu0
      %v4811 = vadd.f32 %v4725, %v4810
      %v4812 = vpop.f32.mrb[0].mxu0
      %v4813 = vpop.f32.mrb[0].mxu0
      %v4814 = vadd.f32 %v4725, %v4813
      %v4815 = vpop.f32.mrb[0].mxu0
      %4816 = vmatprep.mubr.bf16.mxu0 0
      %4817 = vmatmul.mubr.bf16.gmra.mrb[0].mxu0 %v4756
      %v4818 = vpop.f32.mrb[0].mxu0
      %v4819 = vadd.f32 %v4725, %v4818
      %v4820 = vpop.f32.mrb[0].mxu0
      %v4821 = vpop.f32.mrb[0].mxu0
      %v4822 = vadd.f32 %v4725, %v4821
      %v4823 = vpop.f32.mrb[0].mxu0
      %4824 = vmatprep.mubr.bf16.mxu0 0
      %4825 = vmatmul.mubr.bf16.gmra.mrb[0].mxu0 %v4759
      %v4826 = vpop.f32.mrb[0].mxu0
      %v4827 = vadd.f32 %v4725, %v4826
      %v4828 = vpop.f32.mrb[0].mxu0
      %v4829 = vpop.f32.mrb[0].mxu0
      %v4830 = vadd.f32 %v4725, %v4829
      %v4831 = vpop.f32.mrb[0].mxu0
      %4832 = vmatprep.mubr.bf16.mxu0 0
      %4833 = vmatmul.mubr.bf16.gmra.mrb[0].mxu0 %v4762
      %v4834 = vpop.f32.mrb[0].mxu0
      %v4835 = vadd.f32 %v4725, %v4834
      %v4836 = vpop.f32.mrb[0].mxu0
      %v4837 = vpop.f32.mrb[0].mxu0
      %v4838 = vadd.f32 %v4725, %v4837
      %v4839 = vpop.f32.mrb[0].mxu0
      %4840 = vmatprep.mubr.bf16.mxu0 0
      %4841 = vmatmul.mubr.bf16.gmra.mrb[0].mxu0 %v4765
      %v4842 = vpop.f32.mrb[0].mxu0
      %v4843 = vadd.f32 %v4725, %v4842
      %v4844 = vpop.f32.mrb[0].mxu0
      %v4845 = vpop.f32.mrb[0].mxu0
      %v4846 = vadd.f32 %v4725, %v4845
      %v4847 = vpop.f32.mrb[0].mxu0
      %4848 = vmatprep.mubr.bf16.mxu0 0
      %4849 = vmatmul.mubr.bf16.gmra.mrb[0].mxu0 %v4768
      %v4850 = vpop.f32.mrb[0].mxu0
      %v4851 = vadd.f32 %v4725, %v4850
      %v4852 = vpop.f32.mrb[0].mxu0
      %v4853 = vpop.f32.mrb[0].mxu0
      %v4854 = vadd.f32 %v4725, %v4853
      %v4855 = vpop.f32.mrb[0].mxu0
      %4856 = vmatprep.mubr.bf16.mxu0 0
      %4857 = vmatmul.mubr.bf16.gmra.mrb[0].mxu0 %v4771
      %v4858 = vpop.f32.mrb[0].mxu0
      %v4859 = vadd.f32 %v4725, %v4858
      %v4860 = vpop.f32.mrb[0].mxu0
      %v4861 = vpop.f32.mrb[0].mxu0
      %v4862 = vadd.f32 %v4725, %v4861
      %v4863 = vpop.f32.mrb[0].mxu0
      %4864 = vmatprep.mubr.bf16.mxu0 0
      %4865 = vmatmul.mubr.bf16.gmra.mrb[0].mxu0 %v4774
      %v4866 = vpop.f32.mrb[0].mxu0
      %v4867 = vadd.f32 %v4725, %v4866
      %v4868 = vpop.f32.mrb[0].mxu0
      %v4869 = vpop.f32.mrb[0].mxu0
      %v4870 = vadd.f32 %v4725, %v4869
      %v4871 = vpop.f32.mrb[0].mxu0
      %4872 = vdwg.mxu0
      %v4873 = vadd.f32 %v518, %v4811
      %v4874 = vadd.f32 %v519, %v4814
      %v4875 = vadd.f32 %v520, %v4819
      %v4876 = vadd.f32 %v521, %v4822
      %v4877 = vadd.f32 %v522, %v4827
      %v4878 = vadd.f32 %v523, %v4830
      %v4879 = vadd.f32 %v524, %v4835
      %v4880 = vadd.f32 %v525, %v4838
      %v4881 = vadd.f32 %v526, %v4843
      %v4882 = vadd.f32 %v527, %v4846
      %v4883 = vadd.f32 %v528, %v4851
      %v4884 = vadd.f32 %v529, %v4854
      %v4885 = vadd.f32 %v530, %v4859
      %v4886 = vadd.f32 %v531, %v4862
      %v4887 = vadd.f32 %v532, %v4867
      %v4888 = vadd.f32 %v533, %v4870
      %4889 = vst.msk [vmem:[%s516] sm:$0xff] %vm595, %v4873
      %4890 = vst.msk [vmem:[%s516 + $0x8] sm:$0xff] %vm595, %v4874
      %4891 = vst.msk [vmem:[%s516 + $0x10] sm:$0xff] %vm595, %v4875
      %4892 = vst.msk [vmem:[%s516 + $0x18] sm:$0xff] %vm595, %v4876
      %4893 = vst.msk [vmem:[%s516 + $0x20] sm:$0xff] %vm595, %v4877
      %4894 = vst.msk [vmem:[%s516 + $0x28] sm:$0xff] %vm595, %v4878
      %4895 = vst.msk [vmem:[%s516 + $0x30] sm:$0xff] %vm595, %v4879
      %4896 = vst.msk [vmem:[%s516 + $0x38] sm:$0xff] %vm595, %v4880
      %4897 = vst.msk [vmem:[%s516 + $0x40] sm:$0xff] %vm595, %v4881
      %4898 = vst.msk [vmem:[%s516 + $0x48] sm:$0xff] %vm595, %v4882
      %4899 = vst.msk [vmem:[%s516 + $0x50] sm:$0xff] %vm595, %v4883
      %4900 = vst.msk [vmem:[%s516 + $0x58] sm:$0xff] %vm595, %v4884
      %4901 = vst.msk [vmem:[%s516 + $0x60] sm:$0xff] %vm595, %v4885
      %4902 = vst.msk [vmem:[%s516 + $0x68] sm:$0xff] %vm595, %v4886
      %4903 = vst.msk [vmem:[%s516 + $0x70] sm:$0xff] %vm595, %v4887
      %4904 = vst.msk [vmem:[%s516 + $0x78] sm:$0xff] %vm595, %v4888
      %p4905 = scmp.lt.s32.totalorder %s28, 1
      %s4906 = scalar_select %p4905, %s28, 1
      %s4907 = smul.addr %s4906, 16
      %s4908 = smul.addr %s4907, 8
      %s4909 = scalar_lea.vmem %s16, %s4908
      // Predicated region
      $region81: #{tpu_custom_call.1} parent=79 // pred_check
        %p4910 = pneg %p371
      $region82: #{tpu_custom_call.1} parent=79 // pred_check_branch
        %4912 = sbr.rel (%p4910) target = $region84
      $region83: #{tpu_custom_call.1} parent=79 // pred_region
        _
      $region84: #{tpu_custom_call.1} parent=79 // pred_fallthru
        _
    $region80: #{tpu_custom_call.1} parent=5 // pred_fallthru
      _
    %p4913 = scmp.le.s32.totalorder 2, %s23
    // Predicated region
    $region85: #{tpu_custom_call.1} parent=5 // pred_check
      %p4914 = pneg %p4913
    $region86: #{tpu_custom_call.1} parent=5 // pred_check_branch
      %4916 = sbr.rel (%p4914) target = $region88
    $region87: #{tpu_custom_call.1} parent=5 // pred_region
      %s4917 = ssub.s32 %s23, 2
      // Predicated region
      $region89: #{tpu_custom_call.1} parent=87 // pred_check
        %p4918 = pneg %p377
      $region90: #{tpu_custom_call.1} parent=87 // pred_check_branch
        %4920 = sbr.rel (%p4918) target = $region92
      $region91: #{tpu_custom_call.1} parent=87 // pred_region
        %p4921 = scmp.lt.s32.totalorder %s29, 1
        %s4922 = scalar_select %p4921, %s29, 1
        %s4923 = smul.addr %s4922, 16
        %s4924 = smul.addr %s4923, 8
        %s4925 = scalar_lea.vmem %s16, %s4924
      $region92: #{tpu_custom_call.1} parent=87 // pred_fallthru
        _
    $region88: #{tpu_custom_call.1} parent=5 // pred_fallthru
      _
  $region6: #{tpu_custom_call.1} parent=0 // loop_footer
    %s27 = sadd.s32 1, %s23
  $region7: #{tpu_custom_call.1} parent=0 // loop_footer_branch
    %22 = sbr.rel target = $region3
  $region8: #{tpu_custom_call.1} parent=0 // loop_exit
    _

</llo_original>
